<compile_context>
chip_gen: v7x
topology: tpu7x:2x2x1
jax: 0.10.0
libtpu: 0.0.40
codegen_flags: <defaults>
</compile_context>

<pallas_src>
import jax
import jax.numpy as jnp
from jax import lax
from jax.experimental import pallas as pl
from jax.experimental.pallas import tpu as pltpu

GNN_LIST = ["gat", "gcn", "gin", "sage", "linear"]
LEAKY_SLOPE = 0.2
NEG_INF = -1e30


def _round_up(v, m):
    return (v + m - 1) // m * m


def _cellws_kernel(x_ref,      # VMEM (N, D)           input node features (zero padded), f32
                   wcat_ref,   # VMEM (S, D, 6D) bf16  [W_gat|W_gcn|W_gin|W_sage_n|W_sage_r|W_lin]
                   vec_ref,    # VMEM (S, 2, D)        row0: mixture-combined bias, row1: w_gat
                   att_ref,    # VMEM (S, 2, D)        [att_src, att_dst]
                   esrc_ref,   # VMEM (S, 1, E) int32  edge sources (row layout)
                   edst_ref,   # VMEM (S, 1, E) int32  edge targets (row layout)
                   elog_ref,   # VMEM (S, 1, E)        raw edge logits
                   out_ref):   # VMEM (N, D)
    n, d = x_ref.shape
    steps = wcat_ref.shape[0]
    e = edst_ref.shape[-1]

    # ---- loop-invariant index vectors / masks (built once, hoisted out of the step loop) ----
    node_ids = lax.broadcasted_iota(jnp.int32, (n, e), 0)          # node id per sublane, vs edges
    diag = (lax.broadcasted_iota(jnp.int32, (n, n), 0)
            == lax.broadcasted_iota(jnp.int32, (n, n), 1))
    ones_k = jnp.full((n, 8), 0.125, jnp.float32)                  # for the src-score outer product

    def step(s, x):
        # ReLU between steps (first step consumes raw input features).
        # TODO(synk): F.dropout(p=0.8) omitted (inference); unused BatchNorm1d modules omitted.
        x = jnp.where(s > 0, jnp.maximum(x, 0.0), x)

        # ---- Get_edges(): w_e = sigmoid(logit_e); dense A[dst, src] built in-kernel ----
        ew = pl.reciprocal(1.0 + jnp.exp(-elog_ref[s]), approx=True)     # (1, E) sigmoid via EUP
        m_dst = jnp.where(node_ids == edst_ref[s], ew, 0.0)              # (N, E) weighted dst one-hot
        m_src = (node_ids == esrc_ref[s]).astype(jnp.float32)            # (N, E) src one-hot
        a_raw = lax.dot_general(m_dst, m_src, (((1,), (1,)), ((), ())),
                                preferred_element_type=jnp.float32)      # (N, N) = m_dst @ m_src^T

        # ---- degree-derived normalizations (XLU reduce + EUP rsqrt/rcp) ----
        deg = jnp.sum(a_raw, axis=-1, keepdims=True)                     # (N, 1)
        dinv = lax.rsqrt(deg + 1.0)                                      # GCN D^-1/2 (self loops)
        rinv = jnp.where(deg > 0.0,                                      # SAGE mean; isolated -> 0
                         pl.reciprocal(jnp.maximum(deg, 1e-6), approx=True), 0.0)

        # ---- one fused feature transform for all six weight matrices (bf16 MXU, f32 accum) ----
        xw = jnp.dot(x.astype(jnp.bfloat16), wcat_ref[s],
                     preferred_element_type=jnp.float32)                 # (N, 6D)
        h = xw[:, 0:d]                                                   # GAT (not mixture-scaled)

        # ---- one stacked neighbor aggregation for GCN / GIN / SAGE ----
        y_gcn = dinv * xw[:, d:2 * d]
        agg_in = jnp.concatenate([y_gcn, xw[:, 2 * d:4 * d]], axis=-1)   # (N, 3D) lane-aligned
        agg = jnp.dot(a_raw, agg_in, preferred_element_type=jnp.float32)

        gcn_out = dinv * (agg[:, 0:d] + y_gcn)                           # D^-1/2 (A+I) D^-1/2 X W
        gin_out = xw[:, 2 * d:3 * d] + agg[:, d:2 * d]                   # (X + A X) W
        sage_out = rinv * agg[:, 2 * d:3 * d] + xw[:, 4 * d:5 * d]       # mean-aggr + root
        lin_out = xw[:, 5 * d:6 * d]

        # ---- GAT (single head, concat=False) with edge-weighted softmax ----
        att = att_ref[s]                                                 # (2, D)
        src_col = jnp.sum(h * att[0:1, :], axis=-1, keepdims=True)       # (N, 1) per-source score
        dst_col = jnp.sum(h * att[1:2, :], axis=-1, keepdims=True)       # (N, 1) per-target score
        # Broadcast source scores across columns with a tiny K=8 outer-product matmul
        # (avoids transposing the full (N,D) h through the XLU).
        src_row = lax.dot_general(ones_k, jnp.broadcast_to(src_col, (n, 8)),
                                  (((1,), (1,)), ((), ())),
                                  preferred_element_type=jnp.float32)    # (N, N): [i, j] = src_col[j]
        logit = dst_col + src_row
        logit = jnp.where(logit > 0, logit, LEAKY_SLOPE * logit)         # leaky relu
        nbr = jnp.logical_or(diag, a_raw > 0.0)                          # neighbors + self loop
        logit = jnp.where(nbr, logit, NEG_INF)
        logit = logit - jnp.max(logit, axis=-1, keepdims=True)
        # TODO(synk): exact gnn_map GAT edge-weight convention not in the provided source;
        # edge weights enter the softmax numerator (self loop weight 1) so rows stay normalized.
        p = jnp.where(diag, 1.0, a_raw) * jnp.exp(logit)
        p = p * pl.reciprocal(jnp.sum(p, axis=-1, keepdims=True), approx=True)
        vec = vec_ref[s]                                                 # (2, D)
        gat_out = vec[1:2, :] * jnp.dot(p, h, preferred_element_type=jnp.float32)

        return gat_out + gcn_out + gin_out + sage_out + lin_out + vec[0:1, :]

    out_ref[...] = lax.fori_loop(0, steps, step, x_ref[...], unroll=True)


def init_cellws_params(key, steps, his_dim, hidden_dim, out_dim):
    """Deterministic synthetic parameters for every MixedOp branch of every step."""
    params = []
    for i in range(steps):
        din = his_dim if i == 0 else hidden_dim
        dout = out_dim if i == steps - 1 else hidden_dim
        key, k1, k2, k3 = jax.random.split(key, 4)
        scale = jnp.sqrt(2.0 / (din + dout)).astype(jnp.float32)
        params.append({
            # [gat, gcn, gin, sage_neighbor, sage_root, linear]
            "wmat": jax.random.normal(k1, (6, din, dout), jnp.float32) * scale,
            # [gat, gcn, gin, sage, linear]
            "bias": jax.random.normal(k2, (5, dout), jnp.float32) * 0.01,
            # [att_src, att_dst]
            "att": jax.random.normal(k3, (2, dout), jnp.float32) * 0.1,
        })
    return params


def _pack_cellws(params, weights, adjs):
    """Pad/stack per-step params & edges (lane-dense, 128-padded); fold mixture weights."""
    dmax = _round_up(max(max(p["wmat"].shape[1], p["wmat"].shape[2]) for p in params), 128)
    emax = _round_up(max(int(ei.shape[1]) for ei, _ in adjs), 128)

    wcat_l, vec_l, att_l, esrc_l, edst_l, elog_l = [], [], [], [], [], []
    for p, (edge_index, edge_logits), w in zip(params, adjs, weights):
        din, dout = p["wmat"].shape[1], p["wmat"].shape[2]
        # per-matrix mixture scale: GAT is nonlinear in its W -> scaled in-kernel
        scale = jnp.concatenate([jnp.ones((1,), jnp.float32),
                                 w[1:4], w[3:4], w[4:5]])             # (6,)
        wm = p["wmat"] * scale[:, None, None]
        wm = jnp.pad(wm, ((0, 0), (0, dmax - din), (0, dmax - dout)))
        wcat_l.append(jnp.concatenate(list(wm), axis=-1).astype(jnp.bfloat16))  # (dmax, 6*dmax)

        b = jnp.pad(p["bias"], ((0, 0), (0, dmax - dout)))            # (5, dmax)
        bias_comb = jnp.sum(w[:, None] * b, axis=0, keepdims=True)    # (1, dmax)
        wgat_row = jnp.ones((1, dmax), jnp.float32) * w[0]
        vec_l.append(jnp.concatenate([bias_comb, wgat_row], axis=0))  # (2, dmax)

        att_l.append(jnp.pad(p["att"], ((0, 0), (0, dmax - dout))))   # (2, dmax)

        ne = edge_index.shape[1]
        src = jnp.pad(edge_index[0].astype(jnp.int32), (0, emax - ne))
        dst = jnp.pad(edge_index[1].astype(jnp.int32), (0, emax - ne))
        # pad logits at -80: sigmoid(-80) ~ 2e-35, so padded edges contribute ~0
        logit = jnp.pad(edge_logits.astype(jnp.float32), (0, emax - ne),
                        constant_values=-80.0)
        esrc_l.append(src[None, :])                  # (1, emax)
        edst_l.append(dst[None, :])                  # (1, emax)
        elog_l.append(logit[None, :])                # (1, emax)

    return (jnp.stack(wcat_l), jnp.stack(vec_l), jnp.stack(att_l),
            jnp.stack(esrc_l), jnp.stack(edst_l), jnp.stack(elog_l), dmax, emax)


def cellws_forward(x, adjs, weights, params):
    """Mirrors CellWS.forward: Get_edges() then `steps` MixedOps, fused in one kernel launch."""
    n = x.shape[0]
    steps = len(params)
    wcat, vec, att, esrc, edst, elog, dmax, emax = _pack_cellws(params, weights, adjs)
    xp = jnp.pad(x.astype(jnp.float32), ((0, 0), (0, dmax - x.shape[1])))

    out = pl.pallas_call(
        _cellws_kernel,
        out_shape=jax.ShapeDtypeStruct((n, dmax), jnp.float32),
        grid=(1,),
        in_specs=[
            pl.BlockSpec((n, dmax), lambda s: (0, 0)),                    # x
            pl.BlockSpec((steps, dmax, 6 * dmax), lambda s: (0, 0, 0)),   # wcat (bf16)
            pl.BlockSpec((steps, 2, dmax), lambda s: (0, 0, 0)),          # bias + w_gat
            pl.BlockSpec((steps, 2, dmax), lambda s: (0, 0, 0)),          # att
            pl.BlockSpec((steps, 1, emax), lambda s: (0, 0, 0)),          # edge src
            pl.BlockSpec((steps, 1, emax), lambda s: (0, 0, 0)),          # edge dst
            pl.BlockSpec((steps, 1, emax), lambda s: (0, 0, 0)),          # edge logits
        ],
        out_specs=pl.BlockSpec((n, dmax), lambda s: (0, 0)),
        compiler_params=pltpu.CompilerParams(
            dimension_semantics=("arbitrary",),
            vmem_limit_bytes=32 * 1024 * 1024),
    )(xp, wcat, vec, att, esrc, edst, elog)
    return out[:, :params[-1]["wmat"].shape[2]]


if __name__ == "__main__":
    key = jax.random.PRNGKey(0)
    steps, his_dim, hidden_dim, out_dim = 3, 16, 32, 16
    n_nodes, n_edges = 32, 96

    key, kx, kw, kp = jax.random.split(key, 4)
    x = jax.random.normal(kx, (n_nodes, his_dim), jnp.float32)

    adjs = []
    for _ in range(steps):
        key, ks, kd, kl = jax.random.split(key, 4)
        src = jax.random.randint(ks, (n_edges,), 0, n_nodes, jnp.int32)
        dst = jax.random.randint(kd, (n_edges,), 0, n_nodes, jnp.int32)
        edge_index = jnp.stack([src, dst], axis=0)                      # adj[0]
        edge_logits = jax.random.normal(kl, (n_edges,), jnp.float32)    # adj[1]
        adjs.append((edge_index, edge_logits))

    # architecture weights: one row of 5 (gat, gcn, gin, sage, linear) per step
    weights = jax.nn.softmax(
        jax.random.normal(kw, (steps, len(GNN_LIST)), jnp.float32), axis=-1)

    params = init_cellws_params(kp, steps, his_dim, hidden_dim, out_dim)

    out = cellws_forward(x, adjs, weights, params)
    out = jax.block_until_ready(out)
    assert out.shape == (n_nodes, out_dim)
    assert bool(jnp.all(jnp.isfinite(out)))
    print("KERNEL_OK")
</pallas_src>

<mosaic_0001>
module attributes {stable_mosaic.version = 11 : i64} {
  func.func @_cellws_kernel(%arg0: i32, %arg1: memref<32x128xf32, #tpu.memory_space<vmem>>, %arg2: memref<3x128x768xbf16, #tpu.memory_space<vmem>>, %arg3: memref<3x2x128xf32, #tpu.memory_space<vmem>>, %arg4: memref<3x2x128xf32, #tpu.memory_space<vmem>>, %arg5: memref<3x1x128xi32, #tpu.memory_space<vmem>>, %arg6: memref<3x1x128xi32, #tpu.memory_space<vmem>>, %arg7: memref<3x1x128xf32, #tpu.memory_space<vmem>>, %arg8: memref<32x128xf32, #tpu.memory_space<vmem>>) attributes {dimension_semantics = [#tpu.dimension_semantics<arbitrary>], iteration_bounds = array<i64: 1>, scalar_prefetch = 0 : i64, scratch_operands = 0 : i64, tpu.core_type = #tpu.core_type<tc>, window_params = [{pipeline_mode = #tpu.pipeline_mode<synchronous>, transform_indices = @transform_0, window_bounds = array<i64: 32, 128>}, {pipeline_mode = #tpu.pipeline_mode<synchronous>, transform_indices = @transform_1, window_bounds = array<i64: 3, 128, 768>}, {pipeline_mode = #tpu.pipeline_mode<synchronous>, transform_indices = @transform_2, window_bounds = array<i64: 3, 2, 128>}, {pipeline_mode = #tpu.pipeline_mode<synchronous>, transform_indices = @transform_3, window_bounds = array<i64: 3, 2, 128>}, {pipeline_mode = #tpu.pipeline_mode<synchronous>, transform_indices = @transform_4, window_bounds = array<i64: 3, 1, 128>}, {pipeline_mode = #tpu.pipeline_mode<synchronous>, transform_indices = @transform_5, window_bounds = array<i64: 3, 1, 128>}, {pipeline_mode = #tpu.pipeline_mode<synchronous>, transform_indices = @transform_6, window_bounds = array<i64: 3, 1, 128>}, {pipeline_mode = #tpu.pipeline_mode<synchronous>, transform_indices = @transform_7, window_bounds = array<i64: 32, 128>}]} {
    %0 = tpu.iota {dimensions = array<i32: 0>} : vector<32x128xi32>
    %1 = tpu.iota {dimensions = array<i32: 0>} : vector<32x32xi32>
    %2 = tpu.iota {dimensions = array<i32: 1>} : vector<32x32xi32>
    %3 = arith.cmpi eq, %1, %2 : vector<32x32xi32>
    %cst = arith.constant 1.250000e-01 : f32
    %4 = vector.broadcast %cst : f32 to vector<32x8xf32>
    %c0 = arith.constant 0 : index
    %c0_0 = arith.constant 0 : index
    %5 = vector.load %arg1[%c0, %c0_0] : memref<32x128xf32, #tpu.memory_space<vmem>>, vector<32x128xf32>
    %c0_i32 = arith.constant 0 : i32
    %c0_i32_1 = arith.constant 0 : i32
    %6 = arith.cmpi sgt, %c0_i32, %c0_i32_1 : i32
    %cst_2 = arith.constant 0.000000e+00 : f32
    %7 = vector.broadcast %cst_2 : f32 to vector<32x128xf32>
    %8 = arith.maximumf %5, %7 : vector<32x128xf32>
    %9 = arith.select %6, %8, %5 : vector<32x128xf32>
    %10 = arith.index_cast %c0_i32 : i32 to index
    %c0_3 = arith.constant 0 : index
    %c0_4 = arith.constant 0 : index
    %11 = vector.load %arg7[%10, %c0_3, %c0_4] : memref<3x1x128xf32, #tpu.memory_space<vmem>>, vector<1x1x128xf32>
    %12 = vector.shape_cast %11 : vector<1x1x128xf32> to vector<1x128xf32>
    %cst_5 = arith.constant 0.000000e+00 : f32
    %13 = vector.broadcast %cst_5 : f32 to vector<1x128xf32>
    %14 = arith.subf %13, %12 : vector<1x128xf32>
    %15 = math.exp %14 : vector<1x128xf32>
    %cst_6 = arith.constant 1.000000e+00 : f32
    %16 = vector.broadcast %cst_6 : f32 to vector<1x128xf32>
    %17 = arith.addf %16, %15 : vector<1x128xf32>
    %18 = tpu.reciprocal %17 {approx = true} : vector<1x128xf32> -> vector<1x128xf32>
    %19 = arith.index_cast %c0_i32 : i32 to index
    %c0_7 = arith.constant 0 : index
    %c0_8 = arith.constant 0 : index
    %20 = vector.load %arg6[%19, %c0_7, %c0_8] : memref<3x1x128xi32, #tpu.memory_space<vmem>>, vector<1x1x128xi32>
    %21 = vector.shape_cast %20 : vector<1x1x128xi32> to vector<1x128xi32>
    %22 = vector.broadcast %21 : vector<1x128xi32> to vector<32x128xi32>
    %23 = arith.cmpi eq, %0, %22 : vector<32x128xi32>
    %cst_9 = arith.constant 0.000000e+00 : f32
    %24 = vector.shape_cast %18 : vector<1x128xf32> to vector<1x128xf32>
    %25 = vector.broadcast %24 : vector<1x128xf32> to vector<32x128xf32>
    %26 = vector.broadcast %cst_9 : f32 to vector<32x128xf32>
    %27 = arith.select %23, %25, %26 : vector<32x128xi1>, vector<32x128xf32>
    %28 = arith.index_cast %c0_i32 : i32 to index
    %c0_10 = arith.constant 0 : index
    %c0_11 = arith.constant 0 : index
    %29 = vector.load %arg5[%28, %c0_10, %c0_11] : memref<3x1x128xi32, #tpu.memory_space<vmem>>, vector<1x1x128xi32>
    %30 = vector.shape_cast %29 : vector<1x1x128xi32> to vector<1x128xi32>
    %31 = vector.broadcast %30 : vector<1x128xi32> to vector<32x128xi32>
    %32 = arith.cmpi eq, %0, %31 : vector<32x128xi32>
    %33 = arith.extui %32 : vector<32x128xi1> to vector<32x128xi32>
    %34 = arith.sitofp %33 : vector<32x128xi32> to vector<32x128xf32>
    %cst_12 = arith.constant dense<0.000000e+00> : vector<32x32xf32>
    %35 = tpu.matmul %27, %34, %cst_12 {dimension_numbers = #tpu.dot_dimension_numbers<[1], [1], [0], [0], [0, 0, 1, 0], [], []>} : vector<32x128xf32>, vector<32x128xf32>, vector<32x32xf32> -> vector<32x32xf32>
    %cst_13 = arith.constant dense<0.000000e+00> : vector<32xf32>
    %36 = vector.multi_reduction <add>, %35, %cst_13 [1] : vector<32x32xf32> to vector<32xf32>
    %37 = vector.shape_cast %36 : vector<32xf32> to vector<32x1xf32>
    %cst_14 = arith.constant 1.000000e+00 : f32
    %38 = vector.broadcast %cst_14 : f32 to vector<32x1xf32>
    %39 = arith.addf %37, %38 : vector<32x1xf32>
    %40 = math.rsqrt %39 : vector<32x1xf32>
    %cst_15 = arith.constant 0.000000e+00 : f32
    %41 = vector.broadcast %cst_15 : f32 to vector<32x1xf32>
    %42 = arith.cmpf ogt, %37, %41 : vector<32x1xf32>
    %cst_16 = arith.constant 9.99999997E-7 : f32
    %43 = vector.broadcast %cst_16 : f32 to vector<32x1xf32>
    %44 = arith.maximumf %37, %43 : vector<32x1xf32>
    %45 = tpu.reciprocal %44 {approx = true} : vector<32x1xf32> -> vector<32x1xf32>
    %cst_17 = arith.constant 0.000000e+00 : f32
    %46 = vector.broadcast %cst_17 : f32 to vector<32x1xf32>
    %47 = arith.select %42, %45, %46 : vector<32x1xi1>, vector<32x1xf32>
    %48 = arith.truncf %9 : vector<32x128xf32> to vector<32x128xbf16>
    %49 = arith.index_cast %c0_i32 : i32 to index
    %c0_18 = arith.constant 0 : index
    %c0_19 = arith.constant 0 : index
    %50 = vector.load %arg2[%49, %c0_18, %c0_19] : memref<3x128x768xbf16, #tpu.memory_space<vmem>>, vector<1x128x768xbf16>
    %51 = vector.shape_cast %50 : vector<1x128x768xbf16> to vector<128x768xbf16>
    %cst_20 = arith.constant dense<0.000000e+00> : vector<32x768xf32>
    %52 = tpu.matmul %48, %51, %cst_20 {dimension_numbers = #tpu.dot_dimension_numbers<[1], [0], [0], [1], [0, 0, 1, 1], [], []>} : vector<32x128xbf16>, vector<128x768xbf16>, vector<32x768xf32> -> vector<32x768xf32>
    %53 = vector.extract_strided_slice %52 {offsets = [0, 0], sizes = [32, 128], strides = [1, 1]} : vector<32x768xf32> to vector<32x128xf32>
    %54 = vector.extract_strided_slice %52 {offsets = [0, 128], sizes = [32, 128], strides = [1, 1]} : vector<32x768xf32> to vector<32x128xf32>
    %55 = vector.broadcast %40 : vector<32x1xf32> to vector<32x128xf32>
    %56 = arith.mulf %55, %54 : vector<32x128xf32>
    %57 = vector.extract_strided_slice %52 {offsets = [0, 256], sizes = [32, 256], strides = [1, 1]} : vector<32x768xf32> to vector<32x256xf32>
    %58 = tpu.concatenate %56, %57 in 1 : vector<32x128xf32>, vector<32x256xf32> -> vector<32x384xf32>
    %cst_21 = arith.constant dense<0.000000e+00> : vector<32x384xf32>
    %59 = tpu.matmul %35, %58, %cst_21 {dimension_numbers = #tpu.dot_dimension_numbers<[1], [0], [0], [1], [0, 0, 1, 1], [], []>} : vector<32x32xf32>, vector<32x384xf32>, vector<32x384xf32> -> vector<32x384xf32>
    %60 = vector.extract_strided_slice %59 {offsets = [0, 0], sizes = [32, 128], strides = [1, 1]} : vector<32x384xf32> to vector<32x128xf32>
    %61 = arith.addf %60, %56 : vector<32x128xf32>
    %62 = vector.broadcast %40 : vector<32x1xf32> to vector<32x128xf32>
    %63 = arith.mulf %62, %61 : vector<32x128xf32>
    %64 = vector.extract_strided_slice %52 {offsets = [0, 256], sizes = [32, 128], strides = [1, 1]} : vector<32x768xf32> to vector<32x128xf32>
    %65 = vector.extract_strided_slice %59 {offsets = [0, 128], sizes = [32, 128], strides = [1, 1]} : vector<32x384xf32> to vector<32x128xf32>
    %66 = arith.addf %64, %65 : vector<32x128xf32>
    %67 = vector.extract_strided_slice %59 {offsets = [0, 256], sizes = [32, 128], strides = [1, 1]} : vector<32x384xf32> to vector<32x128xf32>
    %68 = vector.broadcast %47 : vector<32x1xf32> to vector<32x128xf32>
    %69 = arith.mulf %68, %67 : vector<32x128xf32>
    %70 = vector.extract_strided_slice %52 {offsets = [0, 512], sizes = [32, 128], strides = [1, 1]} : vector<32x768xf32> to vector<32x128xf32>
    %71 = arith.addf %69, %70 : vector<32x128xf32>
    %72 = vector.extract_strided_slice %52 {offsets = [0, 640], sizes = [32, 128], strides = [1, 1]} : vector<32x768xf32> to vector<32x128xf32>
    %73 = arith.index_cast %c0_i32 : i32 to index
    %c0_22 = arith.constant 0 : index
    %c0_23 = arith.constant 0 : index
    %74 = vector.load %arg4[%73, %c0_22, %c0_23] : memref<3x2x128xf32, #tpu.memory_space<vmem>>, vector<1x2x128xf32>
    %75 = vector.shape_cast %74 : vector<1x2x128xf32> to vector<2x128xf32>
    %76 = vector.extract_strided_slice %75 {offsets = [0, 0], sizes = [1, 128], strides = [1, 1]} : vector<2x128xf32> to vector<1x128xf32>
    %77 = vector.broadcast %76 : vector<1x128xf32> to vector<32x128xf32>
    %78 = arith.mulf %53, %77 : vector<32x128xf32>
    %cst_24 = arith.constant dense<0.000000e+00> : vector<32xf32>
    %79 = vector.multi_reduction <add>, %78, %cst_24 [1] : vector<32x128xf32> to vector<32xf32>
    %80 = vector.shape_cast %79 : vector<32xf32> to vector<32x1xf32>
    %81 = vector.extract_strided_slice %75 {offsets = [1, 0], sizes = [1, 128], strides = [1, 1]} : vector<2x128xf32> to vector<1x128xf32>
    %82 = vector.broadcast %81 : vector<1x128xf32> to vector<32x128xf32>
    %83 = arith.mulf %53, %82 : vector<32x128xf32>
    %cst_25 = arith.constant dense<0.000000e+00> : vector<32xf32>
    %84 = vector.multi_reduction <add>, %83, %cst_25 [1] : vector<32x128xf32> to vector<32xf32>
    %85 = vector.shape_cast %84 : vector<32xf32> to vector<32x1xf32>
    %86 = vector.shape_cast %80 : vector<32x1xf32> to vector<32x1xf32>
    %87 = vector.broadcast %86 : vector<32x1xf32> to vector<32x8xf32>
    %cst_26 = arith.constant dense<0.000000e+00> : vector<32x32xf32>
    %88 = tpu.matmul %4, %87, %cst_26 {dimension_numbers = #tpu.dot_dimension_numbers<[1], [1], [0], [0], [0, 0, 1, 0], [], []>} : vector<32x8xf32>, vector<32x8xf32>, vector<32x32xf32> -> vector<32x32xf32>
    %89 = vector.broadcast %85 : vector<32x1xf32> to vector<32x32xf32>
    %90 = arith.addf %89, %88 : vector<32x32xf32>
    %cst_27 = arith.constant 0.000000e+00 : f32
    %91 = vector.broadcast %cst_27 : f32 to vector<32x32xf32>
    %92 = arith.cmpf ogt, %90, %91 : vector<32x32xf32>
    %cst_28 = arith.constant 2.000000e-01 : f32
    %93 = vector.broadcast %cst_28 : f32 to vector<32x32xf32>
    %94 = arith.mulf %93, %90 : vector<32x32xf32>
    %95 = arith.select %92, %90, %94 : vector<32x32xi1>, vector<32x32xf32>
    %cst_29 = arith.constant 0.000000e+00 : f32
    %96 = vector.broadcast %cst_29 : f32 to vector<32x32xf32>
    %97 = arith.cmpf ogt, %35, %96 : vector<32x32xf32>
    %98 = arith.ori %3, %97 : vector<32x32xi1>
    %cst_30 = arith.constant -1.000000e+30 : f32
    %99 = vector.broadcast %cst_30 : f32 to vector<32x32xf32>
    %100 = arith.select %98, %95, %99 : vector<32x32xi1>, vector<32x32xf32>
    %cst_31 = arith.constant dense<0xFF800000> : vector<32xf32>
    %101 = vector.multi_reduction <maximumf>, %100, %cst_31 [1] : vector<32x32xf32> to vector<32xf32>
    %102 = vector.shape_cast %101 : vector<32xf32> to vector<32x1xf32>
    %103 = vector.broadcast %102 : vector<32x1xf32> to vector<32x32xf32>
    %104 = arith.subf %100, %103 : vector<32x32xf32>
    %cst_32 = arith.constant 1.000000e+00 : f32
    %105 = vector.broadcast %cst_32 : f32 to vector<32x32xf32>
    %106 = arith.select %3, %105, %35 : vector<32x32xi1>, vector<32x32xf32>
    %107 = math.exp %104 : vector<32x32xf32>
    %108 = arith.mulf %106, %107 : vector<32x32xf32>
    %cst_33 = arith.constant dense<0.000000e+00> : vector<32xf32>
    %109 = vector.multi_reduction <add>, %108, %cst_33 [1] : vector<32x32xf32> to vector<32xf32>
    %110 = vector.shape_cast %109 : vector<32xf32> to vector<32x1xf32>
    %111 = tpu.reciprocal %110 {approx = true} : vector<32x1xf32> -> vector<32x1xf32>
    %112 = vector.broadcast %111 : vector<32x1xf32> to vector<32x32xf32>
    %113 = arith.mulf %108, %112 : vector<32x32xf32>
    %114 = arith.index_cast %c0_i32 : i32 to index
    %c0_34 = arith.constant 0 : index
    %c0_35 = arith.constant 0 : index
    %115 = vector.load %arg3[%114, %c0_34, %c0_35] : memref<3x2x128xf32, #tpu.memory_space<vmem>>, vector<1x2x128xf32>
    %116 = vector.shape_cast %115 : vector<1x2x128xf32> to vector<2x128xf32>
    %117 = vector.extract_strided_slice %116 {offsets = [1, 0], sizes = [1, 128], strides = [1, 1]} : vector<2x128xf32> to vector<1x128xf32>
    %cst_36 = arith.constant dense<0.000000e+00> : vector<32x128xf32>
    %118 = tpu.matmul %113, %53, %cst_36 {dimension_numbers = #tpu.dot_dimension_numbers<[1], [0], [0], [1], [0, 0, 1, 1], [], []>} : vector<32x32xf32>, vector<32x128xf32>, vector<32x128xf32> -> vector<32x128xf32>
    %119 = vector.broadcast %117 : vector<1x128xf32> to vector<32x128xf32>
    %120 = arith.mulf %119, %118 : vector<32x128xf32>
    %121 = arith.addf %120, %63 : vector<32x128xf32>
    %122 = arith.addf %121, %66 : vector<32x128xf32>
    %123 = arith.addf %122, %71 : vector<32x128xf32>
    %124 = arith.addf %123, %72 : vector<32x128xf32>
    %125 = vector.extract_strided_slice %116 {offsets = [0, 0], sizes = [1, 128], strides = [1, 1]} : vector<2x128xf32> to vector<1x128xf32>
    %126 = vector.broadcast %125 : vector<1x128xf32> to vector<32x128xf32>
    %127 = arith.addf %124, %126 : vector<32x128xf32>
    %c1_i32 = arith.constant 1 : i32
    %c0_i32_37 = arith.constant 0 : i32
    %128 = arith.cmpi sgt, %c1_i32, %c0_i32_37 : i32
    %cst_38 = arith.constant 0.000000e+00 : f32
    %129 = vector.broadcast %cst_38 : f32 to vector<32x128xf32>
    %130 = arith.maximumf %127, %129 : vector<32x128xf32>
    %131 = arith.select %128, %130, %127 : vector<32x128xf32>
    %132 = arith.index_cast %c1_i32 : i32 to index
    %c0_39 = arith.constant 0 : index
    %c0_40 = arith.constant 0 : index
    %133 = vector.load %arg7[%132, %c0_39, %c0_40] : memref<3x1x128xf32, #tpu.memory_space<vmem>>, vector<1x1x128xf32>
    %134 = vector.shape_cast %133 : vector<1x1x128xf32> to vector<1x128xf32>
    %cst_41 = arith.constant 0.000000e+00 : f32
    %135 = vector.broadcast %cst_41 : f32 to vector<1x128xf32>
    %136 = arith.subf %135, %134 : vector<1x128xf32>
    %137 = math.exp %136 : vector<1x128xf32>
    %cst_42 = arith.constant 1.000000e+00 : f32
    %138 = vector.broadcast %cst_42 : f32 to vector<1x128xf32>
    %139 = arith.addf %138, %137 : vector<1x128xf32>
    %140 = tpu.reciprocal %139 {approx = true} : vector<1x128xf32> -> vector<1x128xf32>
    %141 = arith.index_cast %c1_i32 : i32 to index
    %c0_43 = arith.constant 0 : index
    %c0_44 = arith.constant 0 : index
    %142 = vector.load %arg6[%141, %c0_43, %c0_44] : memref<3x1x128xi32, #tpu.memory_space<vmem>>, vector<1x1x128xi32>
    %143 = vector.shape_cast %142 : vector<1x1x128xi32> to vector<1x128xi32>
    %144 = vector.broadcast %143 : vector<1x128xi32> to vector<32x128xi32>
    %145 = arith.cmpi eq, %0, %144 : vector<32x128xi32>
    %cst_45 = arith.constant 0.000000e+00 : f32
    %146 = vector.shape_cast %140 : vector<1x128xf32> to vector<1x128xf32>
    %147 = vector.broadcast %146 : vector<1x128xf32> to vector<32x128xf32>
    %148 = vector.broadcast %cst_45 : f32 to vector<32x128xf32>
    %149 = arith.select %145, %147, %148 : vector<32x128xi1>, vector<32x128xf32>
    %150 = arith.index_cast %c1_i32 : i32 to index
    %c0_46 = arith.constant 0 : index
    %c0_47 = arith.constant 0 : index
    %151 = vector.load %arg5[%150, %c0_46, %c0_47] : memref<3x1x128xi32, #tpu.memory_space<vmem>>, vector<1x1x128xi32>
    %152 = vector.shape_cast %151 : vector<1x1x128xi32> to vector<1x128xi32>
    %153 = vector.broadcast %152 : vector<1x128xi32> to vector<32x128xi32>
    %154 = arith.cmpi eq, %0, %153 : vector<32x128xi32>
    %155 = arith.extui %154 : vector<32x128xi1> to vector<32x128xi32>
    %156 = arith.sitofp %155 : vector<32x128xi32> to vector<32x128xf32>
    %cst_48 = arith.constant dense<0.000000e+00> : vector<32x32xf32>
    %157 = tpu.matmul %149, %156, %cst_48 {dimension_numbers = #tpu.dot_dimension_numbers<[1], [1], [0], [0], [0, 0, 1, 0], [], []>} : vector<32x128xf32>, vector<32x128xf32>, vector<32x32xf32> -> vector<32x32xf32>
    %cst_49 = arith.constant dense<0.000000e+00> : vector<32xf32>
    %158 = vector.multi_reduction <add>, %157, %cst_49 [1] : vector<32x32xf32> to vector<32xf32>
    %159 = vector.shape_cast %158 : vector<32xf32> to vector<32x1xf32>
    %cst_50 = arith.constant 1.000000e+00 : f32
    %160 = vector.broadcast %cst_50 : f32 to vector<32x1xf32>
    %161 = arith.addf %159, %160 : vector<32x1xf32>
    %162 = math.rsqrt %161 : vector<32x1xf32>
    %cst_51 = arith.constant 0.000000e+00 : f32
    %163 = vector.broadcast %cst_51 : f32 to vector<32x1xf32>
    %164 = arith.cmpf ogt, %159, %163 : vector<32x1xf32>
    %cst_52 = arith.constant 9.99999997E-7 : f32
    %165 = vector.broadcast %cst_52 : f32 to vector<32x1xf32>
    %166 = arith.maximumf %159, %165 : vector<32x1xf32>
    %167 = tpu.reciprocal %166 {approx = true} : vector<32x1xf32> -> vector<32x1xf32>
    %cst_53 = arith.constant 0.000000e+00 : f32
    %168 = vector.broadcast %cst_53 : f32 to vector<32x1xf32>
    %169 = arith.select %164, %167, %168 : vector<32x1xi1>, vector<32x1xf32>
    %170 = arith.truncf %131 : vector<32x128xf32> to vector<32x128xbf16>
    %171 = arith.index_cast %c1_i32 : i32 to index
    %c0_54 = arith.constant 0 : index
    %c0_55 = arith.constant 0 : index
    %172 = vector.load %arg2[%171, %c0_54, %c0_55] : memref<3x128x768xbf16, #tpu.memory_space<vmem>>, vector<1x128x768xbf16>
    %173 = vector.shape_cast %172 : vector<1x128x768xbf16> to vector<128x768xbf16>
    %cst_56 = arith.constant dense<0.000000e+00> : vector<32x768xf32>
    %174 = tpu.matmul %170, %173, %cst_56 {dimension_numbers = #tpu.dot_dimension_numbers<[1], [0], [0], [1], [0, 0, 1, 1], [], []>} : vector<32x128xbf16>, vector<128x768xbf16>, vector<32x768xf32> -> vector<32x768xf32>
    %175 = vector.extract_strided_slice %174 {offsets = [0, 0], sizes = [32, 128], strides = [1, 1]} : vector<32x768xf32> to vector<32x128xf32>
    %176 = vector.extract_strided_slice %174 {offsets = [0, 128], sizes = [32, 128], strides = [1, 1]} : vector<32x768xf32> to vector<32x128xf32>
    %177 = vector.broadcast %162 : vector<32x1xf32> to vector<32x128xf32>
    %178 = arith.mulf %177, %176 : vector<32x128xf32>
    %179 = vector.extract_strided_slice %174 {offsets = [0, 256], sizes = [32, 256], strides = [1, 1]} : vector<32x768xf32> to vector<32x256xf32>
    %180 = tpu.concatenate %178, %179 in 1 : vector<32x128xf32>, vector<32x256xf32> -> vector<32x384xf32>
    %cst_57 = arith.constant dense<0.000000e+00> : vector<32x384xf32>
    %181 = tpu.matmul %157, %180, %cst_57 {dimension_numbers = #tpu.dot_dimension_numbers<[1], [0], [0], [1], [0, 0, 1, 1], [], []>} : vector<32x32xf32>, vector<32x384xf32>, vector<32x384xf32> -> vector<32x384xf32>
    %182 = vector.extract_strided_slice %181 {offsets = [0, 0], sizes = [32, 128], strides = [1, 1]} : vector<32x384xf32> to vector<32x128xf32>
    %183 = arith.addf %182, %178 : vector<32x128xf32>
    %184 = vector.broadcast %162 : vector<32x1xf32> to vector<32x128xf32>
    %185 = arith.mulf %184, %183 : vector<32x128xf32>
    %186 = vector.extract_strided_slice %174 {offsets = [0, 256], sizes = [32, 128], strides = [1, 1]} : vector<32x768xf32> to vector<32x128xf32>
    %187 = vector.extract_strided_slice %181 {offsets = [0, 128], sizes = [32, 128], strides = [1, 1]} : vector<32x384xf32> to vector<32x128xf32>
    %188 = arith.addf %186, %187 : vector<32x128xf32>
    %189 = vector.extract_strided_slice %181 {offsets = [0, 256], sizes = [32, 128], strides = [1, 1]} : vector<32x384xf32> to vector<32x128xf32>
    %190 = vector.broadcast %169 : vector<32x1xf32> to vector<32x128xf32>
    %191 = arith.mulf %190, %189 : vector<32x128xf32>
    %192 = vector.extract_strided_slice %174 {offsets = [0, 512], sizes = [32, 128], strides = [1, 1]} : vector<32x768xf32> to vector<32x128xf32>
    %193 = arith.addf %191, %192 : vector<32x128xf32>
    %194 = vector.extract_strided_slice %174 {offsets = [0, 640], sizes = [32, 128], strides = [1, 1]} : vector<32x768xf32> to vector<32x128xf32>
    %195 = arith.index_cast %c1_i32 : i32 to index
    %c0_58 = arith.constant 0 : index
    %c0_59 = arith.constant 0 : index
    %196 = vector.load %arg4[%195, %c0_58, %c0_59] : memref<3x2x128xf32, #tpu.memory_space<vmem>>, vector<1x2x128xf32>
    %197 = vector.shape_cast %196 : vector<1x2x128xf32> to vector<2x128xf32>
    %198 = vector.extract_strided_slice %197 {offsets = [0, 0], sizes = [1, 128], strides = [1, 1]} : vector<2x128xf32> to vector<1x128xf32>
    %199 = vector.broadcast %198 : vector<1x128xf32> to vector<32x128xf32>
    %200 = arith.mulf %175, %199 : vector<32x128xf32>
    %cst_60 = arith.constant dense<0.000000e+00> : vector<32xf32>
    %201 = vector.multi_reduction <add>, %200, %cst_60 [1] : vector<32x128xf32> to vector<32xf32>
    %202 = vector.shape_cast %201 : vector<32xf32> to vector<32x1xf32>
    %203 = vector.extract_strided_slice %197 {offsets = [1, 0], sizes = [1, 128], strides = [1, 1]} : vector<2x128xf32> to vector<1x128xf32>
    %204 = vector.broadcast %203 : vector<1x128xf32> to vector<32x128xf32>
    %205 = arith.mulf %175, %204 : vector<32x128xf32>
    %cst_61 = arith.constant dense<0.000000e+00> : vector<32xf32>
    %206 = vector.multi_reduction <add>, %205, %cst_61 [1] : vector<32x128xf32> to vector<32xf32>
    %207 = vector.shape_cast %206 : vector<32xf32> to vector<32x1xf32>
    %208 = vector.shape_cast %202 : vector<32x1xf32> to vector<32x1xf32>
    %209 = vector.broadcast %208 : vector<32x1xf32> to vector<32x8xf32>
    %cst_62 = arith.constant dense<0.000000e+00> : vector<32x32xf32>
    %210 = tpu.matmul %4, %209, %cst_62 {dimension_numbers = #tpu.dot_dimension_numbers<[1], [1], [0], [0], [0, 0, 1, 0], [], []>} : vector<32x8xf32>, vector<32x8xf32>, vector<32x32xf32> -> vector<32x32xf32>
    %211 = vector.broadcast %207 : vector<32x1xf32> to vector<32x32xf32>
    %212 = arith.addf %211, %210 : vector<32x32xf32>
    %cst_63 = arith.constant 0.000000e+00 : f32
    %213 = vector.broadcast %cst_63 : f32 to vector<32x32xf32>
    %214 = arith.cmpf ogt, %212, %213 : vector<32x32xf32>
    %cst_64 = arith.constant 2.000000e-01 : f32
    %215 = vector.broadcast %cst_64 : f32 to vector<32x32xf32>
    %216 = arith.mulf %215, %212 : vector<32x32xf32>
    %217 = arith.select %214, %212, %216 : vector<32x32xi1>, vector<32x32xf32>
    %cst_65 = arith.constant 0.000000e+00 : f32
    %218 = vector.broadcast %cst_65 : f32 to vector<32x32xf32>
    %219 = arith.cmpf ogt, %157, %218 : vector<32x32xf32>
    %220 = arith.ori %3, %219 : vector<32x32xi1>
    %cst_66 = arith.constant -1.000000e+30 : f32
    %221 = vector.broadcast %cst_66 : f32 to vector<32x32xf32>
    %222 = arith.select %220, %217, %221 : vector<32x32xi1>, vector<32x32xf32>
    %cst_67 = arith.constant dense<0xFF800000> : vector<32xf32>
    %223 = vector.multi_reduction <maximumf>, %222, %cst_67 [1] : vector<32x32xf32> to vector<32xf32>
    %224 = vector.shape_cast %223 : vector<32xf32> to vector<32x1xf32>
    %225 = vector.broadcast %224 : vector<32x1xf32> to vector<32x32xf32>
    %226 = arith.subf %222, %225 : vector<32x32xf32>
    %cst_68 = arith.constant 1.000000e+00 : f32
    %227 = vector.broadcast %cst_68 : f32 to vector<32x32xf32>
    %228 = arith.select %3, %227, %157 : vector<32x32xi1>, vector<32x32xf32>
    %229 = math.exp %226 : vector<32x32xf32>
    %230 = arith.mulf %228, %229 : vector<32x32xf32>
    %cst_69 = arith.constant dense<0.000000e+00> : vector<32xf32>
    %231 = vector.multi_reduction <add>, %230, %cst_69 [1] : vector<32x32xf32> to vector<32xf32>
    %232 = vector.shape_cast %231 : vector<32xf32> to vector<32x1xf32>
    %233 = tpu.reciprocal %232 {approx = true} : vector<32x1xf32> -> vector<32x1xf32>
    %234 = vector.broadcast %233 : vector<32x1xf32> to vector<32x32xf32>
    %235 = arith.mulf %230, %234 : vector<32x32xf32>
    %236 = arith.index_cast %c1_i32 : i32 to index
    %c0_70 = arith.constant 0 : index
    %c0_71 = arith.constant 0 : index
    %237 = vector.load %arg3[%236, %c0_70, %c0_71] : memref<3x2x128xf32, #tpu.memory_space<vmem>>, vector<1x2x128xf32>
    %238 = vector.shape_cast %237 : vector<1x2x128xf32> to vector<2x128xf32>
    %239 = vector.extract_strided_slice %238 {offsets = [1, 0], sizes = [1, 128], strides = [1, 1]} : vector<2x128xf32> to vector<1x128xf32>
    %cst_72 = arith.constant dense<0.000000e+00> : vector<32x128xf32>
    %240 = tpu.matmul %235, %175, %cst_72 {dimension_numbers = #tpu.dot_dimension_numbers<[1], [0], [0], [1], [0, 0, 1, 1], [], []>} : vector<32x32xf32>, vector<32x128xf32>, vector<32x128xf32> -> vector<32x128xf32>
    %241 = vector.broadcast %239 : vector<1x128xf32> to vector<32x128xf32>
    %242 = arith.mulf %241, %240 : vector<32x128xf32>
    %243 = arith.addf %242, %185 : vector<32x128xf32>
    %244 = arith.addf %243, %188 : vector<32x128xf32>
    %245 = arith.addf %244, %193 : vector<32x128xf32>
    %246 = arith.addf %245, %194 : vector<32x128xf32>
    %247 = vector.extract_strided_slice %238 {offsets = [0, 0], sizes = [1, 128], strides = [1, 1]} : vector<2x128xf32> to vector<1x128xf32>
    %248 = vector.broadcast %247 : vector<1x128xf32> to vector<32x128xf32>
    %249 = arith.addf %246, %248 : vector<32x128xf32>
    %c2_i32 = arith.constant 2 : i32
    %c0_i32_73 = arith.constant 0 : i32
    %250 = arith.cmpi sgt, %c2_i32, %c0_i32_73 : i32
    %cst_74 = arith.constant 0.000000e+00 : f32
    %251 = vector.broadcast %cst_74 : f32 to vector<32x128xf32>
    %252 = arith.maximumf %249, %251 : vector<32x128xf32>
    %253 = arith.select %250, %252, %249 : vector<32x128xf32>
    %254 = arith.index_cast %c2_i32 : i32 to index
    %c0_75 = arith.constant 0 : index
    %c0_76 = arith.constant 0 : index
    %255 = vector.load %arg7[%254, %c0_75, %c0_76] : memref<3x1x128xf32, #tpu.memory_space<vmem>>, vector<1x1x128xf32>
    %256 = vector.shape_cast %255 : vector<1x1x128xf32> to vector<1x128xf32>
    %cst_77 = arith.constant 0.000000e+00 : f32
    %257 = vector.broadcast %cst_77 : f32 to vector<1x128xf32>
    %258 = arith.subf %257, %256 : vector<1x128xf32>
    %259 = math.exp %258 : vector<1x128xf32>
    %cst_78 = arith.constant 1.000000e+00 : f32
    %260 = vector.broadcast %cst_78 : f32 to vector<1x128xf32>
    %261 = arith.addf %260, %259 : vector<1x128xf32>
    %262 = tpu.reciprocal %261 {approx = true} : vector<1x128xf32> -> vector<1x128xf32>
    %263 = arith.index_cast %c2_i32 : i32 to index
    %c0_79 = arith.constant 0 : index
    %c0_80 = arith.constant 0 : index
    %264 = vector.load %arg6[%263, %c0_79, %c0_80] : memref<3x1x128xi32, #tpu.memory_space<vmem>>, vector<1x1x128xi32>
    %265 = vector.shape_cast %264 : vector<1x1x128xi32> to vector<1x128xi32>
    %266 = vector.broadcast %265 : vector<1x128xi32> to vector<32x128xi32>
    %267 = arith.cmpi eq, %0, %266 : vector<32x128xi32>
    %cst_81 = arith.constant 0.000000e+00 : f32
    %268 = vector.shape_cast %262 : vector<1x128xf32> to vector<1x128xf32>
    %269 = vector.broadcast %268 : vector<1x128xf32> to vector<32x128xf32>
    %270 = vector.broadcast %cst_81 : f32 to vector<32x128xf32>
    %271 = arith.select %267, %269, %270 : vector<32x128xi1>, vector<32x128xf32>
    %272 = arith.index_cast %c2_i32 : i32 to index
    %c0_82 = arith.constant 0 : index
    %c0_83 = arith.constant 0 : index
    %273 = vector.load %arg5[%272, %c0_82, %c0_83] : memref<3x1x128xi32, #tpu.memory_space<vmem>>, vector<1x1x128xi32>
    %274 = vector.shape_cast %273 : vector<1x1x128xi32> to vector<1x128xi32>
    %275 = vector.broadcast %274 : vector<1x128xi32> to vector<32x128xi32>
    %276 = arith.cmpi eq, %0, %275 : vector<32x128xi32>
    %277 = arith.extui %276 : vector<32x128xi1> to vector<32x128xi32>
    %278 = arith.sitofp %277 : vector<32x128xi32> to vector<32x128xf32>
    %cst_84 = arith.constant dense<0.000000e+00> : vector<32x32xf32>
    %279 = tpu.matmul %271, %278, %cst_84 {dimension_numbers = #tpu.dot_dimension_numbers<[1], [1], [0], [0], [0, 0, 1, 0], [], []>} : vector<32x128xf32>, vector<32x128xf32>, vector<32x32xf32> -> vector<32x32xf32>
    %cst_85 = arith.constant dense<0.000000e+00> : vector<32xf32>
    %280 = vector.multi_reduction <add>, %279, %cst_85 [1] : vector<32x32xf32> to vector<32xf32>
    %281 = vector.shape_cast %280 : vector<32xf32> to vector<32x1xf32>
    %cst_86 = arith.constant 1.000000e+00 : f32
    %282 = vector.broadcast %cst_86 : f32 to vector<32x1xf32>
    %283 = arith.addf %281, %282 : vector<32x1xf32>
    %284 = math.rsqrt %283 : vector<32x1xf32>
    %cst_87 = arith.constant 0.000000e+00 : f32
    %285 = vector.broadcast %cst_87 : f32 to vector<32x1xf32>
    %286 = arith.cmpf ogt, %281, %285 : vector<32x1xf32>
    %cst_88 = arith.constant 9.99999997E-7 : f32
    %287 = vector.broadcast %cst_88 : f32 to vector<32x1xf32>
    %288 = arith.maximumf %281, %287 : vector<32x1xf32>
    %289 = tpu.reciprocal %288 {approx = true} : vector<32x1xf32> -> vector<32x1xf32>
    %cst_89 = arith.constant 0.000000e+00 : f32
    %290 = vector.broadcast %cst_89 : f32 to vector<32x1xf32>
    %291 = arith.select %286, %289, %290 : vector<32x1xi1>, vector<32x1xf32>
    %292 = arith.truncf %253 : vector<32x128xf32> to vector<32x128xbf16>
    %293 = arith.index_cast %c2_i32 : i32 to index
    %c0_90 = arith.constant 0 : index
    %c0_91 = arith.constant 0 : index
    %294 = vector.load %arg2[%293, %c0_90, %c0_91] : memref<3x128x768xbf16, #tpu.memory_space<vmem>>, vector<1x128x768xbf16>
    %295 = vector.shape_cast %294 : vector<1x128x768xbf16> to vector<128x768xbf16>
    %cst_92 = arith.constant dense<0.000000e+00> : vector<32x768xf32>
    %296 = tpu.matmul %292, %295, %cst_92 {dimension_numbers = #tpu.dot_dimension_numbers<[1], [0], [0], [1], [0, 0, 1, 1], [], []>} : vector<32x128xbf16>, vector<128x768xbf16>, vector<32x768xf32> -> vector<32x768xf32>
    %297 = vector.extract_strided_slice %296 {offsets = [0, 0], sizes = [32, 128], strides = [1, 1]} : vector<32x768xf32> to vector<32x128xf32>
    %298 = vector.extract_strided_slice %296 {offsets = [0, 128], sizes = [32, 128], strides = [1, 1]} : vector<32x768xf32> to vector<32x128xf32>
    %299 = vector.broadcast %284 : vector<32x1xf32> to vector<32x128xf32>
    %300 = arith.mulf %299, %298 : vector<32x128xf32>
    %301 = vector.extract_strided_slice %296 {offsets = [0, 256], sizes = [32, 256], strides = [1, 1]} : vector<32x768xf32> to vector<32x256xf32>
    %302 = tpu.concatenate %300, %301 in 1 : vector<32x128xf32>, vector<32x256xf32> -> vector<32x384xf32>
    %cst_93 = arith.constant dense<0.000000e+00> : vector<32x384xf32>
    %303 = tpu.matmul %279, %302, %cst_93 {dimension_numbers = #tpu.dot_dimension_numbers<[1], [0], [0], [1], [0, 0, 1, 1], [], []>} : vector<32x32xf32>, vector<32x384xf32>, vector<32x384xf32> -> vector<32x384xf32>
    %304 = vector.extract_strided_slice %303 {offsets = [0, 0], sizes = [32, 128], strides = [1, 1]} : vector<32x384xf32> to vector<32x128xf32>
    %305 = arith.addf %304, %300 : vector<32x128xf32>
    %306 = vector.broadcast %284 : vector<32x1xf32> to vector<32x128xf32>
    %307 = arith.mulf %306, %305 : vector<32x128xf32>
    %308 = vector.extract_strided_slice %296 {offsets = [0, 256], sizes = [32, 128], strides = [1, 1]} : vector<32x768xf32> to vector<32x128xf32>
    %309 = vector.extract_strided_slice %303 {offsets = [0, 128], sizes = [32, 128], strides = [1, 1]} : vector<32x384xf32> to vector<32x128xf32>
    %310 = arith.addf %308, %309 : vector<32x128xf32>
    %311 = vector.extract_strided_slice %303 {offsets = [0, 256], sizes = [32, 128], strides = [1, 1]} : vector<32x384xf32> to vector<32x128xf32>
    %312 = vector.broadcast %291 : vector<32x1xf32> to vector<32x128xf32>
    %313 = arith.mulf %312, %311 : vector<32x128xf32>
    %314 = vector.extract_strided_slice %296 {offsets = [0, 512], sizes = [32, 128], strides = [1, 1]} : vector<32x768xf32> to vector<32x128xf32>
    %315 = arith.addf %313, %314 : vector<32x128xf32>
    %316 = vector.extract_strided_slice %296 {offsets = [0, 640], sizes = [32, 128], strides = [1, 1]} : vector<32x768xf32> to vector<32x128xf32>
    %317 = arith.index_cast %c2_i32 : i32 to index
    %c0_94 = arith.constant 0 : index
    %c0_95 = arith.constant 0 : index
    %318 = vector.load %arg4[%317, %c0_94, %c0_95] : memref<3x2x128xf32, #tpu.memory_space<vmem>>, vector<1x2x128xf32>
    %319 = vector.shape_cast %318 : vector<1x2x128xf32> to vector<2x128xf32>
    %320 = vector.extract_strided_slice %319 {offsets = [0, 0], sizes = [1, 128], strides = [1, 1]} : vector<2x128xf32> to vector<1x128xf32>
    %321 = vector.broadcast %320 : vector<1x128xf32> to vector<32x128xf32>
    %322 = arith.mulf %297, %321 : vector<32x128xf32>
    %cst_96 = arith.constant dense<0.000000e+00> : vector<32xf32>
    %323 = vector.multi_reduction <add>, %322, %cst_96 [1] : vector<32x128xf32> to vector<32xf32>
    %324 = vector.shape_cast %323 : vector<32xf32> to vector<32x1xf32>
    %325 = vector.extract_strided_slice %319 {offsets = [1, 0], sizes = [1, 128], strides = [1, 1]} : vector<2x128xf32> to vector<1x128xf32>
    %326 = vector.broadcast %325 : vector<1x128xf32> to vector<32x128xf32>
    %327 = arith.mulf %297, %326 : vector<32x128xf32>
    %cst_97 = arith.constant dense<0.000000e+00> : vector<32xf32>
    %328 = vector.multi_reduction <add>, %327, %cst_97 [1] : vector<32x128xf32> to vector<32xf32>
    %329 = vector.shape_cast %328 : vector<32xf32> to vector<32x1xf32>
    %330 = vector.shape_cast %324 : vector<32x1xf32> to vector<32x1xf32>
    %331 = vector.broadcast %330 : vector<32x1xf32> to vector<32x8xf32>
    %cst_98 = arith.constant dense<0.000000e+00> : vector<32x32xf32>
    %332 = tpu.matmul %4, %331, %cst_98 {dimension_numbers = #tpu.dot_dimension_numbers<[1], [1], [0], [0], [0, 0, 1, 0], [], []>} : vector<32x8xf32>, vector<32x8xf32>, vector<32x32xf32> -> vector<32x32xf32>
    %333 = vector.broadcast %329 : vector<32x1xf32> to vector<32x32xf32>
    %334 = arith.addf %333, %332 : vector<32x32xf32>
    %cst_99 = arith.constant 0.000000e+00 : f32
    %335 = vector.broadcast %cst_99 : f32 to vector<32x32xf32>
    %336 = arith.cmpf ogt, %334, %335 : vector<32x32xf32>
    %cst_100 = arith.constant 2.000000e-01 : f32
    %337 = vector.broadcast %cst_100 : f32 to vector<32x32xf32>
    %338 = arith.mulf %337, %334 : vector<32x32xf32>
    %339 = arith.select %336, %334, %338 : vector<32x32xi1>, vector<32x32xf32>
    %cst_101 = arith.constant 0.000000e+00 : f32
    %340 = vector.broadcast %cst_101 : f32 to vector<32x32xf32>
    %341 = arith.cmpf ogt, %279, %340 : vector<32x32xf32>
    %342 = arith.ori %3, %341 : vector<32x32xi1>
    %cst_102 = arith.constant -1.000000e+30 : f32
    %343 = vector.broadcast %cst_102 : f32 to vector<32x32xf32>
    %344 = arith.select %342, %339, %343 : vector<32x32xi1>, vector<32x32xf32>
    %cst_103 = arith.constant dense<0xFF800000> : vector<32xf32>
    %345 = vector.multi_reduction <maximumf>, %344, %cst_103 [1] : vector<32x32xf32> to vector<32xf32>
    %346 = vector.shape_cast %345 : vector<32xf32> to vector<32x1xf32>
    %347 = vector.broadcast %346 : vector<32x1xf32> to vector<32x32xf32>
    %348 = arith.subf %344, %347 : vector<32x32xf32>
    %cst_104 = arith.constant 1.000000e+00 : f32
    %349 = vector.broadcast %cst_104 : f32 to vector<32x32xf32>
    %350 = arith.select %3, %349, %279 : vector<32x32xi1>, vector<32x32xf32>
    %351 = math.exp %348 : vector<32x32xf32>
    %352 = arith.mulf %350, %351 : vector<32x32xf32>
    %cst_105 = arith.constant dense<0.000000e+00> : vector<32xf32>
    %353 = vector.multi_reduction <add>, %352, %cst_105 [1] : vector<32x32xf32> to vector<32xf32>
    %354 = vector.shape_cast %353 : vector<32xf32> to vector<32x1xf32>
    %355 = tpu.reciprocal %354 {approx = true} : vector<32x1xf32> -> vector<32x1xf32>
    %356 = vector.broadcast %355 : vector<32x1xf32> to vector<32x32xf32>
    %357 = arith.mulf %352, %356 : vector<32x32xf32>
    %358 = arith.index_cast %c2_i32 : i32 to index
    %c0_106 = arith.constant 0 : index
    %c0_107 = arith.constant 0 : index
    %359 = vector.load %arg3[%358, %c0_106, %c0_107] : memref<3x2x128xf32, #tpu.memory_space<vmem>>, vector<1x2x128xf32>
    %360 = vector.shape_cast %359 : vector<1x2x128xf32> to vector<2x128xf32>
    %361 = vector.extract_strided_slice %360 {offsets = [1, 0], sizes = [1, 128], strides = [1, 1]} : vector<2x128xf32> to vector<1x128xf32>
    %cst_108 = arith.constant dense<0.000000e+00> : vector<32x128xf32>
    %362 = tpu.matmul %357, %297, %cst_108 {dimension_numbers = #tpu.dot_dimension_numbers<[1], [0], [0], [1], [0, 0, 1, 1], [], []>} : vector<32x32xf32>, vector<32x128xf32>, vector<32x128xf32> -> vector<32x128xf32>
    %363 = vector.broadcast %361 : vector<1x128xf32> to vector<32x128xf32>
    %364 = arith.mulf %363, %362 : vector<32x128xf32>
    %365 = arith.addf %364, %307 : vector<32x128xf32>
    %366 = arith.addf %365, %310 : vector<32x128xf32>
    %367 = arith.addf %366, %315 : vector<32x128xf32>
    %368 = arith.addf %367, %316 : vector<32x128xf32>
    %369 = vector.extract_strided_slice %360 {offsets = [0, 0], sizes = [1, 128], strides = [1, 1]} : vector<2x128xf32> to vector<1x128xf32>
    %370 = vector.broadcast %369 : vector<1x128xf32> to vector<32x128xf32>
    %371 = arith.addf %368, %370 : vector<32x128xf32>
    %c3_i32 = arith.constant 3 : i32
    %c0_109 = arith.constant 0 : index
    %c0_110 = arith.constant 0 : index
    %372 = vector.load %arg8[%c0_109, %c0_110] : memref<32x128xf32, #tpu.memory_space<vmem>>, vector<32x128xf32>
    tpu.vector_store %arg8[%c0_109, %c0_110], %371 {strides = array<i32>} : memref<32x128xf32, #tpu.memory_space<vmem>>, vector<32x128xf32>,
    return
  }
  func.func @transform_0(%arg0: i32) -> (i32, i32) {
    %c0_i32 = arith.constant 0 : i32
    %c0_i32_0 = arith.constant 0 : i32
    %c0_i32_1 = arith.constant 0 : i32
    return %c0_i32, %c0_i32_0 : i32, i32
  }
  func.func @transform_1(%arg0: i32) -> (i32, i32, i32) {
    %c0_i32 = arith.constant 0 : i32
    %c0_i32_0 = arith.constant 0 : i32
    %c0_i32_1 = arith.constant 0 : i32
    %c0_i32_2 = arith.constant 0 : i32
    return %c0_i32, %c0_i32_0, %c0_i32_1 : i32, i32, i32
  }
  func.func @transform_2(%arg0: i32) -> (i32, i32, i32) {
    %c0_i32 = arith.constant 0 : i32
    %c0_i32_0 = arith.constant 0 : i32
    %c0_i32_1 = arith.constant 0 : i32
    %c0_i32_2 = arith.constant 0 : i32
    return %c0_i32, %c0_i32_0, %c0_i32_1 : i32, i32, i32
  }
  func.func @transform_3(%arg0: i32) -> (i32, i32, i32) {
    %c0_i32 = arith.constant 0 : i32
    %c0_i32_0 = arith.constant 0 : i32
    %c0_i32_1 = arith.constant 0 : i32
    %c0_i32_2 = arith.constant 0 : i32
    return %c0_i32, %c0_i32_0, %c0_i32_1 : i32, i32, i32
  }
  func.func @transform_4(%arg0: i32) -> (i32, i32, i32) {
    %c0_i32 = arith.constant 0 : i32
    %c0_i32_0 = arith.constant 0 : i32
    %c0_i32_1 = arith.constant 0 : i32
    %c0_i32_2 = arith.constant 0 : i32
    return %c0_i32, %c0_i32_0, %c0_i32_1 : i32, i32, i32
  }
  func.func @transform_5(%arg0: i32) -> (i32, i32, i32) {
    %c0_i32 = arith.constant 0 : i32
    %c0_i32_0 = arith.constant 0 : i32
    %c0_i32_1 = arith.constant 0 : i32
    %c0_i32_2 = arith.constant 0 : i32
    return %c0_i32, %c0_i32_0, %c0_i32_1 : i32, i32, i32
  }
  func.func @transform_6(%arg0: i32) -> (i32, i32, i32) {
    %c0_i32 = arith.constant 0 : i32
    %c0_i32_0 = arith.constant 0 : i32
    %c0_i32_1 = arith.constant 0 : i32
    %c0_i32_2 = arith.constant 0 : i32
    return %c0_i32, %c0_i32_0, %c0_i32_1 : i32, i32, i32
  }
  func.func @transform_7(%arg0: i32) -> (i32, i32) {
    %c0_i32 = arith.constant 0 : i32
    %c0_i32_0 = arith.constant 0 : i32
    %c0_i32_1 = arith.constant 0 : i32
    return %c0_i32, %c0_i32_0 : i32, i32
  }
}

</mosaic_0001>

<llo_original>
// kernel: tpu_custom_call.1
$region0: #{tpu_custom_call.1}
  #allocation0 [shape = 'u32[]', space=smem, size = 0x4, offset = 0x4, fixed_abs, tag = 'smem constant byte address 0x4 - core index']
  #allocation1 [shape = 'u32[144,128]{1,0:T(1,128)}', space=vmem, size = 0x12000, scoped, tag = 'internal scratch']
  %s0 = inlined_call_operand.hbm [shape: f32[32,128], index: 0, kind: input, shape index: {}]
  %s1 = inlined_call_operand.hbm [shape: bf16[3,128,768], index: 1, kind: input, shape index: {}]
  %s2 = inlined_call_operand.vmem [shape: f32[3,2,128], index: 2, kind: input, shape index: {}]
  %s3 = inlined_call_operand.hbm [shape: f32[3,2,128], index: 3, kind: input, shape index: {}]
  %s4 = inlined_call_operand.vmem [shape: s32[3,1,128], index: 4, kind: input, shape index: {}]
  %s5 = inlined_call_operand.vmem [shape: s32[3,1,128], index: 5, kind: input, shape index: {}]
  %s6 = inlined_call_operand.vmem [shape: f32[3,1,128], index: 6, kind: input, shape index: {}]
  %s7 = inlined_call_operand.hbm [shape: f32[32,128], index: 7, kind: output, shape index: {}]
  %s8 = sld [smem:[#allocation0]]
  $region50: #{tpu_custom_call.1} parent=0
    _
  %s10 = ssub.s32 1, %s8
  %s11 = scalar_select 0, %s10, %s8
  $region1: #{tpu_custom_call.1} parent=0
    #allocation2 [shape = 'u8[16384]{0}', space=vmem, size = 0x4000, scoped, tag = 'input window, operand 0, single buffered']
    #allocation3 [shape = 's32[1]{0}', space=sflag, size = 0x4, scoped, tag = 'scoped memory for tpu_custom_call.1']
    #allocation4 [shape = 's32[1]{0}', space=sflag, size = 0x4, scoped, tag = 'scoped memory for tpu_custom_call.1']
    #allocation5 [shape = 'u8[589824]{0}', space=vmem, size = 0x90000, scoped, tag = 'input window, operand 1, single buffered']
    #allocation6 [shape = 's32[1]{0}', space=sflag, size = 0x4, scoped, tag = 'scoped memory for tpu_custom_call.1']
    #allocation7 [shape = 'u8[3072]{0}', space=vmem, size = 0xc00, scoped, tag = 'input window, operand 3, single buffered']
    #allocation8 [shape = 'u8[16384]{0}', space=vmem, size = 0x4000, scoped, tag = 'output window, operand 0, single buffered']
    %12 = vsyncpa [#allocation3], 0
    %13 = vsyncpa [#allocation6], 0
    %14 = vsyncpa [#allocation4], 0
    // Predicated region
    $region2: #{tpu_custom_call.1} parent=1 // pred_check
      _
    $region3: #{tpu_custom_call.1} parent=1 // pred_check_branch
      %16 = sbr.rel (0) target = $region5
    $region4: #{tpu_custom_call.1} parent=1 // pred_region
      %s18 = ssub.s32 512, 512
      %19 = vsyncadd [#allocation3], %s18
      %s20 = sshll.u32 [#allocation2], 4
      %s21 = int_to_ptr.vmem [resolvable:$true] %s20
      %26 = dma.hbm_to_vmem [thread:$0]  %s0, 512, %s21, [#allocation3], 128, 128, 8
    $region5: #{tpu_custom_call.1} parent=1 // pred_fallthru
      _
    // Predicated region
    $region6: #{tpu_custom_call.1} parent=1 // pred_check
      _
    $region7: #{tpu_custom_call.1} parent=1 // pred_check_branch
      %28 = sbr.rel (0) target = $region9
    $region8: #{tpu_custom_call.1} parent=1 // pred_region
      %s30 = ssub.s32 18432, 18432
      %31 = vsyncadd [#allocation6], %s30
      %s32 = sshll.u32 [#allocation5], 4
      %s33 = int_to_ptr.vmem [resolvable:$true] %s32
      %38 = dma.hbm_to_vmem [thread:$0]  %s1, 18432, %s33, [#allocation6], 384, 384, 24
    $region9: #{tpu_custom_call.1} parent=1 // pred_fallthru
      _
    // Predicated region
    $region10: #{tpu_custom_call.1} parent=1 // pred_check
      _
    $region11: #{tpu_custom_call.1} parent=1 // pred_check_branch
      %40 = sbr.rel (0) target = $region13
    $region12: #{tpu_custom_call.1} parent=1 // pred_region
      _
    $region13: #{tpu_custom_call.1} parent=1 // pred_fallthru
      _
    // Predicated region
    $region14: #{tpu_custom_call.1} parent=1 // pred_check
      _
    $region15: #{tpu_custom_call.1} parent=1 // pred_check_branch
      %42 = sbr.rel (0) target = $region17
    $region16: #{tpu_custom_call.1} parent=1 // pred_region
      %s44 = ssub.s32 96, 96
      %45 = vsyncadd [#allocation6], %s44
      %s46 = sshll.u32 [#allocation7], 4
      %s47 = int_to_ptr.vmem [resolvable:$true] %s46
      %52 = dma.hbm_to_vmem [thread:$0]  %s3, 96, %s47, [#allocation6], 32, 32, 2
    $region17: #{tpu_custom_call.1} parent=1 // pred_fallthru
      _
    // Predicated region
    $region18: #{tpu_custom_call.1} parent=1 // pred_check
      _
    $region19: #{tpu_custom_call.1} parent=1 // pred_check_branch
      %54 = sbr.rel (0) target = $region21
    $region20: #{tpu_custom_call.1} parent=1 // pred_region
      _
    $region21: #{tpu_custom_call.1} parent=1 // pred_fallthru
      _
    // Predicated region
    $region22: #{tpu_custom_call.1} parent=1 // pred_check
      _
    $region23: #{tpu_custom_call.1} parent=1 // pred_check_branch
      %56 = sbr.rel (0) target = $region25
    $region24: #{tpu_custom_call.1} parent=1 // pred_region
      _
    $region25: #{tpu_custom_call.1} parent=1 // pred_fallthru
      _
    // Predicated region
    $region26: #{tpu_custom_call.1} parent=1 // pred_check
      _
    $region27: #{tpu_custom_call.1} parent=1 // pred_check_branch
      %58 = sbr.rel (0) target = $region29
    $region28: #{tpu_custom_call.1} parent=1 // pred_region
      _
    $region29: #{tpu_custom_call.1} parent=1 // pred_fallthru
      _
    // Predicated region
    $region30: #{tpu_custom_call.1} parent=1 // pred_check
      _
    $region31: #{tpu_custom_call.1} parent=1 // pred_check_branch
      %60 = sbr.rel (0) target = $region33
    $region32: #{tpu_custom_call.1} parent=1 // pred_region
      %61 = dma.done [#allocation3], 512
    $region33: #{tpu_custom_call.1} parent=1 // pred_fallthru
      _
    // Predicated region
    $region34: #{tpu_custom_call.1} parent=1 // pred_check
      _
    $region35: #{tpu_custom_call.1} parent=1 // pred_check_branch
      %63 = sbr.rel (0) target = $region37
    $region36: #{tpu_custom_call.1} parent=1 // pred_region
      %64 = dma.done [#allocation6], 18432
    $region37: #{tpu_custom_call.1} parent=1 // pred_fallthru
      _
    // Predicated region
    $region38: #{tpu_custom_call.1} parent=1 // pred_check
      _
    $region39: #{tpu_custom_call.1} parent=1 // pred_check_branch
      %66 = sbr.rel (0) target = $region41
    $region40: #{tpu_custom_call.1} parent=1 // pred_region
      %67 = dma.done [#allocation6], 96
    $region41: #{tpu_custom_call.1} parent=1 // pred_fallthru
      _
    %v69 = vlaneseq
    %v70 = vshrl.u32 %v69, 7
    %v71 = vadd.s32 %v70, 8
    %v72 = vadd.s32 %v70, 16
    %v73 = vadd.s32 %v70, 24
    %v74 = vlaneseq
    %v75 = vand.u32 %v74, 127
    %vm76 = vcmp.eq.s32.totalorder %v70, %v75
    %vm77 = vcmp.eq.s32.totalorder %v71, %v75
    %vm78 = vcmp.eq.s32.totalorder %v72, %v75
    %vm79 = vcmp.eq.s32.totalorder %v73, %v75
    %v80 = vld [vmem:[#allocation2] sm:$0xff]
    %v81 = vld [vmem:[#allocation2 + $0x8] sm:$0xff]
    %v82 = vld [vmem:[#allocation2 + $0x10] sm:$0xff]
    %v83 = vld [vmem:[#allocation2 + $0x18] sm:$0xff]
    %v84 = vld [vmem:[%s6] sm:$0x1]
    %v85 = vsub.f32 0.0, %v84
    %v86 = vmul.f32 %v85, 1.442695
    %v87 = vpow.pop %v86
    %v88 = vadd.f32 %v87, 1.0
    %v89 = vrcp.pop %v88
    %v90 = vld [vmem:[%s5] sm:$0x1]
    %v91 = vlaneseq
    %v92 = vshrl.u32 %v91, 7
    %v93 = vsub.s32 0, %v92
    %v94 = vrot.slane %v90, %v93
    %vm95 = vcmp.eq.s32.totalorder %v70, %v94
    %vm96 = vcmp.eq.s32.totalorder %v71, %v94
    %vm97 = vcmp.eq.s32.totalorder %v72, %v94
    %vm98 = vcmp.eq.s32.totalorder %v73, %v94
    %v100 = vlaneseq
    %v101 = vshrl.u32 %v100, 7
    %v102 = vsub.s32 0, %v101
    %v103 = vrot.slane %v89, %v102
    %v105 = vsel %vm95, %v103, 0.0
    %v106 = vsel %vm96, %v103, 0.0
    %v107 = vsel %vm97, %v103, 0.0
    %v108 = vsel %vm98, %v103, 0.0
    %v109 = vld [vmem:[%s4] sm:$0x1]
    %v110 = vlaneseq
    %v111 = vshrl.u32 %v110, 7
    %v112 = vsub.s32 0, %v111
    %v113 = vrot.slane %v109, %v112
    %vm114 = vcmp.eq.s32.totalorder %v70, %v113
    %vm115 = vcmp.eq.s32.totalorder %v71, %v113
    %vm116 = vcmp.eq.s32.totalorder %v72, %v113
    %vm117 = vcmp.eq.s32.totalorder %v73, %v113
    %v118 = vsel %vm114, 1, 0
    %v119 = vsel %vm115, 1, 0
    %v120 = vsel %vm116, 1, 0
    %v121 = vsel %vm117, 1, 0
    %v122 = vcvt.s32.f32 %v118
    %v123 = vcvt.s32.f32 %v119
    %v124 = vcvt.s32.f32 %v120
    %v125 = vcvt.s32.f32 %v121
    %126 = vmatprep.subr.mxu0 0.0
    %127 = vmatpush1.xpose.msra.mxu0 %v122
    %128 = vmatprep.subr.mxu0 0.0
    %129 = vmatpush1.xpose.msra.mxu0 %v123
    %130 = vmatprep.subr.mxu0 0.0
    %131 = vmatpush1.xpose.msra.mxu0 %v124
    %132 = vmatprep.subr.mxu0 0.0
    %133 = vmatpush1.xpose.msra.mxu0 %v125
    %134 = vmatprep.subr.mxu0 0.0
    %135 = vmatpush1.xpose.msra.mxu0 0.0
    %136 = vmatprep.subr.mxu0 0.0
    %137 = vmatpush1.xpose.msra.mxu0 0.0
    %138 = vmatprep.subr.mxu0 0.0
    %139 = vmatpush1.xpose.msra.mxu0 0.0
    %140 = vmatprep.subr.mxu0 0.0
    %141 = vmatpush1.xpose.msra.mxu0 0.0
    %142 = vmatprep.subr.mxu0 0.0
    %143 = vmatpush1.xpose.msra.mxu0 0.0
    %144 = vmatprep.subr.mxu0 0.0
    %145 = vmatpush1.xpose.msra.mxu0 0.0
    %146 = vmatprep.subr.mxu0 0.0
    %147 = vmatpush1.xpose.msra.mxu0 0.0
    %148 = vmatprep.subr.mxu0 0.0
    %149 = vmatpush1.xpose.msra.mxu0 0.0
    %150 = vmatprep.subr.mxu0 0.0
    %151 = vmatpush1.xpose.msra.mxu0 0.0
    %152 = vmatprep.subr.mxu0 0.0
    %153 = vmatpush1.xpose.msra.mxu0 0.0
    %154 = vmatprep.subr.mxu0 0.0
    %155 = vmatpush1.xpose.msra.mxu0 0.0
    %156 = vmatprep.subr.mxu0 0.0
    %157 = vmatpush1.xpose.msra.mxu0 0.0
    %158 = vmatprep.subr.mxu0 0.0
    %159 = vmatpush1.xpose.msra.mxu0 0.0
    %160 = vmatprep.subr.mxu0 0.0
    %161 = vmatpush1.xpose.msra.mxu0 0.0
    %162 = vmatprep.subr.mxu0 0.0
    %163 = vmatpush1.xpose.msra.mxu0 0.0
    %164 = vmatprep.subr.mxu0 0.0
    %165 = vmatpush1.xpose.msra.mxu0 0.0
    %166 = vmatprep.subr.mxu0 0.0
    %167 = vmatpush1.xpose.msra.mxu0 0.0
    %168 = vmatprep.subr.mxu0 0.0
    %169 = vmatpush1.xpose.msra.mxu0 0.0
    %170 = vmatprep.subr.mxu0 0.0
    %171 = vmatpush1.xpose.msra.mxu0 0.0
    %172 = vmatprep.subr.mxu0 0.0
    %173 = vmatpush1.xpose.msra.mxu0 0.0
    %174 = vmatprep.subr.mxu0 0.0
    %175 = vmatpush1.xpose.msra.mxu0 0.0
    %176 = vmatprep.subr.mxu0 0.0
    %177 = vmatpush1.xpose.msra.mxu0 0.0
    %178 = vmatprep.subr.mxu0 0.0
    %179 = vmatpush1.xpose.msra.mxu0 0.0
    %180 = vmatprep.subr.mxu0 0.0
    %181 = vmatpush1.xpose.msra.mxu0 0.0
    %182 = vmatprep.subr.mxu0 0.0
    %183 = vmatpush1.xpose.msra.mxu0 0.0
    %184 = vmatprep.subr.mxu0 0.0
    %185 = vmatpush1.xpose.msra.mxu0 0.0
    %186 = vmatprep.subr.mxu0 0.0
    %187 = vmatpush1.xpose.msra.mxu0 0.0
    %188 = vmatprep.subr.mxu0 0.0
    %189 = vmatpush1.xpose.msra.mxu0 0.0
    %190 = vmatprep.mubr.f32.mxu0 0.0
    %191 = vmatmul.mubr.f32.gmra.mrb[0].mxu0 %v105
    %v192 = vpop.f32.mrb[0].mxu0
    %v193 = vadd.f32 0.0, %v192
    %v194 = vpop.f32.mrb[0].mxu0
    %195 = vmatprep.mubr.f32.mxu0 0.0
    %196 = vmatmul.mubr.f32.gmra.mrb[0].mxu0 %v106
    %v197 = vpop.f32.mrb[0].mxu0
    %v198 = vadd.f32 0.0, %v197
    %v199 = vpop.f32.mrb[0].mxu0
    %200 = vmatprep.mubr.f32.mxu0 0.0
    %201 = vmatmul.mubr.f32.gmra.mrb[0].mxu0 %v107
    %v202 = vpop.f32.mrb[0].mxu0
    %v203 = vadd.f32 0.0, %v202
    %v204 = vpop.f32.mrb[0].mxu0
    %205 = vmatprep.mubr.f32.mxu0 0.0
    %206 = vmatmul.mubr.f32.gmra.mrb[0].mxu0 %v108
    %v207 = vpop.f32.mrb[0].mxu0
    %v208 = vadd.f32 0.0, %v207
    %v209 = vpop.f32.mrb[0].mxu0
    %210 = vdwg.mxu0
    %vm211 = vcmask 261120
    %v212 = vsel %vm211, %v193, 0.0
    %213 = vadd.xlane.f32.xlu0 %v212
    %v214 = vpop.xlane.xlu0 %213
    %v215 = vsel %vm211, %v198, 0.0
    %216 = vadd.xlane.f32.xlu0 %v215
    %v217 = vpop.xlane.xlu0 %216
    %v218 = vsel %vm211, %v203, 0.0
    %219 = vadd.xlane.f32.xlu0 %v218
    %v220 = vpop.xlane.xlu0 %219
    %v221 = vsel %vm211, %v208, 0.0
    %222 = vadd.xlane.f32.xlu0 %v221
    %v223 = vpop.xlane.xlu0 %222
    %v224 = vadd.f32 %v214, 1.0
    %v225 = vadd.f32 %v217, 1.0
    %v226 = vadd.f32 %v220, 1.0
    %v227 = vadd.f32 %v223, 1.0
    %v228 = vrsqrt.pop %v224
    %v229 = vrsqrt.pop %v225
    %v230 = vrsqrt.pop %v226
    %v231 = vrsqrt.pop %v227
    %vm232 = vcmp.gt.f32.partialorder %v214, 0.0
    %vm233 = vcmp.gt.f32.partialorder %v217, 0.0
    %vm234 = vcmp.gt.f32.partialorder %v220, 0.0
    %vm235 = vcmp.gt.f32.partialorder %v223, 0.0
    %v236 = vmax.f32 %v214, 1e-06
    %v237 = vmax.f32 %v217, 1e-06
    %v238 = vmax.f32 %v220, 1e-06
    %v239 = vmax.f32 %v223, 1e-06
    %v240 = vrcp.pop %v236
    %v241 = vrcp.pop %v237
    %v242 = vrcp.pop %v238
    %v243 = vrcp.pop %v239
    %v244 = vsel %vm232, %v240, 0.0
    %v245 = vsel %vm233, %v241, 0.0
    %v246 = vsel %vm234, %v242, 0.0
    %v247 = vsel %vm235, %v243, 0.0
    %v248 = vpack.c.bf16 %v81, %v80
    %v249 = vpack.c.bf16 %v83, %v82
    %v250 = vld [vmem:[#allocation5] sm:$0xff]
    %v251 = vld [vmem:[#allocation5 + $0x8] sm:$0xff]
    %v252 = vld [vmem:[#allocation5 + $0x10] sm:$0xff]
    %v253 = vld [vmem:[#allocation5 + $0x18] sm:$0xff]
    %v254 = vld [vmem:[#allocation5 + $0x20] sm:$0xff]
    %v255 = vld [vmem:[#allocation5 + $0x28] sm:$0xff]
    %v256 = vld [vmem:[#allocation5 + $0x30] sm:$0xff]
    %v257 = vld [vmem:[#allocation5 + $0x38] sm:$0xff]
    %v258 = vld [vmem:[#allocation5 + $0x40] sm:$0xff]
    %v259 = vld [vmem:[#allocation5 + $0x48] sm:$0xff]
    %v260 = vld [vmem:[#allocation5 + $0x50] sm:$0xff]
    %v261 = vld [vmem:[#allocation5 + $0x58] sm:$0xff]
    %v262 = vld [vmem:[#allocation5 + $0x60] sm:$0xff]
    %v263 = vld [vmem:[#allocation5 + $0x68] sm:$0xff]
    %v264 = vld [vmem:[#allocation5 + $0x70] sm:$0xff]
    %v265 = vld [vmem:[#allocation5 + $0x78] sm:$0xff]
    %v266 = vld [vmem:[#allocation5 + $0x80] sm:$0xff]
    %v267 = vld [vmem:[#allocation5 + $0x88] sm:$0xff]
    %v268 = vld [vmem:[#allocation5 + $0x90] sm:$0xff]
    %v269 = vld [vmem:[#allocation5 + $0x98] sm:$0xff]
    %v270 = vld [vmem:[#allocation5 + $0xa0] sm:$0xff]
    %v271 = vld [vmem:[#allocation5 + $0xa8] sm:$0xff]
    %v272 = vld [vmem:[#allocation5 + $0xb0] sm:$0xff]
    %v273 = vld [vmem:[#allocation5 + $0xb8] sm:$0xff]
    %v274 = vld [vmem:[#allocation5 + $0xc0] sm:$0xff]
    %v275 = vld [vmem:[#allocation5 + $0xc8] sm:$0xff]
    %v276 = vld [vmem:[#allocation5 + $0xd0] sm:$0xff]
    %v277 = vld [vmem:[#allocation5 + $0xd8] sm:$0xff]
    %v278 = vld [vmem:[#allocation5 + $0xe0] sm:$0xff]
    %v279 = vld [vmem:[#allocation5 + $0xe8] sm:$0xff]
    %v280 = vld [vmem:[#allocation5 + $0xf0] sm:$0xff]
    %v281 = vld [vmem:[#allocation5 + $0xf8] sm:$0xff]
    %v282 = vld [vmem:[#allocation5 + $0x100] sm:$0xff]
    %v283 = vld [vmem:[#allocation5 + $0x108] sm:$0xff]
    %v284 = vld [vmem:[#allocation5 + $0x110] sm:$0xff]
    %v285 = vld [vmem:[#allocation5 + $0x118] sm:$0xff]
    %v286 = vld [vmem:[#allocation5 + $0x120] sm:$0xff]
    %v287 = vld [vmem:[#allocation5 + $0x128] sm:$0xff]
    %v288 = vld [vmem:[#allocation5 + $0x130] sm:$0xff]
    %v289 = vld [vmem:[#allocation5 + $0x138] sm:$0xff]
    %v290 = vld [vmem:[#allocation5 + $0x140] sm:$0xff]
    %v291 = vld [vmem:[#allocation5 + $0x148] sm:$0xff]
    %v292 = vld [vmem:[#allocation5 + $0x150] sm:$0xff]
    %v293 = vld [vmem:[#allocation5 + $0x158] sm:$0xff]
    %v294 = vld [vmem:[#allocation5 + $0x160] sm:$0xff]
    %v295 = vld [vmem:[#allocation5 + $0x168] sm:$0xff]
    %v296 = vld [vmem:[#allocation5 + $0x170] sm:$0xff]
    %v297 = vld [vmem:[#allocation5 + $0x178] sm:$0xff]
    %v346 = vunpack.c.l.b16 %v250
    %v347 = vunpack.c.h.b16 %v250
    %v348 = vunpack.c.l.b16 %v251
    %v349 = vunpack.c.h.b16 %v251
    %v350 = vunpack.c.l.b16 %v252
    %v351 = vunpack.c.h.b16 %v252
    %v352 = vunpack.c.l.b16 %v253
    %v353 = vunpack.c.h.b16 %v253
    %v354 = vunpack.c.l.b16 %v254
    %v355 = vunpack.c.h.b16 %v254
    %v356 = vunpack.c.l.b16 %v255
    %v357 = vunpack.c.h.b16 %v255
    %v358 = vunpack.c.l.b16 %v256
    %v359 = vunpack.c.h.b16 %v256
    %v360 = vunpack.c.l.b16 %v257
    %v361 = vunpack.c.h.b16 %v257
    %v362 = vunpack.c.l.b16 %v258
    %v363 = vunpack.c.h.b16 %v258
    %v364 = vunpack.c.l.b16 %v259
    %v365 = vunpack.c.h.b16 %v259
    %v366 = vunpack.c.l.b16 %v260
    %v367 = vunpack.c.h.b16 %v260
    %v368 = vunpack.c.l.b16 %v261
    %v369 = vunpack.c.h.b16 %v261
    %v370 = vunpack.c.l.b16 %v262
    %v371 = vunpack.c.h.b16 %v262
    %v372 = vunpack.c.l.b16 %v263
    %v373 = vunpack.c.h.b16 %v263
    %v374 = vunpack.c.l.b16 %v264
    %v375 = vunpack.c.h.b16 %v264
    %v376 = vunpack.c.l.b16 %v265
    %v377 = vunpack.c.h.b16 %v265
    %v378 = vunpack.c.l.b16 %v266
    %v379 = vunpack.c.h.b16 %v266
    %v380 = vunpack.c.l.b16 %v267
    %v381 = vunpack.c.h.b16 %v267
    %v382 = vunpack.c.l.b16 %v268
    %v383 = vunpack.c.h.b16 %v268
    %v384 = vunpack.c.l.b16 %v269
    %v385 = vunpack.c.h.b16 %v269
    %v386 = vunpack.c.l.b16 %v270
    %v387 = vunpack.c.h.b16 %v270
    %v388 = vunpack.c.l.b16 %v271
    %v389 = vunpack.c.h.b16 %v271
    %v390 = vunpack.c.l.b16 %v272
    %v391 = vunpack.c.h.b16 %v272
    %v392 = vunpack.c.l.b16 %v273
    %v393 = vunpack.c.h.b16 %v273
    %v394 = vunpack.c.l.b16 %v274
    %v395 = vunpack.c.h.b16 %v274
    %v396 = vunpack.c.l.b16 %v275
    %v397 = vunpack.c.h.b16 %v275
    %v398 = vunpack.c.l.b16 %v276
    %v399 = vunpack.c.h.b16 %v276
    %v400 = vunpack.c.l.b16 %v277
    %v401 = vunpack.c.h.b16 %v277
    %v402 = vunpack.c.l.b16 %v278
    %v403 = vunpack.c.h.b16 %v278
    %v404 = vunpack.c.l.b16 %v279
    %v405 = vunpack.c.h.b16 %v279
    %v406 = vunpack.c.l.b16 %v280
    %v407 = vunpack.c.h.b16 %v280
    %v408 = vunpack.c.l.b16 %v281
    %v409 = vunpack.c.h.b16 %v281
    %v410 = vunpack.c.l.b16 %v282
    %v411 = vunpack.c.h.b16 %v282
    %v412 = vunpack.c.l.b16 %v283
    %v413 = vunpack.c.h.b16 %v283
    %v414 = vunpack.c.l.b16 %v284
    %v415 = vunpack.c.h.b16 %v284
    %v416 = vunpack.c.l.b16 %v285
    %v417 = vunpack.c.h.b16 %v285
    %v418 = vunpack.c.l.b16 %v286
    %v419 = vunpack.c.h.b16 %v286
    %v420 = vunpack.c.l.b16 %v287
    %v421 = vunpack.c.h.b16 %v287
    %v422 = vunpack.c.l.b16 %v288
    %v423 = vunpack.c.h.b16 %v288
    %v424 = vunpack.c.l.b16 %v289
    %v425 = vunpack.c.h.b16 %v289
    %v426 = vunpack.c.l.b16 %v290
    %v427 = vunpack.c.h.b16 %v290
    %v428 = vunpack.c.l.b16 %v291
    %v429 = vunpack.c.h.b16 %v291
    %v430 = vunpack.c.l.b16 %v292
    %v431 = vunpack.c.h.b16 %v292
    %v432 = vunpack.c.l.b16 %v293
    %v433 = vunpack.c.h.b16 %v293
    %v434 = vunpack.c.l.b16 %v294
    %v435 = vunpack.c.h.b16 %v294
    %v436 = vunpack.c.l.b16 %v295
    %v437 = vunpack.c.h.b16 %v295
    %v438 = vunpack.c.l.b16 %v296
    %v439 = vunpack.c.h.b16 %v296
    %v440 = vunpack.c.l.b16 %v297
    %v441 = vunpack.c.h.b16 %v297
    %v442 = vpack.c.b16 %v352, %v346
    %v443 = vpack.c.b16 %v353, %v347
    %v444 = vpack.c.b16 %v354, %v348
    %v445 = vpack.c.b16 %v355, %v349
    %v446 = vpack.c.b16 %v356, %v350
    %v447 = vpack.c.b16 %v357, %v351
    %v448 = vpack.c.b16 %v364, %v358
    %v449 = vpack.c.b16 %v365, %v359
    %v450 = vpack.c.b16 %v366, %v360
    %v451 = vpack.c.b16 %v367, %v361
    %v452 = vpack.c.b16 %v368, %v362
    %v453 = vpack.c.b16 %v369, %v363
    %v454 = vpack.c.b16 %v376, %v370
    %v455 = vpack.c.b16 %v377, %v371
    %v456 = vpack.c.b16 %v378, %v372
    %v457 = vpack.c.b16 %v379, %v373
    %v458 = vpack.c.b16 %v380, %v374
    %v459 = vpack.c.b16 %v381, %v375
    %v460 = vpack.c.b16 %v388, %v382
    %v461 = vpack.c.b16 %v389, %v383
    %v462 = vpack.c.b16 %v390, %v384
    %v463 = vpack.c.b16 %v391, %v385
    %v464 = vpack.c.b16 %v392, %v386
    %v465 = vpack.c.b16 %v393, %v387
    %v466 = vpack.c.b16 %v400, %v394
    %v467 = vpack.c.b16 %v401, %v395
    %v468 = vpack.c.b16 %v402, %v396
    %v469 = vpack.c.b16 %v403, %v397
    %v470 = vpack.c.b16 %v404, %v398
    %v471 = vpack.c.b16 %v405, %v399
    %v472 = vpack.c.b16 %v412, %v406
    %v473 = vpack.c.b16 %v413, %v407
    %v474 = vpack.c.b16 %v414, %v408
    %v475 = vpack.c.b16 %v415, %v409
    %v476 = vpack.c.b16 %v416, %v410
    %v477 = vpack.c.b16 %v417, %v411
    %v478 = vpack.c.b16 %v424, %v418
    %v479 = vpack.c.b16 %v425, %v419
    %v480 = vpack.c.b16 %v426, %v420
    %v481 = vpack.c.b16 %v427, %v421
    %v482 = vpack.c.b16 %v428, %v422
    %v483 = vpack.c.b16 %v429, %v423
    %v484 = vpack.c.b16 %v436, %v430
    %v485 = vpack.c.b16 %v437, %v431
    %v486 = vpack.c.b16 %v438, %v432
    %v487 = vpack.c.b16 %v439, %v433
    %v488 = vpack.c.b16 %v440, %v434
    %v489 = vpack.c.b16 %v441, %v435
    %538 = vmatprep.subr.bf16.mxu0 %v443
    %539 = vmatpush1.bf16.msra.mxu0 %v442
    %540 = vmatprep.subr.bf16.mxu0 %v449
    %541 = vmatpush1.bf16.msra.mxu0 %v448
    %542 = vmatprep.subr.bf16.mxu0 %v455
    %543 = vmatpush1.bf16.msra.mxu0 %v454
    %544 = vmatprep.subr.bf16.mxu0 %v461
    %545 = vmatpush1.bf16.msra.mxu0 %v460
    %546 = vmatprep.subr.bf16.mxu0 %v467
    %547 = vmatpush1.bf16.msra.mxu0 %v466
    %548 = vmatprep.subr.bf16.mxu0 %v473
    %549 = vmatpush1.bf16.msra.mxu0 %v472
    %550 = vmatprep.subr.bf16.mxu0 %v479
    %551 = vmatpush1.bf16.msra.mxu0 %v478
    %552 = vmatprep.subr.bf16.mxu0 %v485
    %553 = vmatpush1.bf16.msra.mxu0 %v484
    %554 = vmatprep.subr.bf16.mxu0 0
    %555 = vmatpush1.bf16.msra.mxu0 0
    %556 = vmatprep.subr.bf16.mxu0 0
    %557 = vmatpush1.bf16.msra.mxu0 0
    %558 = vmatprep.subr.bf16.mxu0 0
    %559 = vmatpush1.bf16.msra.mxu0 0
    %560 = vmatprep.subr.bf16.mxu0 0
    %561 = vmatpush1.bf16.msra.mxu0 0
    %562 = vmatprep.subr.bf16.mxu0 0
    %563 = vmatpush1.bf16.msra.mxu0 0
    %564 = vmatprep.subr.bf16.mxu0 0
    %565 = vmatpush1.bf16.msra.mxu0 0
    %566 = vmatprep.subr.bf16.mxu0 0
    %567 = vmatpush1.bf16.msra.mxu0 0
    %568 = vmatprep.subr.bf16.mxu0 0
    %569 = vmatpush1.bf16.msra.mxu0 0
    %570 = vmatprep.mubr.bf16.mxu0 0
    %571 = vmatmul.mubr.bf16.gmra.mrb[0].mxu0 %v248
    %v572 = vpop.f32.mrb[0].mxu0
    %v573 = vadd.f32 0.0, %v572
    %v574 = vpop.f32.mrb[0].mxu0
    %v575 = vadd.f32 0.0, %v574
    %v576 = vpop.f32.mrb[0].mxu0
    %v577 = vadd.f32 0.0, %v576
    %v578 = vpop.f32.mrb[0].mxu0
    %v579 = vadd.f32 0.0, %v578
    %580 = vmatprep.mubr.bf16.mxu0 0
    %581 = vmatmul.mubr.bf16.gmra.mrb[0].mxu0 %v249
    %v582 = vpop.f32.mrb[0].mxu0
    %v583 = vadd.f32 0.0, %v582
    %v584 = vpop.f32.mrb[0].mxu0
    %v585 = vadd.f32 0.0, %v584
    %v586 = vpop.f32.mrb[0].mxu0
    %v587 = vadd.f32 0.0, %v586
    %v588 = vpop.f32.mrb[0].mxu0
    %v589 = vadd.f32 0.0, %v588
    %590 = vdwg.mxu0
    %591 = vmatprep.subr.bf16.mxu0 %v445
    %592 = vmatpush1.bf16.msra.mxu0 %v444
    %593 = vmatprep.subr.bf16.mxu0 %v451
    %594 = vmatpush1.bf16.msra.mxu0 %v450
    %595 = vmatprep.subr.bf16.mxu0 %v457
    %596 = vmatpush1.bf16.msra.mxu0 %v456
    %597 = vmatprep.subr.bf16.mxu0 %v463
    %598 = vmatpush1.bf16.msra.mxu0 %v462
    %599 = vmatprep.subr.bf16.mxu0 %v469
    %600 = vmatpush1.bf16.msra.mxu0 %v468
    %601 = vmatprep.subr.bf16.mxu0 %v475
    %602 = vmatpush1.bf16.msra.mxu0 %v474
    %603 = vmatprep.subr.bf16.mxu0 %v481
    %604 = vmatpush1.bf16.msra.mxu0 %v480
    %605 = vmatprep.subr.bf16.mxu0 %v487
    %606 = vmatpush1.bf16.msra.mxu0 %v486
    %607 = vmatprep.subr.bf16.mxu0 0
    %608 = vmatpush1.bf16.msra.mxu0 0
    %609 = vmatprep.subr.bf16.mxu0 0
    %610 = vmatpush1.bf16.msra.mxu0 0
    %611 = vmatprep.subr.bf16.mxu0 0
    %612 = vmatpush1.bf16.msra.mxu0 0
    %613 = vmatprep.subr.bf16.mxu0 0
    %614 = vmatpush1.bf16.msra.mxu0 0
    %615 = vmatprep.subr.bf16.mxu0 0
    %616 = vmatpush1.bf16.msra.mxu0 0
    %617 = vmatprep.subr.bf16.mxu0 0
    %618 = vmatpush1.bf16.msra.mxu0 0
    %619 = vmatprep.subr.bf16.mxu0 0
    %620 = vmatpush1.bf16.msra.mxu0 0
    %621 = vmatprep.subr.bf16.mxu0 0
    %622 = vmatpush1.bf16.msra.mxu0 0
    %623 = vmatprep.mubr.bf16.mxu0 0
    %624 = vmatmul.mubr.bf16.gmra.mrb[0].mxu0 %v248
    %v625 = vpop.f32.mrb[0].mxu0
    %v626 = vadd.f32 0.0, %v625
    %v627 = vpop.f32.mrb[0].mxu0
    %v628 = vadd.f32 0.0, %v627
    %v629 = vpop.f32.mrb[0].mxu0
    %v630 = vadd.f32 0.0, %v629
    %v631 = vpop.f32.mrb[0].mxu0
    %v632 = vadd.f32 0.0, %v631
    %633 = vmatprep.mubr.bf16.mxu0 0
    %634 = vmatmul.mubr.bf16.gmra.mrb[0].mxu0 %v249
    %v635 = vpop.f32.mrb[0].mxu0
    %v636 = vadd.f32 0.0, %v635
    %v637 = vpop.f32.mrb[0].mxu0
    %v638 = vadd.f32 0.0, %v637
    %v639 = vpop.f32.mrb[0].mxu0
    %v640 = vadd.f32 0.0, %v639
    %v641 = vpop.f32.mrb[0].mxu0
    %v642 = vadd.f32 0.0, %v641
    %643 = vdwg.mxu0
    %644 = vmatprep.subr.bf16.mxu0 %v447
    %645 = vmatpush1.bf16.msra.mxu0 %v446
    %646 = vmatprep.subr.bf16.mxu0 %v453
    %647 = vmatpush1.bf16.msra.mxu0 %v452
    %648 = vmatprep.subr.bf16.mxu0 %v459
    %649 = vmatpush1.bf16.msra.mxu0 %v458
    %650 = vmatprep.subr.bf16.mxu0 %v465
    %651 = vmatpush1.bf16.msra.mxu0 %v464
    %652 = vmatprep.subr.bf16.mxu0 %v471
    %653 = vmatpush1.bf16.msra.mxu0 %v470
    %654 = vmatprep.subr.bf16.mxu0 %v477
    %655 = vmatpush1.bf16.msra.mxu0 %v476
    %656 = vmatprep.subr.bf16.mxu0 %v483
    %657 = vmatpush1.bf16.msra.mxu0 %v482
    %658 = vmatprep.subr.bf16.mxu0 %v489
    %659 = vmatpush1.bf16.msra.mxu0 %v488
    %660 = vmatprep.subr.bf16.mxu0 0
    %661 = vmatpush1.bf16.msra.mxu0 0
    %662 = vmatprep.subr.bf16.mxu0 0
    %663 = vmatpush1.bf16.msra.mxu0 0
    %664 = vmatprep.subr.bf16.mxu0 0
    %665 = vmatpush1.bf16.msra.mxu0 0
    %666 = vmatprep.subr.bf16.mxu0 0
    %667 = vmatpush1.bf16.msra.mxu0 0
    %668 = vmatprep.subr.bf16.mxu0 0
    %669 = vmatpush1.bf16.msra.mxu0 0
    %670 = vmatprep.subr.bf16.mxu0 0
    %671 = vmatpush1.bf16.msra.mxu0 0
    %672 = vmatprep.subr.bf16.mxu0 0
    %673 = vmatpush1.bf16.msra.mxu0 0
    %674 = vmatprep.subr.bf16.mxu0 0
    %675 = vmatpush1.bf16.msra.mxu0 0
    %676 = vmatprep.mubr.bf16.mxu0 0
    %677 = vmatmul.mubr.bf16.gmra.mrb[0].mxu0 %v248
    %v678 = vpop.f32.mrb[0].mxu0
    %v679 = vadd.f32 0.0, %v678
    %v680 = vpop.f32.mrb[0].mxu0
    %v681 = vadd.f32 0.0, %v680
    %v682 = vpop.f32.mrb[0].mxu0
    %v683 = vadd.f32 0.0, %v682
    %v684 = vpop.f32.mrb[0].mxu0
    %v685 = vadd.f32 0.0, %v684
    %686 = vmatprep.mubr.bf16.mxu0 0
    %687 = vmatmul.mubr.bf16.gmra.mrb[0].mxu0 %v249
    %v688 = vpop.f32.mrb[0].mxu0
    %v689 = vadd.f32 0.0, %v688
    %v690 = vpop.f32.mrb[0].mxu0
    %v691 = vadd.f32 0.0, %v690
    %v692 = vpop.f32.mrb[0].mxu0
    %v693 = vadd.f32 0.0, %v692
    %v694 = vpop.f32.mrb[0].mxu0
    %v695 = vadd.f32 0.0, %v694
    %696 = vdwg.mxu0
    %v697 = vmul.f32 %v228, %v575
    %v698 = vmul.f32 %v229, %v579
    %v699 = vmul.f32 %v230, %v585
    %v700 = vmul.f32 %v231, %v589
    %v702 = vsel %vm211, %v193, 0
    %v705 = vsel %vm211, %v198, 0
    %v708 = vsel %vm211, %v203, 0
    %v711 = vsel %vm211, %v208, 0
    %713 = vmatprep.subr.mxu0 %v626
    %714 = vmatpush1.msra.mxu0 %v697
    %715 = vmatprep.subr.mxu0 %v630
    %716 = vmatpush1.msra.mxu0 %v698
    %717 = vmatprep.subr.mxu0 %v636
    %718 = vmatpush1.msra.mxu0 %v699
    %719 = vmatprep.subr.mxu0 %v640
    %720 = vmatpush1.msra.mxu0 %v700
    %721 = vmatprep.subr.mxu0 0.0
    %722 = vmatpush1.msra.mxu0 0.0
    %723 = vmatprep.subr.mxu0 0.0
    %724 = vmatpush1.msra.mxu0 0.0
    %725 = vmatprep.subr.mxu0 0.0
    %726 = vmatpush1.msra.mxu0 0.0
    %727 = vmatprep.subr.mxu0 0.0
    %728 = vmatpush1.msra.mxu0 0.0
    %729 = vmatprep.subr.mxu0 0.0
    %730 = vmatpush1.msra.mxu0 0.0
    %731 = vmatprep.subr.mxu0 0.0
    %732 = vmatpush1.msra.mxu0 0.0
    %733 = vmatprep.subr.mxu0 0.0
    %734 = vmatpush1.msra.mxu0 0.0
    %735 = vmatprep.subr.mxu0 0.0
    %736 = vmatpush1.msra.mxu0 0.0
    %737 = vmatprep.subr.mxu0 0.0
    %738 = vmatpush1.msra.mxu0 0.0
    %739 = vmatprep.subr.mxu0 0.0
    %740 = vmatpush1.msra.mxu0 0.0
    %741 = vmatprep.subr.mxu0 0.0
    %742 = vmatpush1.msra.mxu0 0.0
    %743 = vmatprep.subr.mxu0 0.0
    %744 = vmatpush1.msra.mxu0 0.0
    %745 = vmatprep.subr.mxu0 0.0
    %746 = vmatpush1.msra.mxu0 0.0
    %747 = vmatprep.subr.mxu0 0.0
    %748 = vmatpush1.msra.mxu0 0.0
    %749 = vmatprep.subr.mxu0 0.0
    %750 = vmatpush1.msra.mxu0 0.0
    %751 = vmatprep.subr.mxu0 0.0
    %752 = vmatpush1.msra.mxu0 0.0
    %753 = vmatprep.subr.mxu0 0.0
    %754 = vmatpush1.msra.mxu0 0.0
    %755 = vmatprep.subr.mxu0 0.0
    %756 = vmatpush1.msra.mxu0 0.0
    %757 = vmatprep.subr.mxu0 0.0
    %758 = vmatpush1.msra.mxu0 0.0
    %759 = vmatprep.subr.mxu0 0.0
    %760 = vmatpush1.msra.mxu0 0.0
    %761 = vmatprep.subr.mxu0 0.0
    %762 = vmatpush1.msra.mxu0 0.0
    %763 = vmatprep.subr.mxu0 0.0
    %764 = vmatpush1.msra.mxu0 0.0
    %765 = vmatprep.subr.mxu0 0.0
    %766 = vmatpush1.msra.mxu0 0.0
    %767 = vmatprep.subr.mxu0 0.0
    %768 = vmatpush1.msra.mxu0 0.0
    %769 = vmatprep.subr.mxu0 0.0
    %770 = vmatpush1.msra.mxu0 0.0
    %771 = vmatprep.subr.mxu0 0.0
    %772 = vmatpush1.msra.mxu0 0.0
    %773 = vmatprep.subr.mxu0 0.0
    %774 = vmatpush1.msra.mxu0 0.0
    %775 = vmatprep.subr.mxu0 0.0
    %776 = vmatpush1.msra.mxu0 0.0
    %777 = vmatprep.mubr.f32.mxu0 0.0
    %778 = vmatmul.mubr.f32.gmra.mrb[0].mxu0 %v702
    %v779 = vpop.f32.mrb[0].mxu0
    %v780 = vadd.f32 0.0, %v779
    %v781 = vpop.f32.mrb[0].mxu0
    %v782 = vadd.f32 0.0, %v781
    %783 = vmatprep.mubr.f32.mxu0 0.0
    %784 = vmatmul.mubr.f32.gmra.mrb[0].mxu0 %v705
    %v785 = vpop.f32.mrb[0].mxu0
    %v786 = vadd.f32 0.0, %v785
    %v787 = vpop.f32.mrb[0].mxu0
    %v788 = vadd.f32 0.0, %v787
    %789 = vmatprep.mubr.f32.mxu0 0.0
    %790 = vmatmul.mubr.f32.gmra.mrb[0].mxu0 %v708
    %v791 = vpop.f32.mrb[0].mxu0
    %v792 = vadd.f32 0.0, %v791
    %v793 = vpop.f32.mrb[0].mxu0
    %v794 = vadd.f32 0.0, %v793
    %795 = vmatprep.mubr.f32.mxu0 0.0
    %796 = vmatmul.mubr.f32.gmra.mrb[0].mxu0 %v711
    %v797 = vpop.f32.mrb[0].mxu0
    %v798 = vadd.f32 0.0, %v797
    %v799 = vpop.f32.mrb[0].mxu0
    %v800 = vadd.f32 0.0, %v799
    %801 = vdwg.mxu0
    %802 = vmatprep.subr.mxu0 0.0
    %803 = vmatpush1.msra.mxu0 %v628
    %804 = vmatprep.subr.mxu0 0.0
    %805 = vmatpush1.msra.mxu0 %v632
    %806 = vmatprep.subr.mxu0 0.0
    %807 = vmatpush1.msra.mxu0 %v638
    %808 = vmatprep.subr.mxu0 0.0
    %809 = vmatpush1.msra.mxu0 %v642
    %810 = vmatprep.subr.mxu0 0.0
    %811 = vmatpush1.msra.mxu0 0.0
    %812 = vmatprep.subr.mxu0 0.0
    %813 = vmatpush1.msra.mxu0 0.0
    %814 = vmatprep.subr.mxu0 0.0
    %815 = vmatpush1.msra.mxu0 0.0
    %816 = vmatprep.subr.mxu0 0.0
    %817 = vmatpush1.msra.mxu0 0.0
    %818 = vmatprep.subr.mxu0 0.0
    %819 = vmatpush1.msra.mxu0 0.0
    %820 = vmatprep.subr.mxu0 0.0
    %821 = vmatpush1.msra.mxu0 0.0
    %822 = vmatprep.subr.mxu0 0.0
    %823 = vmatpush1.msra.mxu0 0.0
    %824 = vmatprep.subr.mxu0 0.0
    %825 = vmatpush1.msra.mxu0 0.0
    %826 = vmatprep.subr.mxu0 0.0
    %827 = vmatpush1.msra.mxu0 0.0
    %828 = vmatprep.subr.mxu0 0.0
    %829 = vmatpush1.msra.mxu0 0.0
    %830 = vmatprep.subr.mxu0 0.0
    %831 = vmatpush1.msra.mxu0 0.0
    %832 = vmatprep.subr.mxu0 0.0
    %833 = vmatpush1.msra.mxu0 0.0
    %834 = vmatprep.subr.mxu0 0.0
    %835 = vmatpush1.msra.mxu0 0.0
    %836 = vmatprep.subr.mxu0 0.0
    %837 = vmatpush1.msra.mxu0 0.0
    %838 = vmatprep.subr.mxu0 0.0
    %839 = vmatpush1.msra.mxu0 0.0
    %840 = vmatprep.subr.mxu0 0.0
    %841 = vmatpush1.msra.mxu0 0.0
    %842 = vmatprep.subr.mxu0 0.0
    %843 = vmatpush1.msra.mxu0 0.0
    %844 = vmatprep.subr.mxu0 0.0
    %845 = vmatpush1.msra.mxu0 0.0
    %846 = vmatprep.subr.mxu0 0.0
    %847 = vmatpush1.msra.mxu0 0.0
    %848 = vmatprep.subr.mxu0 0.0
    %849 = vmatpush1.msra.mxu0 0.0
    %850 = vmatprep.subr.mxu0 0.0
    %851 = vmatpush1.msra.mxu0 0.0
    %852 = vmatprep.subr.mxu0 0.0
    %853 = vmatpush1.msra.mxu0 0.0
    %854 = vmatprep.subr.mxu0 0.0
    %855 = vmatpush1.msra.mxu0 0.0
    %856 = vmatprep.subr.mxu0 0.0
    %857 = vmatpush1.msra.mxu0 0.0
    %858 = vmatprep.subr.mxu0 0.0
    %859 = vmatpush1.msra.mxu0 0.0
    %860 = vmatprep.subr.mxu0 0.0
    %861 = vmatpush1.msra.mxu0 0.0
    %862 = vmatprep.subr.mxu0 0.0
    %863 = vmatpush1.msra.mxu0 0.0
    %864 = vmatprep.subr.mxu0 0.0
    %865 = vmatpush1.msra.mxu0 0.0
    %866 = vmatprep.mubr.f32.mxu0 0.0
    %867 = vmatmul.mubr.f32.gmra.mrb[0].mxu0 %v702
    %v868 = vpop.f32.mrb[0].mxu0
    %v869 = vadd.f32 0.0, %v868
    %v870 = vpop.f32.mrb[0].mxu0
    %871 = vmatprep.mubr.f32.mxu0 0.0
    %872 = vmatmul.mubr.f32.gmra.mrb[0].mxu0 %v705
    %v873 = vpop.f32.mrb[0].mxu0
    %v874 = vadd.f32 0.0, %v873
    %v875 = vpop.f32.mrb[0].mxu0
    %876 = vmatprep.mubr.f32.mxu0 0.0
    %877 = vmatmul.mubr.f32.gmra.mrb[0].mxu0 %v708
    %v878 = vpop.f32.mrb[0].mxu0
    %v879 = vadd.f32 0.0, %v878
    %v880 = vpop.f32.mrb[0].mxu0
    %881 = vmatprep.mubr.f32.mxu0 0.0
    %882 = vmatmul.mubr.f32.gmra.mrb[0].mxu0 %v711
    %v883 = vpop.f32.mrb[0].mxu0
    %v884 = vadd.f32 0.0, %v883
    %v885 = vpop.f32.mrb[0].mxu0
    %886 = vdwg.mxu0
    %v887 = vadd.f32 %v780, %v697
    %v888 = vadd.f32 %v786, %v698
    %v889 = vadd.f32 %v792, %v699
    %v890 = vadd.f32 %v798, %v700
    %v891 = vmul.f32 %v228, %v887
    %v892 = vmul.f32 %v229, %v888
    %v893 = vmul.f32 %v230, %v889
    %v894 = vmul.f32 %v231, %v890
    %v895 = vadd.f32 %v626, %v782
    %v896 = vadd.f32 %v630, %v788
    %v897 = vadd.f32 %v636, %v794
    %v898 = vadd.f32 %v640, %v800
    %v899 = vmul.f32 %v244, %v869
    %v900 = vmul.f32 %v245, %v874
    %v901 = vmul.f32 %v246, %v879
    %v902 = vmul.f32 %v247, %v884
    %v903 = vadd.f32 %v899, %v679
    %v904 = vadd.f32 %v900, %v683
    %v905 = vadd.f32 %v901, %v689
    %v906 = vadd.f32 %v902, %v693
    %v907 = vld [vmem:[#allocation7] sm:$0x3]
    %v908 = vlaneseq
    %v909 = vshrl.u32 %v908, 7
    %v910 = vsub.s32 0, %v909
    %v911 = vrot.slane %v907, %v910
    %v912 = vmul.f32 %v573, %v911
    %v913 = vmul.f32 %v577, %v911
    %v914 = vmul.f32 %v583, %v911
    %v915 = vmul.f32 %v587, %v911
    %916 = vadd.xlane.f32.xlu0 %v912
    %v917 = vpop.xlane.xlu0 %916
    %918 = vadd.xlane.f32.xlu0 %v913
    %v919 = vpop.xlane.xlu0 %918
    %920 = vadd.xlane.f32.xlu0 %v914
    %v921 = vpop.xlane.xlu0 %920
    %922 = vadd.xlane.f32.xlu0 %v915
    %v923 = vpop.xlane.xlu0 %922
    %v924 = vlaneseq
    %v925 = vshrl.u32 %v924, 7
    %v926 = vsub.s32 1, %v925
    %v927 = vrot.slane %v907, %v926
    %v928 = vmul.f32 %v573, %v927
    %v929 = vmul.f32 %v577, %v927
    %v930 = vmul.f32 %v583, %v927
    %v931 = vmul.f32 %v587, %v927
    %932 = vadd.xlane.f32.xlu0 %v928
    %v933 = vpop.xlane.xlu0 %932
    %934 = vadd.xlane.f32.xlu0 %v929
    %v935 = vpop.xlane.xlu0 %934
    %936 = vadd.xlane.f32.xlu0 %v930
    %v937 = vpop.xlane.xlu0 %936
    %938 = vadd.xlane.f32.xlu0 %v931
    %v939 = vpop.xlane.xlu0 %938
    %vm940 = vcmask 64512
    %v942 = vsel %vm940, 0.125, 0
    %v945 = vsel %vm940, %v917, 0
    %v948 = vsel %vm940, %v919, 0
    %v951 = vsel %vm940, %v921, 0
    %v954 = vsel %vm940, %v923, 0
    %956 = vmatprep.subr.mxu0 0.0
    %957 = vmatpush1.xpose.msra.mxu0 %v945
    %958 = vmatprep.subr.mxu0 0.0
    %959 = vmatpush1.xpose.msra.mxu0 %v948
    %960 = vmatprep.subr.mxu0 0.0
    %961 = vmatpush1.xpose.msra.mxu0 %v951
    %962 = vmatprep.subr.mxu0 0.0
    %963 = vmatpush1.xpose.msra.mxu0 %v954
    %964 = vmatprep.subr.mxu0 0.0
    %965 = vmatpush1.xpose.msra.mxu0 0.0
    %966 = vmatprep.subr.mxu0 0.0
    %967 = vmatpush1.xpose.msra.mxu0 0.0
    %968 = vmatprep.subr.mxu0 0.0
    %969 = vmatpush1.xpose.msra.mxu0 0.0
    %970 = vmatprep.subr.mxu0 0.0
    %971 = vmatpush1.xpose.msra.mxu0 0.0
    %972 = vmatprep.subr.mxu0 0.0
    %973 = vmatpush1.xpose.msra.mxu0 0.0
    %974 = vmatprep.subr.mxu0 0.0
    %975 = vmatpush1.xpose.msra.mxu0 0.0
    %976 = vmatprep.subr.mxu0 0.0
    %977 = vmatpush1.xpose.msra.mxu0 0.0
    %978 = vmatprep.subr.mxu0 0.0
    %979 = vmatpush1.xpose.msra.mxu0 0.0
    %980 = vmatprep.subr.mxu0 0.0
    %981 = vmatpush1.xpose.msra.mxu0 0.0
    %982 = vmatprep.subr.mxu0 0.0
    %983 = vmatpush1.xpose.msra.mxu0 0.0
    %984 = vmatprep.subr.mxu0 0.0
    %985 = vmatpush1.xpose.msra.mxu0 0.0
    %986 = vmatprep.subr.mxu0 0.0
    %987 = vmatpush1.xpose.msra.mxu0 0.0
    %988 = vmatprep.subr.mxu0 0.0
    %989 = vmatpush1.xpose.msra.mxu0 0.0
    %990 = vmatprep.subr.mxu0 0.0
    %991 = vmatpush1.xpose.msra.mxu0 0.0
    %992 = vmatprep.subr.mxu0 0.0
    %993 = vmatpush1.xpose.msra.mxu0 0.0
    %994 = vmatprep.subr.mxu0 0.0
    %995 = vmatpush1.xpose.msra.mxu0 0.0
    %996 = vmatprep.subr.mxu0 0.0
    %997 = vmatpush1.xpose.msra.mxu0 0.0
    %998 = vmatprep.subr.mxu0 0.0
    %999 = vmatpush1.xpose.msra.mxu0 0.0
    %1000 = vmatprep.subr.mxu0 0.0
    %1001 = vmatpush1.xpose.msra.mxu0 0.0
    %1002 = vmatprep.subr.mxu0 0.0
    %1003 = vmatpush1.xpose.msra.mxu0 0.0
    %1004 = vmatprep.subr.mxu0 0.0
    %1005 = vmatpush1.xpose.msra.mxu0 0.0
    %1006 = vmatprep.subr.mxu0 0.0
    %1007 = vmatpush1.xpose.msra.mxu0 0.0
    %1008 = vmatprep.subr.mxu0 0.0
    %1009 = vmatpush1.xpose.msra.mxu0 0.0
    %1010 = vmatprep.subr.mxu0 0.0
    %1011 = vmatpush1.xpose.msra.mxu0 0.0
    %1012 = vmatprep.subr.mxu0 0.0
    %1013 = vmatpush1.xpose.msra.mxu0 0.0
    %1014 = vmatprep.subr.mxu0 0.0
    %1015 = vmatpush1.xpose.msra.mxu0 0.0
    %1016 = vmatprep.subr.mxu0 0.0
    %1017 = vmatpush1.xpose.msra.mxu0 0.0
    %1018 = vmatprep.subr.mxu0 0.0
    %1019 = vmatpush1.xpose.msra.mxu0 0.0
    %1020 = vmatprep.mubr.f32.mxu0 0.0
    %1021 = vmatmul.mubr.f32.gmra.mrb[0].mxu0 %v942
    %v1022 = vpop.f32.mrb[0].mxu0
    %v1023 = vadd.f32 0.0, %v1022
    %v1024 = vpop.f32.mrb[0].mxu0
    %1025 = vmatprep.mubr.f32.mxu0 0.0
    %1026 = vmatmul.mubr.f32.gmra.mrb[0].mxu0 %v942
    %v1027 = vpop.f32.mrb[0].mxu0
    %v1028 = vadd.f32 0.0, %v1027
    %v1029 = vpop.f32.mrb[0].mxu0
    %1030 = vmatprep.mubr.f32.mxu0 0.0
    %1031 = vmatmul.mubr.f32.gmra.mrb[0].mxu0 %v942
    %v1032 = vpop.f32.mrb[0].mxu0
    %v1033 = vadd.f32 0.0, %v1032
    %v1034 = vpop.f32.mrb[0].mxu0
    %1035 = vmatprep.mubr.f32.mxu0 0.0
    %1036 = vmatmul.mubr.f32.gmra.mrb[0].mxu0 %v942
    %v1037 = vpop.f32.mrb[0].mxu0
    %v1038 = vadd.f32 0.0, %v1037
    %v1039 = vpop.f32.mrb[0].mxu0
    %1040 = vdwg.mxu0
    %v1041 = vadd.f32 %v933, %v1023
    %v1042 = vadd.f32 %v935, %v1028
    %v1043 = vadd.f32 %v937, %v1033
    %v1044 = vadd.f32 %v939, %v1038
    %vm1045 = vcmp.gt.f32.partialorder %v1041, 0.0
    %vm1046 = vcmp.gt.f32.partialorder %v1042, 0.0
    %vm1047 = vcmp.gt.f32.partialorder %v1043, 0.0
    %vm1048 = vcmp.gt.f32.partialorder %v1044, 0.0
    %v1049 = vmul.f32 %v1041, 0.2
    %v1050 = vmul.f32 %v1042, 0.2
    %v1051 = vmul.f32 %v1043, 0.2
    %v1052 = vmul.f32 %v1044, 0.2
    %v1053 = vsel %vm1045, %v1041, %v1049
    %v1054 = vsel %vm1046, %v1042, %v1050
    %v1055 = vsel %vm1047, %v1043, %v1051
    %v1056 = vsel %vm1048, %v1044, %v1052
    %vm1057 = vcmp.gt.f32.partialorder %v193, 0.0
    %vm1058 = vcmp.gt.f32.partialorder %v198, 0.0
    %vm1059 = vcmp.gt.f32.partialorder %v203, 0.0
    %vm1060 = vcmp.gt.f32.partialorder %v208, 0.0
    %vm1061 = vmor %vm76, %vm1057
    %vm1062 = vmor %vm77, %vm1058
    %vm1063 = vmor %vm78, %vm1059
    %vm1064 = vmor %vm79, %vm1060
    %v1065 = vsel %vm1061, %v1053, -1e+30
    %v1066 = vsel %vm1062, %v1054, -1e+30
    %v1067 = vsel %vm1063, %v1055, -1e+30
    %v1068 = vsel %vm1064, %v1056, -1e+30
    %v1069 = vsel %vm211, %v1065, -inf
    %1070 = vmax.xlane.f32.xlu0 %v1069
    %v1071 = vpop.xlane.xlu0 %1070
    %v1072 = vsel %vm211, %v1066, -inf
    %1073 = vmax.xlane.f32.xlu0 %v1072
    %v1074 = vpop.xlane.xlu0 %1073
    %v1075 = vsel %vm211, %v1067, -inf
    %1076 = vmax.xlane.f32.xlu0 %v1075
    %v1077 = vpop.xlane.xlu0 %1076
    %v1078 = vsel %vm211, %v1068, -inf
    %1079 = vmax.xlane.f32.xlu0 %v1078
    %v1080 = vpop.xlane.xlu0 %1079
    %v1081 = vsub.f32 %v1065, %v1071
    %v1082 = vsub.f32 %v1066, %v1074
    %v1083 = vsub.f32 %v1067, %v1077
    %v1084 = vsub.f32 %v1068, %v1080
    %v1085 = vsel %vm76, 1.0, %v193
    %v1086 = vsel %vm77, 1.0, %v198
    %v1087 = vsel %vm78, 1.0, %v203
    %v1088 = vsel %vm79, 1.0, %v208
    %v1089 = vmul.f32 %v1081, 1.442695
    %v1090 = vpow.pop %v1089
    %v1091 = vmul.f32 %v1082, 1.442695
    %v1092 = vpow.pop %v1091
    %v1093 = vmul.f32 %v1083, 1.442695
    %v1094 = vpow.pop %v1093
    %v1095 = vmul.f32 %v1084, 1.442695
    %v1096 = vpow.pop %v1095
    %v1097 = vmul.f32 %v1085, %v1090
    %v1098 = vmul.f32 %v1086, %v1092
    %v1099 = vmul.f32 %v1087, %v1094
    %v1100 = vmul.f32 %v1088, %v1096
    %v1101 = vsel %vm211, %v1097, 0.0
    %1102 = vadd.xlane.f32.xlu0 %v1101
    %v1103 = vpop.xlane.xlu0 %1102
    %v1104 = vsel %vm211, %v1098, 0.0
    %1105 = vadd.xlane.f32.xlu0 %v1104
    %v1106 = vpop.xlane.xlu0 %1105
    %v1107 = vsel %vm211, %v1099, 0.0
    %1108 = vadd.xlane.f32.xlu0 %v1107
    %v1109 = vpop.xlane.xlu0 %1108
    %v1110 = vsel %vm211, %v1100, 0.0
    %1111 = vadd.xlane.f32.xlu0 %v1110
    %v1112 = vpop.xlane.xlu0 %1111
    %v1113 = vrcp.pop %v1103
    %v1114 = vrcp.pop %v1106
    %v1115 = vrcp.pop %v1109
    %v1116 = vrcp.pop %v1112
    %v1117 = vmul.f32 %v1097, %v1113
    %v1118 = vmul.f32 %v1098, %v1114
    %v1119 = vmul.f32 %v1099, %v1115
    %v1120 = vmul.f32 %v1100, %v1116
    %v1121 = vld [vmem:[%s2] sm:$0x3]
    %v1123 = vsel %vm211, %v1117, 0
    %v1126 = vsel %vm211, %v1118, 0
    %v1129 = vsel %vm211, %v1119, 0
    %v1132 = vsel %vm211, %v1120, 0
    %1134 = vmatprep.subr.mxu0 0.0
    %1135 = vmatpush1.msra.mxu0 %v573
    %1136 = vmatprep.subr.mxu0 0.0
    %1137 = vmatpush1.msra.mxu0 %v577
    %1138 = vmatprep.subr.mxu0 0.0
    %1139 = vmatpush1.msra.mxu0 %v583
    %1140 = vmatprep.subr.mxu0 0.0
    %1141 = vmatpush1.msra.mxu0 %v587
    %1142 = vmatprep.subr.mxu0 0.0
    %1143 = vmatpush1.msra.mxu0 0.0
    %1144 = vmatprep.subr.mxu0 0.0
    %1145 = vmatpush1.msra.mxu0 0.0
    %1146 = vmatprep.subr.mxu0 0.0
    %1147 = vmatpush1.msra.mxu0 0.0
    %1148 = vmatprep.subr.mxu0 0.0
    %1149 = vmatpush1.msra.mxu0 0.0
    %1150 = vmatprep.subr.mxu0 0.0
    %1151 = vmatpush1.msra.mxu0 0.0
    %1152 = vmatprep.subr.mxu0 0.0
    %1153 = vmatpush1.msra.mxu0 0.0
    %1154 = vmatprep.subr.mxu0 0.0
    %1155 = vmatpush1.msra.mxu0 0.0
    %1156 = vmatprep.subr.mxu0 0.0
    %1157 = vmatpush1.msra.mxu0 0.0
    %1158 = vmatprep.subr.mxu0 0.0
    %1159 = vmatpush1.msra.mxu0 0.0
    %1160 = vmatprep.subr.mxu0 0.0
    %1161 = vmatpush1.msra.mxu0 0.0
    %1162 = vmatprep.subr.mxu0 0.0
    %1163 = vmatpush1.msra.mxu0 0.0
    %1164 = vmatprep.subr.mxu0 0.0
    %1165 = vmatpush1.msra.mxu0 0.0
    %1166 = vmatprep.subr.mxu0 0.0
    %1167 = vmatpush1.msra.mxu0 0.0
    %1168 = vmatprep.subr.mxu0 0.0
    %1169 = vmatpush1.msra.mxu0 0.0
    %1170 = vmatprep.subr.mxu0 0.0
    %1171 = vmatpush1.msra.mxu0 0.0
    %1172 = vmatprep.subr.mxu0 0.0
    %1173 = vmatpush1.msra.mxu0 0.0
    %1174 = vmatprep.subr.mxu0 0.0
    %1175 = vmatpush1.msra.mxu0 0.0
    %1176 = vmatprep.subr.mxu0 0.0
    %1177 = vmatpush1.msra.mxu0 0.0
    %1178 = vmatprep.subr.mxu0 0.0
    %1179 = vmatpush1.msra.mxu0 0.0
    %1180 = vmatprep.subr.mxu0 0.0
    %1181 = vmatpush1.msra.mxu0 0.0
    %1182 = vmatprep.subr.mxu0 0.0
    %1183 = vmatpush1.msra.mxu0 0.0
    %1184 = vmatprep.subr.mxu0 0.0
    %1185 = vmatpush1.msra.mxu0 0.0
    %1186 = vmatprep.subr.mxu0 0.0
    %1187 = vmatpush1.msra.mxu0 0.0
    %1188 = vmatprep.subr.mxu0 0.0
    %1189 = vmatpush1.msra.mxu0 0.0
    %1190 = vmatprep.subr.mxu0 0.0
    %1191 = vmatpush1.msra.mxu0 0.0
    %1192 = vmatprep.subr.mxu0 0.0
    %1193 = vmatpush1.msra.mxu0 0.0
    %1194 = vmatprep.subr.mxu0 0.0
    %1195 = vmatpush1.msra.mxu0 0.0
    %1196 = vmatprep.subr.mxu0 0.0
    %1197 = vmatpush1.msra.mxu0 0.0
    %1198 = vmatprep.mubr.f32.mxu0 0.0
    %1199 = vmatmul.mubr.f32.gmra.mrb[0].mxu0 %v1123
    %v1200 = vpop.f32.mrb[0].mxu0
    %v1201 = vadd.f32 0.0, %v1200
    %v1202 = vpop.f32.mrb[0].mxu0
    %1203 = vmatprep.mubr.f32.mxu0 0.0
    %1204 = vmatmul.mubr.f32.gmra.mrb[0].mxu0 %v1126
    %v1205 = vpop.f32.mrb[0].mxu0
    %v1206 = vadd.f32 0.0, %v1205
    %v1207 = vpop.f32.mrb[0].mxu0
    %1208 = vmatprep.mubr.f32.mxu0 0.0
    %1209 = vmatmul.mubr.f32.gmra.mrb[0].mxu0 %v1129
    %v1210 = vpop.f32.mrb[0].mxu0
    %v1211 = vadd.f32 0.0, %v1210
    %v1212 = vpop.f32.mrb[0].mxu0
    %1213 = vmatprep.mubr.f32.mxu0 0.0
    %1214 = vmatmul.mubr.f32.gmra.mrb[0].mxu0 %v1132
    %v1215 = vpop.f32.mrb[0].mxu0
    %v1216 = vadd.f32 0.0, %v1215
    %v1217 = vpop.f32.mrb[0].mxu0
    %1218 = vdwg.mxu0
    %v1219 = vlaneseq
    %v1220 = vshrl.u32 %v1219, 7
    %v1221 = vsub.s32 1, %v1220
    %v1222 = vrot.slane %v1121, %v1221
    %v1223 = vmul.f32 %v1222, %v1201
    %v1224 = vmul.f32 %v1222, %v1206
    %v1225 = vmul.f32 %v1222, %v1211
    %v1226 = vmul.f32 %v1222, %v1216
    %v1227 = vadd.f32 %v1223, %v891
    %v1228 = vadd.f32 %v1224, %v892
    %v1229 = vadd.f32 %v1225, %v893
    %v1230 = vadd.f32 %v1226, %v894
    %v1231 = vadd.f32 %v1227, %v895
    %v1232 = vadd.f32 %v1228, %v896
    %v1233 = vadd.f32 %v1229, %v897
    %v1234 = vadd.f32 %v1230, %v898
    %v1235 = vadd.f32 %v1231, %v903
    %v1236 = vadd.f32 %v1232, %v904
    %v1237 = vadd.f32 %v1233, %v905
    %v1238 = vadd.f32 %v1234, %v906
    %v1239 = vadd.f32 %v1235, %v681
    %v1240 = vadd.f32 %v1236, %v685
    %v1241 = vadd.f32 %v1237, %v691
    %v1242 = vadd.f32 %v1238, %v695
    %v1243 = vlaneseq
    %v1244 = vshrl.u32 %v1243, 7
    %v1245 = vsub.s32 0, %v1244
    %v1246 = vrot.slane %v1121, %v1245
    %v1247 = vadd.f32 %v1239, %v1246
    %v1248 = vadd.f32 %v1240, %v1246
    %v1249 = vadd.f32 %v1241, %v1246
    %v1250 = vadd.f32 %v1242, %v1246
    %v1251 = vmax.f32 %v1247, 0.0
    %v1252 = vmax.f32 %v1248, 0.0
    %v1253 = vmax.f32 %v1249, 0.0
    %v1254 = vmax.f32 %v1250, 0.0
    %s1255 = scalar_lea.vmem %s6, 1
    %v1256 = vld [vmem:[%s1255] sm:$0x1]
    %v1257 = vsub.f32 0.0, %v1256
    %v1258 = vmul.f32 %v1257, 1.442695
    %v1259 = vpow.pop %v1258
    %v1260 = vadd.f32 %v1259, 1.0
    %v1261 = vrcp.pop %v1260
    %s1262 = scalar_lea.vmem %s5, 1
    %v1263 = vld [vmem:[%s1262] sm:$0x1]
    %v1264 = vlaneseq
    %v1265 = vshrl.u32 %v1264, 7
    %v1266 = vsub.s32 0, %v1265
    %v1267 = vrot.slane %v1263, %v1266
    %vm1268 = vcmp.eq.s32.totalorder %v70, %v1267
    %vm1269 = vcmp.eq.s32.totalorder %v71, %v1267
    %vm1270 = vcmp.eq.s32.totalorder %v72, %v1267
    %vm1271 = vcmp.eq.s32.totalorder %v73, %v1267
    %v1273 = vlaneseq
    %v1274 = vshrl.u32 %v1273, 7
    %v1275 = vsub.s32 0, %v1274
    %v1276 = vrot.slane %v1261, %v1275
    %v1278 = vsel %vm1268, %v1276, 0.0
    %v1279 = vsel %vm1269, %v1276, 0.0
    %v1280 = vsel %vm1270, %v1276, 0.0
    %v1281 = vsel %vm1271, %v1276, 0.0
    %s1282 = scalar_lea.vmem %s4, 1
    %v1283 = vld [vmem:[%s1282] sm:$0x1]
    %v1284 = vlaneseq
    %v1285 = vshrl.u32 %v1284, 7
    %v1286 = vsub.s32 0, %v1285
    %v1287 = vrot.slane %v1283, %v1286
    %vm1288 = vcmp.eq.s32.totalorder %v70, %v1287
    %vm1289 = vcmp.eq.s32.totalorder %v71, %v1287
    %vm1290 = vcmp.eq.s32.totalorder %v72, %v1287
    %vm1291 = vcmp.eq.s32.totalorder %v73, %v1287
    %v1292 = vsel %vm1288, 1, 0
    %v1293 = vsel %vm1289, 1, 0
    %v1294 = vsel %vm1290, 1, 0
    %v1295 = vsel %vm1291, 1, 0
    %v1296 = vcvt.s32.f32 %v1292
    %v1297 = vcvt.s32.f32 %v1293
    %v1298 = vcvt.s32.f32 %v1294
    %v1299 = vcvt.s32.f32 %v1295
    %1300 = vmatprep.subr.mxu0 0.0
    %1301 = vmatpush1.xpose.msra.mxu0 %v1296
    %1302 = vmatprep.subr.mxu0 0.0
    %1303 = vmatpush1.xpose.msra.mxu0 %v1297
    %1304 = vmatprep.subr.mxu0 0.0
    %1305 = vmatpush1.xpose.msra.mxu0 %v1298
    %1306 = vmatprep.subr.mxu0 0.0
    %1307 = vmatpush1.xpose.msra.mxu0 %v1299
    %1308 = vmatprep.subr.mxu0 0.0
    %1309 = vmatpush1.xpose.msra.mxu0 0.0
    %1310 = vmatprep.subr.mxu0 0.0
    %1311 = vmatpush1.xpose.msra.mxu0 0.0
    %1312 = vmatprep.subr.mxu0 0.0
    %1313 = vmatpush1.xpose.msra.mxu0 0.0
    %1314 = vmatprep.subr.mxu0 0.0
    %1315 = vmatpush1.xpose.msra.mxu0 0.0
    %1316 = vmatprep.subr.mxu0 0.0
    %1317 = vmatpush1.xpose.msra.mxu0 0.0
    %1318 = vmatprep.subr.mxu0 0.0
    %1319 = vmatpush1.xpose.msra.mxu0 0.0
    %1320 = vmatprep.subr.mxu0 0.0
    %1321 = vmatpush1.xpose.msra.mxu0 0.0
    %1322 = vmatprep.subr.mxu0 0.0
    %1323 = vmatpush1.xpose.msra.mxu0 0.0
    %1324 = vmatprep.subr.mxu0 0.0
    %1325 = vmatpush1.xpose.msra.mxu0 0.0
    %1326 = vmatprep.subr.mxu0 0.0
    %1327 = vmatpush1.xpose.msra.mxu0 0.0
    %1328 = vmatprep.subr.mxu0 0.0
    %1329 = vmatpush1.xpose.msra.mxu0 0.0
    %1330 = vmatprep.subr.mxu0 0.0
    %1331 = vmatpush1.xpose.msra.mxu0 0.0
    %1332 = vmatprep.subr.mxu0 0.0
    %1333 = vmatpush1.xpose.msra.mxu0 0.0
    %1334 = vmatprep.subr.mxu0 0.0
    %1335 = vmatpush1.xpose.msra.mxu0 0.0
    %1336 = vmatprep.subr.mxu0 0.0
    %1337 = vmatpush1.xpose.msra.mxu0 0.0
    %1338 = vmatprep.subr.mxu0 0.0
    %1339 = vmatpush1.xpose.msra.mxu0 0.0
    %1340 = vmatprep.subr.mxu0 0.0
    %1341 = vmatpush1.xpose.msra.mxu0 0.0
    %1342 = vmatprep.subr.mxu0 0.0
    %1343 = vmatpush1.xpose.msra.mxu0 0.0
    %1344 = vmatprep.subr.mxu0 0.0
    %1345 = vmatpush1.xpose.msra.mxu0 0.0
    %1346 = vmatprep.subr.mxu0 0.0
    %1347 = vmatpush1.xpose.msra.mxu0 0.0
    %1348 = vmatprep.subr.mxu0 0.0
    %1349 = vmatpush1.xpose.msra.mxu0 0.0
    %1350 = vmatprep.subr.mxu0 0.0
    %1351 = vmatpush1.xpose.msra.mxu0 0.0
    %1352 = vmatprep.subr.mxu0 0.0
    %1353 = vmatpush1.xpose.msra.mxu0 0.0
    %1354 = vmatprep.subr.mxu0 0.0
    %1355 = vmatpush1.xpose.msra.mxu0 0.0
    %1356 = vmatprep.subr.mxu0 0.0
    %1357 = vmatpush1.xpose.msra.mxu0 0.0
    %1358 = vmatprep.subr.mxu0 0.0
    %1359 = vmatpush1.xpose.msra.mxu0 0.0
    %1360 = vmatprep.subr.mxu0 0.0
    %1361 = vmatpush1.xpose.msra.mxu0 0.0
    %1362 = vmatprep.subr.mxu0 0.0
    %1363 = vmatpush1.xpose.msra.mxu0 0.0
    %1364 = vmatprep.mubr.f32.mxu0 0.0
    %1365 = vmatmul.mubr.f32.gmra.mrb[0].mxu0 %v1278
    %v1366 = vpop.f32.mrb[0].mxu0
    %v1367 = vadd.f32 0.0, %v1366
    %v1368 = vpop.f32.mrb[0].mxu0
    %1369 = vmatprep.mubr.f32.mxu0 0.0
    %1370 = vmatmul.mubr.f32.gmra.mrb[0].mxu0 %v1279
    %v1371 = vpop.f32.mrb[0].mxu0
    %v1372 = vadd.f32 0.0, %v1371
    %v1373 = vpop.f32.mrb[0].mxu0
    %1374 = vmatprep.mubr.f32.mxu0 0.0
    %1375 = vmatmul.mubr.f32.gmra.mrb[0].mxu0 %v1280
    %v1376 = vpop.f32.mrb[0].mxu0
    %v1377 = vadd.f32 0.0, %v1376
    %v1378 = vpop.f32.mrb[0].mxu0
    %1379 = vmatprep.mubr.f32.mxu0 0.0
    %1380 = vmatmul.mubr.f32.gmra.mrb[0].mxu0 %v1281
    %v1381 = vpop.f32.mrb[0].mxu0
    %v1382 = vadd.f32 0.0, %v1381
    %v1383 = vpop.f32.mrb[0].mxu0
    %1384 = vdwg.mxu0
    %v1385 = vsel %vm211, %v1367, 0.0
    %1386 = vadd.xlane.f32.xlu0 %v1385
    %v1387 = vpop.xlane.xlu0 %1386
    %v1388 = vsel %vm211, %v1372, 0.0
    %1389 = vadd.xlane.f32.xlu0 %v1388
    %v1390 = vpop.xlane.xlu0 %1389
    %v1391 = vsel %vm211, %v1377, 0.0
    %1392 = vadd.xlane.f32.xlu0 %v1391
    %v1393 = vpop.xlane.xlu0 %1392
    %v1394 = vsel %vm211, %v1382, 0.0
    %1395 = vadd.xlane.f32.xlu0 %v1394
    %v1396 = vpop.xlane.xlu0 %1395
    %v1397 = vadd.f32 %v1387, 1.0
    %v1398 = vadd.f32 %v1390, 1.0
    %v1399 = vadd.f32 %v1393, 1.0
    %v1400 = vadd.f32 %v1396, 1.0
    %v1401 = vrsqrt.pop %v1397
    %v1402 = vrsqrt.pop %v1398
    %v1403 = vrsqrt.pop %v1399
    %v1404 = vrsqrt.pop %v1400
    %vm1405 = vcmp.gt.f32.partialorder %v1387, 0.0
    %vm1406 = vcmp.gt.f32.partialorder %v1390, 0.0
    %vm1407 = vcmp.gt.f32.partialorder %v1393, 0.0
    %vm1408 = vcmp.gt.f32.partialorder %v1396, 0.0
    %v1409 = vmax.f32 %v1387, 1e-06
    %v1410 = vmax.f32 %v1390, 1e-06
    %v1411 = vmax.f32 %v1393, 1e-06
    %v1412 = vmax.f32 %v1396, 1e-06
    %v1413 = vrcp.pop %v1409
    %v1414 = vrcp.pop %v1410
    %v1415 = vrcp.pop %v1411
    %v1416 = vrcp.pop %v1412
    %v1417 = vsel %vm1405, %v1413, 0.0
    %v1418 = vsel %vm1406, %v1414, 0.0
    %v1419 = vsel %vm1407, %v1415, 0.0
    %v1420 = vsel %vm1408, %v1416, 0.0
    %v1421 = vpack.c.bf16 %v1252, %v1251
    %v1422 = vpack.c.bf16 %v1254, %v1253
    %s1423 = scalar_lea.vmem [#allocation5], 384
    %v1424 = vld [vmem:[%s1423] sm:$0xff]
    %v1425 = vld [vmem:[%s1423 + $0x8] sm:$0xff]
    %v1426 = vld [vmem:[%s1423 + $0x10] sm:$0xff]
    %v1427 = vld [vmem:[%s1423 + $0x18] sm:$0xff]
    %v1428 = vld [vmem:[%s1423 + $0x20] sm:$0xff]
    %v1429 = vld [vmem:[%s1423 + $0x28] sm:$0xff]
    %v1430 = vld [vmem:[%s1423 + $0x30] sm:$0xff]
    %v1431 = vld [vmem:[%s1423 + $0x38] sm:$0xff]
    %v1432 = vld [vmem:[%s1423 + $0x40] sm:$0xff]
    %v1433 = vld [vmem:[%s1423 + $0x48] sm:$0xff]
    %v1434 = vld [vmem:[%s1423 + $0x50] sm:$0xff]
    %v1435 = vld [vmem:[%s1423 + $0x58] sm:$0xff]
    %v1436 = vld [vmem:[%s1423 + $0x60] sm:$0xff]
    %v1437 = vld [vmem:[%s1423 + $0x68] sm:$0xff]
    %v1438 = vld [vmem:[%s1423 + $0x70] sm:$0xff]
    %v1439 = vld [vmem:[%s1423 + $0x78] sm:$0xff]
    %v1440 = vld [vmem:[%s1423 + $0x80] sm:$0xff]
    %v1441 = vld [vmem:[%s1423 + $0x88] sm:$0xff]
    %v1442 = vld [vmem:[%s1423 + $0x90] sm:$0xff]
    %v1443 = vld [vmem:[%s1423 + $0x98] sm:$0xff]
    %v1444 = vld [vmem:[%s1423 + $0xa0] sm:$0xff]
    %v1445 = vld [vmem:[%s1423 + $0xa8] sm:$0xff]
    %v1446 = vld [vmem:[%s1423 + $0xb0] sm:$0xff]
    %v1447 = vld [vmem:[%s1423 + $0xb8] sm:$0xff]
    %v1448 = vld [vmem:[%s1423 + $0xc0] sm:$0xff]
    %v1449 = vld [vmem:[%s1423 + $0xc8] sm:$0xff]
    %v1450 = vld [vmem:[%s1423 + $0xd0] sm:$0xff]
    %v1451 = vld [vmem:[%s1423 + $0xd8] sm:$0xff]
    %v1452 = vld [vmem:[%s1423 + $0xe0] sm:$0xff]
    %v1453 = vld [vmem:[%s1423 + $0xe8] sm:$0xff]
    %v1454 = vld [vmem:[%s1423 + $0xf0] sm:$0xff]
    %v1455 = vld [vmem:[%s1423 + $0xf8] sm:$0xff]
    %v1456 = vld [vmem:[%s1423 + $0x100] sm:$0xff]
    %v1457 = vld [vmem:[%s1423 + $0x108] sm:$0xff]
    %v1458 = vld [vmem:[%s1423 + $0x110] sm:$0xff]
    %v1459 = vld [vmem:[%s1423 + $0x118] sm:$0xff]
    %v1460 = vld [vmem:[%s1423 + $0x120] sm:$0xff]
    %v1461 = vld [vmem:[%s1423 + $0x128] sm:$0xff]
    %v1462 = vld [vmem:[%s1423 + $0x130] sm:$0xff]
    %v1463 = vld [vmem:[%s1423 + $0x138] sm:$0xff]
    %v1464 = vld [vmem:[%s1423 + $0x140] sm:$0xff]
    %v1465 = vld [vmem:[%s1423 + $0x148] sm:$0xff]
    %v1466 = vld [vmem:[%s1423 + $0x150] sm:$0xff]
    %v1467 = vld [vmem:[%s1423 + $0x158] sm:$0xff]
    %v1468 = vld [vmem:[%s1423 + $0x160] sm:$0xff]
    %v1469 = vld [vmem:[%s1423 + $0x168] sm:$0xff]
    %v1470 = vld [vmem:[%s1423 + $0x170] sm:$0xff]
    %v1471 = vld [vmem:[%s1423 + $0x178] sm:$0xff]
    %v1520 = vunpack.c.l.b16 %v1424
    %v1521 = vunpack.c.h.b16 %v1424
    %v1522 = vunpack.c.l.b16 %v1425
    %v1523 = vunpack.c.h.b16 %v1425
    %v1524 = vunpack.c.l.b16 %v1426
    %v1525 = vunpack.c.h.b16 %v1426
    %v1526 = vunpack.c.l.b16 %v1427
    %v1527 = vunpack.c.h.b16 %v1427
    %v1528 = vunpack.c.l.b16 %v1428
    %v1529 = vunpack.c.h.b16 %v1428
    %v1530 = vunpack.c.l.b16 %v1429
    %v1531 = vunpack.c.h.b16 %v1429
    %v1532 = vunpack.c.l.b16 %v1430
    %v1533 = vunpack.c.h.b16 %v1430
    %v1534 = vunpack.c.l.b16 %v1431
    %v1535 = vunpack.c.h.b16 %v1431
    %v1536 = vunpack.c.l.b16 %v1432
    %v1537 = vunpack.c.h.b16 %v1432
    %v1538 = vunpack.c.l.b16 %v1433
    %v1539 = vunpack.c.h.b16 %v1433
    %v1540 = vunpack.c.l.b16 %v1434
    %v1541 = vunpack.c.h.b16 %v1434
    %v1542 = vunpack.c.l.b16 %v1435
    %v1543 = vunpack.c.h.b16 %v1435
    %v1544 = vunpack.c.l.b16 %v1436
    %v1545 = vunpack.c.h.b16 %v1436
    %v1546 = vunpack.c.l.b16 %v1437
    %v1547 = vunpack.c.h.b16 %v1437
    %v1548 = vunpack.c.l.b16 %v1438
    %v1549 = vunpack.c.h.b16 %v1438
    %v1550 = vunpack.c.l.b16 %v1439
    %v1551 = vunpack.c.h.b16 %v1439
    %v1552 = vunpack.c.l.b16 %v1440
    %v1553 = vunpack.c.h.b16 %v1440
    %v1554 = vunpack.c.l.b16 %v1441
    %v1555 = vunpack.c.h.b16 %v1441
    %v1556 = vunpack.c.l.b16 %v1442
    %v1557 = vunpack.c.h.b16 %v1442
    %v1558 = vunpack.c.l.b16 %v1443
    %v1559 = vunpack.c.h.b16 %v1443
    %v1560 = vunpack.c.l.b16 %v1444
    %v1561 = vunpack.c.h.b16 %v1444
    %v1562 = vunpack.c.l.b16 %v1445
    %v1563 = vunpack.c.h.b16 %v1445
    %v1564 = vunpack.c.l.b16 %v1446
    %v1565 = vunpack.c.h.b16 %v1446
    %v1566 = vunpack.c.l.b16 %v1447
    %v1567 = vunpack.c.h.b16 %v1447
    %v1568 = vunpack.c.l.b16 %v1448
    %v1569 = vunpack.c.h.b16 %v1448
    %v1570 = vunpack.c.l.b16 %v1449
    %v1571 = vunpack.c.h.b16 %v1449
    %v1572 = vunpack.c.l.b16 %v1450
    %v1573 = vunpack.c.h.b16 %v1450
    %v1574 = vunpack.c.l.b16 %v1451
    %v1575 = vunpack.c.h.b16 %v1451
    %v1576 = vunpack.c.l.b16 %v1452
    %v1577 = vunpack.c.h.b16 %v1452
    %v1578 = vunpack.c.l.b16 %v1453
    %v1579 = vunpack.c.h.b16 %v1453
    %v1580 = vunpack.c.l.b16 %v1454
    %v1581 = vunpack.c.h.b16 %v1454
    %v1582 = vunpack.c.l.b16 %v1455
    %v1583 = vunpack.c.h.b16 %v1455
    %v1584 = vunpack.c.l.b16 %v1456
    %v1585 = vunpack.c.h.b16 %v1456
    %v1586 = vunpack.c.l.b16 %v1457
    %v1587 = vunpack.c.h.b16 %v1457
    %v1588 = vunpack.c.l.b16 %v1458
    %v1589 = vunpack.c.h.b16 %v1458
    %v1590 = vunpack.c.l.b16 %v1459
    %v1591 = vunpack.c.h.b16 %v1459
    %v1592 = vunpack.c.l.b16 %v1460
    %v1593 = vunpack.c.h.b16 %v1460
    %v1594 = vunpack.c.l.b16 %v1461
    %v1595 = vunpack.c.h.b16 %v1461
    %v1596 = vunpack.c.l.b16 %v1462
    %v1597 = vunpack.c.h.b16 %v1462
    %v1598 = vunpack.c.l.b16 %v1463
    %v1599 = vunpack.c.h.b16 %v1463
    %v1600 = vunpack.c.l.b16 %v1464
    %v1601 = vunpack.c.h.b16 %v1464
    %v1602 = vunpack.c.l.b16 %v1465
    %v1603 = vunpack.c.h.b16 %v1465
    %v1604 = vunpack.c.l.b16 %v1466
    %v1605 = vunpack.c.h.b16 %v1466
    %v1606 = vunpack.c.l.b16 %v1467
    %v1607 = vunpack.c.h.b16 %v1467
    %v1608 = vunpack.c.l.b16 %v1468
    %v1609 = vunpack.c.h.b16 %v1468
    %v1610 = vunpack.c.l.b16 %v1469
    %v1611 = vunpack.c.h.b16 %v1469
    %v1612 = vunpack.c.l.b16 %v1470
    %v1613 = vunpack.c.h.b16 %v1470
    %v1614 = vunpack.c.l.b16 %v1471
    %v1615 = vunpack.c.h.b16 %v1471
    %v1616 = vpack.c.b16 %v1526, %v1520
    %v1617 = vpack.c.b16 %v1527, %v1521
    %v1618 = vpack.c.b16 %v1528, %v1522
    %v1619 = vpack.c.b16 %v1529, %v1523
    %v1620 = vpack.c.b16 %v1530, %v1524
    %v1621 = vpack.c.b16 %v1531, %v1525
    %v1622 = vpack.c.b16 %v1538, %v1532
    %v1623 = vpack.c.b16 %v1539, %v1533
    %v1624 = vpack.c.b16 %v1540, %v1534
    %v1625 = vpack.c.b16 %v1541, %v1535
    %v1626 = vpack.c.b16 %v1542, %v1536
    %v1627 = vpack.c.b16 %v1543, %v1537
    %v1628 = vpack.c.b16 %v1550, %v1544
    %v1629 = vpack.c.b16 %v1551, %v1545
    %v1630 = vpack.c.b16 %v1552, %v1546
    %v1631 = vpack.c.b16 %v1553, %v1547
    %v1632 = vpack.c.b16 %v1554, %v1548
    %v1633 = vpack.c.b16 %v1555, %v1549
    %v1634 = vpack.c.b16 %v1562, %v1556
    %v1635 = vpack.c.b16 %v1563, %v1557
    %v1636 = vpack.c.b16 %v1564, %v1558
    %v1637 = vpack.c.b16 %v1565, %v1559
    %v1638 = vpack.c.b16 %v1566, %v1560
    %v1639 = vpack.c.b16 %v1567, %v1561
    %v1640 = vpack.c.b16 %v1574, %v1568
    %v1641 = vpack.c.b16 %v1575, %v1569
    %v1642 = vpack.c.b16 %v1576, %v1570
    %v1643 = vpack.c.b16 %v1577, %v1571
    %v1644 = vpack.c.b16 %v1578, %v1572
    %v1645 = vpack.c.b16 %v1579, %v1573
    %v1646 = vpack.c.b16 %v1586, %v1580
    %v1647 = vpack.c.b16 %v1587, %v1581
    %v1648 = vpack.c.b16 %v1588, %v1582
    %v1649 = vpack.c.b16 %v1589, %v1583
    %v1650 = vpack.c.b16 %v1590, %v1584
    %v1651 = vpack.c.b16 %v1591, %v1585
    %v1652 = vpack.c.b16 %v1598, %v1592
    %v1653 = vpack.c.b16 %v1599, %v1593
    %v1654 = vpack.c.b16 %v1600, %v1594
    %v1655 = vpack.c.b16 %v1601, %v1595
    %v1656 = vpack.c.b16 %v1602, %v1596
    %v1657 = vpack.c.b16 %v1603, %v1597
    %v1658 = vpack.c.b16 %v1610, %v1604
    %v1659 = vpack.c.b16 %v1611, %v1605
    %v1660 = vpack.c.b16 %v1612, %v1606
    %v1661 = vpack.c.b16 %v1613, %v1607
    %v1662 = vpack.c.b16 %v1614, %v1608
    %v1663 = vpack.c.b16 %v1615, %v1609
    %1712 = vmatprep.subr.bf16.mxu0 %v1617
    %1713 = vmatpush1.bf16.msra.mxu0 %v1616
    %1714 = vmatprep.subr.bf16.mxu0 %v1623
    %1715 = vmatpush1.bf16.msra.mxu0 %v1622
    %1716 = vmatprep.subr.bf16.mxu0 %v1629
    %1717 = vmatpush1.bf16.msra.mxu0 %v1628
    %1718 = vmatprep.subr.bf16.mxu0 %v1635
    %1719 = vmatpush1.bf16.msra.mxu0 %v1634
    %1720 = vmatprep.subr.bf16.mxu0 %v1641
    %1721 = vmatpush1.bf16.msra.mxu0 %v1640
    %1722 = vmatprep.subr.bf16.mxu0 %v1647
    %1723 = vmatpush1.bf16.msra.mxu0 %v1646
    %1724 = vmatprep.subr.bf16.mxu0 %v1653
    %1725 = vmatpush1.bf16.msra.mxu0 %v1652
    %1726 = vmatprep.subr.bf16.mxu0 %v1659
    %1727 = vmatpush1.bf16.msra.mxu0 %v1658
    %1728 = vmatprep.subr.bf16.mxu0 0
    %1729 = vmatpush1.bf16.msra.mxu0 0
    %1730 = vmatprep.subr.bf16.mxu0 0
    %1731 = vmatpush1.bf16.msra.mxu0 0
    %1732 = vmatprep.subr.bf16.mxu0 0
    %1733 = vmatpush1.bf16.msra.mxu0 0
    %1734 = vmatprep.subr.bf16.mxu0 0
    %1735 = vmatpush1.bf16.msra.mxu0 0
    %1736 = vmatprep.subr.bf16.mxu0 0
    %1737 = vmatpush1.bf16.msra.mxu0 0
    %1738 = vmatprep.subr.bf16.mxu0 0
    %1739 = vmatpush1.bf16.msra.mxu0 0
    %1740 = vmatprep.subr.bf16.mxu0 0
    %1741 = vmatpush1.bf16.msra.mxu0 0
    %1742 = vmatprep.subr.bf16.mxu0 0
    %1743 = vmatpush1.bf16.msra.mxu0 0
    %1744 = vmatprep.mubr.bf16.mxu0 0
    %1745 = vmatmul.mubr.bf16.gmra.mrb[0].mxu0 %v1421
    %v1746 = vpop.f32.mrb[0].mxu0
    %v1747 = vadd.f32 0.0, %v1746
    %v1748 = vpop.f32.mrb[0].mxu0
    %v1749 = vadd.f32 0.0, %v1748
    %v1750 = vpop.f32.mrb[0].mxu0
    %v1751 = vadd.f32 0.0, %v1750
    %v1752 = vpop.f32.mrb[0].mxu0
    %v1753 = vadd.f32 0.0, %v1752
    %1754 = vmatprep.mubr.bf16.mxu0 0
    %1755 = vmatmul.mubr.bf16.gmra.mrb[0].mxu0 %v1422
    %v1756 = vpop.f32.mrb[0].mxu0
    %v1757 = vadd.f32 0.0, %v1756
    %v1758 = vpop.f32.mrb[0].mxu0
    %v1759 = vadd.f32 0.0, %v1758
    %v1760 = vpop.f32.mrb[0].mxu0
    %v1761 = vadd.f32 0.0, %v1760
    %v1762 = vpop.f32.mrb[0].mxu0
    %v1763 = vadd.f32 0.0, %v1762
    %1764 = vdwg.mxu0
    %1765 = vmatprep.subr.bf16.mxu0 %v1619
    %1766 = vmatpush1.bf16.msra.mxu0 %v1618
    %1767 = vmatprep.subr.bf16.mxu0 %v1625
    %1768 = vmatpush1.bf16.msra.mxu0 %v1624
    %1769 = vmatprep.subr.bf16.mxu0 %v1631
    %1770 = vmatpush1.bf16.msra.mxu0 %v1630
    %1771 = vmatprep.subr.bf16.mxu0 %v1637
    %1772 = vmatpush1.bf16.msra.mxu0 %v1636
    %1773 = vmatprep.subr.bf16.mxu0 %v1643
    %1774 = vmatpush1.bf16.msra.mxu0 %v1642
    %1775 = vmatprep.subr.bf16.mxu0 %v1649
    %1776 = vmatpush1.bf16.msra.mxu0 %v1648
    %1777 = vmatprep.subr.bf16.mxu0 %v1655
    %1778 = vmatpush1.bf16.msra.mxu0 %v1654
    %1779 = vmatprep.subr.bf16.mxu0 %v1661
    %1780 = vmatpush1.bf16.msra.mxu0 %v1660
    %1781 = vmatprep.subr.bf16.mxu0 0
    %1782 = vmatpush1.bf16.msra.mxu0 0
    %1783 = vmatprep.subr.bf16.mxu0 0
    %1784 = vmatpush1.bf16.msra.mxu0 0
    %1785 = vmatprep.subr.bf16.mxu0 0
    %1786 = vmatpush1.bf16.msra.mxu0 0
    %1787 = vmatprep.subr.bf16.mxu0 0
    %1788 = vmatpush1.bf16.msra.mxu0 0
    %1789 = vmatprep.subr.bf16.mxu0 0
    %1790 = vmatpush1.bf16.msra.mxu0 0
    %1791 = vmatprep.subr.bf16.mxu0 0
    %1792 = vmatpush1.bf16.msra.mxu0 0
    %1793 = vmatprep.subr.bf16.mxu0 0
    %1794 = vmatpush1.bf16.msra.mxu0 0
    %1795 = vmatprep.subr.bf16.mxu0 0
    %1796 = vmatpush1.bf16.msra.mxu0 0
    %1797 = vmatprep.mubr.bf16.mxu0 0
    %1798 = vmatmul.mubr.bf16.gmra.mrb[0].mxu0 %v1421
    %v1799 = vpop.f32.mrb[0].mxu0
    %v1800 = vadd.f32 0.0, %v1799
    %v1801 = vpop.f32.mrb[0].mxu0
    %v1802 = vadd.f32 0.0, %v1801
    %v1803 = vpop.f32.mrb[0].mxu0
    %v1804 = vadd.f32 0.0, %v1803
    %v1805 = vpop.f32.mrb[0].mxu0
    %v1806 = vadd.f32 0.0, %v1805
    %1807 = vmatprep.mubr.bf16.mxu0 0
    %1808 = vmatmul.mubr.bf16.gmra.mrb[0].mxu0 %v1422
    %v1809 = vpop.f32.mrb[0].mxu0
    %v1810 = vadd.f32 0.0, %v1809
    %v1811 = vpop.f32.mrb[0].mxu0
    %v1812 = vadd.f32 0.0, %v1811
    %v1813 = vpop.f32.mrb[0].mxu0
    %v1814 = vadd.f32 0.0, %v1813
    %v1815 = vpop.f32.mrb[0].mxu0
    %v1816 = vadd.f32 0.0, %v1815
    %1817 = vdwg.mxu0
    %1818 = vmatprep.subr.bf16.mxu0 %v1621
    %1819 = vmatpush1.bf16.msra.mxu0 %v1620
    %1820 = vmatprep.subr.bf16.mxu0 %v1627
    %1821 = vmatpush1.bf16.msra.mxu0 %v1626
    %1822 = vmatprep.subr.bf16.mxu0 %v1633
    %1823 = vmatpush1.bf16.msra.mxu0 %v1632
    %1824 = vmatprep.subr.bf16.mxu0 %v1639
    %1825 = vmatpush1.bf16.msra.mxu0 %v1638
    %1826 = vmatprep.subr.bf16.mxu0 %v1645
    %1827 = vmatpush1.bf16.msra.mxu0 %v1644
    %1828 = vmatprep.subr.bf16.mxu0 %v1651
    %1829 = vmatpush1.bf16.msra.mxu0 %v1650
    %1830 = vmatprep.subr.bf16.mxu0 %v1657
    %1831 = vmatpush1.bf16.msra.mxu0 %v1656
    %1832 = vmatprep.subr.bf16.mxu0 %v1663
    %1833 = vmatpush1.bf16.msra.mxu0 %v1662
    %1834 = vmatprep.subr.bf16.mxu0 0
    %1835 = vmatpush1.bf16.msra.mxu0 0
    %1836 = vmatprep.subr.bf16.mxu0 0
    %1837 = vmatpush1.bf16.msra.mxu0 0
    %1838 = vmatprep.subr.bf16.mxu0 0
    %1839 = vmatpush1.bf16.msra.mxu0 0
    %1840 = vmatprep.subr.bf16.mxu0 0
    %1841 = vmatpush1.bf16.msra.mxu0 0
    %1842 = vmatprep.subr.bf16.mxu0 0
    %1843 = vmatpush1.bf16.msra.mxu0 0
    %1844 = vmatprep.subr.bf16.mxu0 0
    %1845 = vmatpush1.bf16.msra.mxu0 0
    %1846 = vmatprep.subr.bf16.mxu0 0
    %1847 = vmatpush1.bf16.msra.mxu0 0
    %1848 = vmatprep.subr.bf16.mxu0 0
    %1849 = vmatpush1.bf16.msra.mxu0 0
    %1850 = vmatprep.mubr.bf16.mxu0 0
    %1851 = vmatmul.mubr.bf16.gmra.mrb[0].mxu0 %v1421
    %v1852 = vpop.f32.mrb[0].mxu0
    %v1853 = vadd.f32 0.0, %v1852
    %v1854 = vpop.f32.mrb[0].mxu0
    %v1855 = vadd.f32 0.0, %v1854
    %v1856 = vpop.f32.mrb[0].mxu0
    %v1857 = vadd.f32 0.0, %v1856
    %v1858 = vpop.f32.mrb[0].mxu0
    %v1859 = vadd.f32 0.0, %v1858
    %1860 = vmatprep.mubr.bf16.mxu0 0
    %1861 = vmatmul.mubr.bf16.gmra.mrb[0].mxu0 %v1422
    %v1862 = vpop.f32.mrb[0].mxu0
    %v1863 = vadd.f32 0.0, %v1862
    %v1864 = vpop.f32.mrb[0].mxu0
    %v1865 = vadd.f32 0.0, %v1864
    %v1866 = vpop.f32.mrb[0].mxu0
    %v1867 = vadd.f32 0.0, %v1866
    %v1868 = vpop.f32.mrb[0].mxu0
    %v1869 = vadd.f32 0.0, %v1868
    %1870 = vdwg.mxu0
    %v1871 = vmul.f32 %v1401, %v1749
    %v1872 = vmul.f32 %v1402, %v1753
    %v1873 = vmul.f32 %v1403, %v1759
    %v1874 = vmul.f32 %v1404, %v1763
    %v1876 = vsel %vm211, %v1367, 0
    %v1879 = vsel %vm211, %v1372, 0
    %v1882 = vsel %vm211, %v1377, 0
    %v1885 = vsel %vm211, %v1382, 0
    %1887 = vmatprep.subr.mxu0 %v1800
    %1888 = vmatpush1.msra.mxu0 %v1871
    %1889 = vmatprep.subr.mxu0 %v1804
    %1890 = vmatpush1.msra.mxu0 %v1872
    %1891 = vmatprep.subr.mxu0 %v1810
    %1892 = vmatpush1.msra.mxu0 %v1873
    %1893 = vmatprep.subr.mxu0 %v1814
    %1894 = vmatpush1.msra.mxu0 %v1874
    %1895 = vmatprep.subr.mxu0 0.0
    %1896 = vmatpush1.msra.mxu0 0.0
    %1897 = vmatprep.subr.mxu0 0.0
    %1898 = vmatpush1.msra.mxu0 0.0
    %1899 = vmatprep.subr.mxu0 0.0
    %1900 = vmatpush1.msra.mxu0 0.0
    %1901 = vmatprep.subr.mxu0 0.0
    %1902 = vmatpush1.msra.mxu0 0.0
    %1903 = vmatprep.subr.mxu0 0.0
    %1904 = vmatpush1.msra.mxu0 0.0
    %1905 = vmatprep.subr.mxu0 0.0
    %1906 = vmatpush1.msra.mxu0 0.0
    %1907 = vmatprep.subr.mxu0 0.0
    %1908 = vmatpush1.msra.mxu0 0.0
    %1909 = vmatprep.subr.mxu0 0.0
    %1910 = vmatpush1.msra.mxu0 0.0
    %1911 = vmatprep.subr.mxu0 0.0
    %1912 = vmatpush1.msra.mxu0 0.0
    %1913 = vmatprep.subr.mxu0 0.0
    %1914 = vmatpush1.msra.mxu0 0.0
    %1915 = vmatprep.subr.mxu0 0.0
    %1916 = vmatpush1.msra.mxu0 0.0
    %1917 = vmatprep.subr.mxu0 0.0
    %1918 = vmatpush1.msra.mxu0 0.0
    %1919 = vmatprep.subr.mxu0 0.0
    %1920 = vmatpush1.msra.mxu0 0.0
    %1921 = vmatprep.subr.mxu0 0.0
    %1922 = vmatpush1.msra.mxu0 0.0
    %1923 = vmatprep.subr.mxu0 0.0
    %1924 = vmatpush1.msra.mxu0 0.0
    %1925 = vmatprep.subr.mxu0 0.0
    %1926 = vmatpush1.msra.mxu0 0.0
    %1927 = vmatprep.subr.mxu0 0.0
    %1928 = vmatpush1.msra.mxu0 0.0
    %1929 = vmatprep.subr.mxu0 0.0
    %1930 = vmatpush1.msra.mxu0 0.0
    %1931 = vmatprep.subr.mxu0 0.0
    %1932 = vmatpush1.msra.mxu0 0.0
    %1933 = vmatprep.subr.mxu0 0.0
    %1934 = vmatpush1.msra.mxu0 0.0
    %1935 = vmatprep.subr.mxu0 0.0
    %1936 = vmatpush1.msra.mxu0 0.0
    %1937 = vmatprep.subr.mxu0 0.0
    %1938 = vmatpush1.msra.mxu0 0.0
    %1939 = vmatprep.subr.mxu0 0.0
    %1940 = vmatpush1.msra.mxu0 0.0
    %1941 = vmatprep.subr.mxu0 0.0
    %1942 = vmatpush1.msra.mxu0 0.0
    %1943 = vmatprep.subr.mxu0 0.0
    %1944 = vmatpush1.msra.mxu0 0.0
    %1945 = vmatprep.subr.mxu0 0.0
    %1946 = vmatpush1.msra.mxu0 0.0
    %1947 = vmatprep.subr.mxu0 0.0
    %1948 = vmatpush1.msra.mxu0 0.0
    %1949 = vmatprep.subr.mxu0 0.0
    %1950 = vmatpush1.msra.mxu0 0.0
    %1951 = vmatprep.mubr.f32.mxu0 0.0
    %1952 = vmatmul.mubr.f32.gmra.mrb[0].mxu0 %v1876
    %v1953 = vpop.f32.mrb[0].mxu0
    %v1954 = vadd.f32 0.0, %v1953
    %v1955 = vpop.f32.mrb[0].mxu0
    %v1956 = vadd.f32 0.0, %v1955
    %1957 = vmatprep.mubr.f32.mxu0 0.0
    %1958 = vmatmul.mubr.f32.gmra.mrb[0].mxu0 %v1879
    %v1959 = vpop.f32.mrb[0].mxu0
    %v1960 = vadd.f32 0.0, %v1959
    %v1961 = vpop.f32.mrb[0].mxu0
    %v1962 = vadd.f32 0.0, %v1961
    %1963 = vmatprep.mubr.f32.mxu0 0.0
    %1964 = vmatmul.mubr.f32.gmra.mrb[0].mxu0 %v1882
    %v1965 = vpop.f32.mrb[0].mxu0
    %v1966 = vadd.f32 0.0, %v1965
    %v1967 = vpop.f32.mrb[0].mxu0
    %v1968 = vadd.f32 0.0, %v1967
    %1969 = vmatprep.mubr.f32.mxu0 0.0
    %1970 = vmatmul.mubr.f32.gmra.mrb[0].mxu0 %v1885
    %v1971 = vpop.f32.mrb[0].mxu0
    %v1972 = vadd.f32 0.0, %v1971
    %v1973 = vpop.f32.mrb[0].mxu0
    %v1974 = vadd.f32 0.0, %v1973
    %1975 = vdwg.mxu0
    %1976 = vmatprep.subr.mxu0 0.0
    %1977 = vmatpush1.msra.mxu0 %v1802
    %1978 = vmatprep.subr.mxu0 0.0
    %1979 = vmatpush1.msra.mxu0 %v1806
    %1980 = vmatprep.subr.mxu0 0.0
    %1981 = vmatpush1.msra.mxu0 %v1812
    %1982 = vmatprep.subr.mxu0 0.0
    %1983 = vmatpush1.msra.mxu0 %v1816
    %1984 = vmatprep.subr.mxu0 0.0
    %1985 = vmatpush1.msra.mxu0 0.0
    %1986 = vmatprep.subr.mxu0 0.0
    %1987 = vmatpush1.msra.mxu0 0.0
    %1988 = vmatprep.subr.mxu0 0.0
    %1989 = vmatpush1.msra.mxu0 0.0
    %1990 = vmatprep.subr.mxu0 0.0
    %1991 = vmatpush1.msra.mxu0 0.0
    %1992 = vmatprep.subr.mxu0 0.0
    %1993 = vmatpush1.msra.mxu0 0.0
    %1994 = vmatprep.subr.mxu0 0.0
    %1995 = vmatpush1.msra.mxu0 0.0
    %1996 = vmatprep.subr.mxu0 0.0
    %1997 = vmatpush1.msra.mxu0 0.0
    %1998 = vmatprep.subr.mxu0 0.0
    %1999 = vmatpush1.msra.mxu0 0.0
    %2000 = vmatprep.subr.mxu0 0.0
    %2001 = vmatpush1.msra.mxu0 0.0
    %2002 = vmatprep.subr.mxu0 0.0
    %2003 = vmatpush1.msra.mxu0 0.0
    %2004 = vmatprep.subr.mxu0 0.0
    %2005 = vmatpush1.msra.mxu0 0.0
    %2006 = vmatprep.subr.mxu0 0.0
    %2007 = vmatpush1.msra.mxu0 0.0
    %2008 = vmatprep.subr.mxu0 0.0
    %2009 = vmatpush1.msra.mxu0 0.0
    %2010 = vmatprep.subr.mxu0 0.0
    %2011 = vmatpush1.msra.mxu0 0.0
    %2012 = vmatprep.subr.mxu0 0.0
    %2013 = vmatpush1.msra.mxu0 0.0
    %2014 = vmatprep.subr.mxu0 0.0
    %2015 = vmatpush1.msra.mxu0 0.0
    %2016 = vmatprep.subr.mxu0 0.0
    %2017 = vmatpush1.msra.mxu0 0.0
    %2018 = vmatprep.subr.mxu0 0.0
    %2019 = vmatpush1.msra.mxu0 0.0
    %2020 = vmatprep.subr.mxu0 0.0
    %2021 = vmatpush1.msra.mxu0 0.0
    %2022 = vmatprep.subr.mxu0 0.0
    %2023 = vmatpush1.msra.mxu0 0.0
    %2024 = vmatprep.subr.mxu0 0.0
    %2025 = vmatpush1.msra.mxu0 0.0
    %2026 = vmatprep.subr.mxu0 0.0
    %2027 = vmatpush1.msra.mxu0 0.0
    %2028 = vmatprep.subr.mxu0 0.0
    %2029 = vmatpush1.msra.mxu0 0.0
    %2030 = vmatprep.subr.mxu0 0.0
    %2031 = vmatpush1.msra.mxu0 0.0
    %2032 = vmatprep.subr.mxu0 0.0
    %2033 = vmatpush1.msra.mxu0 0.0
    %2034 = vmatprep.subr.mxu0 0.0
    %2035 = vmatpush1.msra.mxu0 0.0
    %2036 = vmatprep.subr.mxu0 0.0
    %2037 = vmatpush1.msra.mxu0 0.0
    %2038 = vmatprep.subr.mxu0 0.0
    %2039 = vmatpush1.msra.mxu0 0.0
    %2040 = vmatprep.mubr.f32.mxu0 0.0
    %2041 = vmatmul.mubr.f32.gmra.mrb[0].mxu0 %v1876
    %v2042 = vpop.f32.mrb[0].mxu0
    %v2043 = vadd.f32 0.0, %v2042
    %v2044 = vpop.f32.mrb[0].mxu0
    %2045 = vmatprep.mubr.f32.mxu0 0.0
    %2046 = vmatmul.mubr.f32.gmra.mrb[0].mxu0 %v1879
    %v2047 = vpop.f32.mrb[0].mxu0
    %v2048 = vadd.f32 0.0, %v2047
    %v2049 = vpop.f32.mrb[0].mxu0
    %2050 = vmatprep.mubr.f32.mxu0 0.0
    %2051 = vmatmul.mubr.f32.gmra.mrb[0].mxu0 %v1882
    %v2052 = vpop.f32.mrb[0].mxu0
    %v2053 = vadd.f32 0.0, %v2052
    %v2054 = vpop.f32.mrb[0].mxu0
    %2055 = vmatprep.mubr.f32.mxu0 0.0
    %2056 = vmatmul.mubr.f32.gmra.mrb[0].mxu0 %v1885
    %v2057 = vpop.f32.mrb[0].mxu0
    %v2058 = vadd.f32 0.0, %v2057
    %v2059 = vpop.f32.mrb[0].mxu0
    %2060 = vdwg.mxu0
    %v2061 = vadd.f32 %v1954, %v1871
    %v2062 = vadd.f32 %v1960, %v1872
    %v2063 = vadd.f32 %v1966, %v1873
    %v2064 = vadd.f32 %v1972, %v1874
    %v2065 = vmul.f32 %v1401, %v2061
    %v2066 = vmul.f32 %v1402, %v2062
    %v2067 = vmul.f32 %v1403, %v2063
    %v2068 = vmul.f32 %v1404, %v2064
    %v2069 = vadd.f32 %v1800, %v1956
    %v2070 = vadd.f32 %v1804, %v1962
    %v2071 = vadd.f32 %v1810, %v1968
    %v2072 = vadd.f32 %v1814, %v1974
    %v2073 = vmul.f32 %v1417, %v2043
    %v2074 = vmul.f32 %v1418, %v2048
    %v2075 = vmul.f32 %v1419, %v2053
    %v2076 = vmul.f32 %v1420, %v2058
    %v2077 = vadd.f32 %v2073, %v1853
    %v2078 = vadd.f32 %v2074, %v1857
    %v2079 = vadd.f32 %v2075, %v1863
    %v2080 = vadd.f32 %v2076, %v1867
    %s2081 = scalar_lea.vmem [#allocation7], 2
    %v2082 = vld [vmem:[%s2081] sm:$0x3]
    %v2083 = vlaneseq
    %v2084 = vshrl.u32 %v2083, 7
    %v2085 = vsub.s32 0, %v2084
    %v2086 = vrot.slane %v2082, %v2085
    %v2087 = vmul.f32 %v1747, %v2086
    %v2088 = vmul.f32 %v1751, %v2086
    %v2089 = vmul.f32 %v1757, %v2086
    %v2090 = vmul.f32 %v1761, %v2086
    %2091 = vadd.xlane.f32.xlu0 %v2087
    %v2092 = vpop.xlane.xlu0 %2091
    %2093 = vadd.xlane.f32.xlu0 %v2088
    %v2094 = vpop.xlane.xlu0 %2093
    %2095 = vadd.xlane.f32.xlu0 %v2089
    %v2096 = vpop.xlane.xlu0 %2095
    %2097 = vadd.xlane.f32.xlu0 %v2090
    %v2098 = vpop.xlane.xlu0 %2097
    %v2099 = vlaneseq
    %v2100 = vshrl.u32 %v2099, 7
    %v2101 = vsub.s32 1, %v2100
    %v2102 = vrot.slane %v2082, %v2101
    %v2103 = vmul.f32 %v1747, %v2102
    %v2104 = vmul.f32 %v1751, %v2102
    %v2105 = vmul.f32 %v1757, %v2102
    %v2106 = vmul.f32 %v1761, %v2102
    %2107 = vadd.xlane.f32.xlu0 %v2103
    %v2108 = vpop.xlane.xlu0 %2107
    %2109 = vadd.xlane.f32.xlu0 %v2104
    %v2110 = vpop.xlane.xlu0 %2109
    %2111 = vadd.xlane.f32.xlu0 %v2105
    %v2112 = vpop.xlane.xlu0 %2111
    %2113 = vadd.xlane.f32.xlu0 %v2106
    %v2114 = vpop.xlane.xlu0 %2113
    %v2116 = vsel %vm940, %v2092, 0
    %v2119 = vsel %vm940, %v2094, 0
    %v2122 = vsel %vm940, %v2096, 0
    %v2125 = vsel %vm940, %v2098, 0
    %2127 = vmatprep.subr.mxu0 0.0
    %2128 = vmatpush1.xpose.msra.mxu0 %v2116
    %2129 = vmatprep.subr.mxu0 0.0
    %2130 = vmatpush1.xpose.msra.mxu0 %v2119
    %2131 = vmatprep.subr.mxu0 0.0
    %2132 = vmatpush1.xpose.msra.mxu0 %v2122
    %2133 = vmatprep.subr.mxu0 0.0
    %2134 = vmatpush1.xpose.msra.mxu0 %v2125
    %2135 = vmatprep.subr.mxu0 0.0
    %2136 = vmatpush1.xpose.msra.mxu0 0.0
    %2137 = vmatprep.subr.mxu0 0.0
    %2138 = vmatpush1.xpose.msra.mxu0 0.0
    %2139 = vmatprep.subr.mxu0 0.0
    %2140 = vmatpush1.xpose.msra.mxu0 0.0
    %2141 = vmatprep.subr.mxu0 0.0
    %2142 = vmatpush1.xpose.msra.mxu0 0.0
    %2143 = vmatprep.subr.mxu0 0.0
    %2144 = vmatpush1.xpose.msra.mxu0 0.0
    %2145 = vmatprep.subr.mxu0 0.0
    %2146 = vmatpush1.xpose.msra.mxu0 0.0
    %2147 = vmatprep.subr.mxu0 0.0
    %2148 = vmatpush1.xpose.msra.mxu0 0.0
    %2149 = vmatprep.subr.mxu0 0.0
    %2150 = vmatpush1.xpose.msra.mxu0 0.0
    %2151 = vmatprep.subr.mxu0 0.0
    %2152 = vmatpush1.xpose.msra.mxu0 0.0
    %2153 = vmatprep.subr.mxu0 0.0
    %2154 = vmatpush1.xpose.msra.mxu0 0.0
    %2155 = vmatprep.subr.mxu0 0.0
    %2156 = vmatpush1.xpose.msra.mxu0 0.0
    %2157 = vmatprep.subr.mxu0 0.0
    %2158 = vmatpush1.xpose.msra.mxu0 0.0
    %2159 = vmatprep.subr.mxu0 0.0
    %2160 = vmatpush1.xpose.msra.mxu0 0.0
    %2161 = vmatprep.subr.mxu0 0.0
    %2162 = vmatpush1.xpose.msra.mxu0 0.0
    %2163 = vmatprep.subr.mxu0 0.0
    %2164 = vmatpush1.xpose.msra.mxu0 0.0
    %2165 = vmatprep.subr.mxu0 0.0
    %2166 = vmatpush1.xpose.msra.mxu0 0.0
    %2167 = vmatprep.subr.mxu0 0.0
    %2168 = vmatpush1.xpose.msra.mxu0 0.0
    %2169 = vmatprep.subr.mxu0 0.0
    %2170 = vmatpush1.xpose.msra.mxu0 0.0
    %2171 = vmatprep.subr.mxu0 0.0
    %2172 = vmatpush1.xpose.msra.mxu0 0.0
    %2173 = vmatprep.subr.mxu0 0.0
    %2174 = vmatpush1.xpose.msra.mxu0 0.0
    %2175 = vmatprep.subr.mxu0 0.0
    %2176 = vmatpush1.xpose.msra.mxu0 0.0
    %2177 = vmatprep.subr.mxu0 0.0
    %2178 = vmatpush1.xpose.msra.mxu0 0.0
    %2179 = vmatprep.subr.mxu0 0.0
    %2180 = vmatpush1.xpose.msra.mxu0 0.0
    %2181 = vmatprep.subr.mxu0 0.0
    %2182 = vmatpush1.xpose.msra.mxu0 0.0
    %2183 = vmatprep.subr.mxu0 0.0
    %2184 = vmatpush1.xpose.msra.mxu0 0.0
    %2185 = vmatprep.subr.mxu0 0.0
    %2186 = vmatpush1.xpose.msra.mxu0 0.0
    %2187 = vmatprep.subr.mxu0 0.0
    %2188 = vmatpush1.xpose.msra.mxu0 0.0
    %2189 = vmatprep.subr.mxu0 0.0
    %2190 = vmatpush1.xpose.msra.mxu0 0.0
    %2191 = vmatprep.mubr.f32.mxu0 0.0
    %2192 = vmatmul.mubr.f32.gmra.mrb[0].mxu0 %v942
    %v2193 = vpop.f32.mrb[0].mxu0
    %v2194 = vadd.f32 0.0, %v2193
    %v2195 = vpop.f32.mrb[0].mxu0
    %2196 = vmatprep.mubr.f32.mxu0 0.0
    %2197 = vmatmul.mubr.f32.gmra.mrb[0].mxu0 %v942
    %v2198 = vpop.f32.mrb[0].mxu0
    %v2199 = vadd.f32 0.0, %v2198
    %v2200 = vpop.f32.mrb[0].mxu0
    %2201 = vmatprep.mubr.f32.mxu0 0.0
    %2202 = vmatmul.mubr.f32.gmra.mrb[0].mxu0 %v942
    %v2203 = vpop.f32.mrb[0].mxu0
    %v2204 = vadd.f32 0.0, %v2203
    %v2205 = vpop.f32.mrb[0].mxu0
    %2206 = vmatprep.mubr.f32.mxu0 0.0
    %2207 = vmatmul.mubr.f32.gmra.mrb[0].mxu0 %v942
    %v2208 = vpop.f32.mrb[0].mxu0
    %v2209 = vadd.f32 0.0, %v2208
    %v2210 = vpop.f32.mrb[0].mxu0
    %2211 = vdwg.mxu0
    %v2212 = vadd.f32 %v2108, %v2194
    %v2213 = vadd.f32 %v2110, %v2199
    %v2214 = vadd.f32 %v2112, %v2204
    %v2215 = vadd.f32 %v2114, %v2209
    %vm2216 = vcmp.gt.f32.partialorder %v2212, 0.0
    %vm2217 = vcmp.gt.f32.partialorder %v2213, 0.0
    %vm2218 = vcmp.gt.f32.partialorder %v2214, 0.0
    %vm2219 = vcmp.gt.f32.partialorder %v2215, 0.0
    %v2220 = vmul.f32 %v2212, 0.2
    %v2221 = vmul.f32 %v2213, 0.2
    %v2222 = vmul.f32 %v2214, 0.2
    %v2223 = vmul.f32 %v2215, 0.2
    %v2224 = vsel %vm2216, %v2212, %v2220
    %v2225 = vsel %vm2217, %v2213, %v2221
    %v2226 = vsel %vm2218, %v2214, %v2222
    %v2227 = vsel %vm2219, %v2215, %v2223
    %vm2228 = vcmp.gt.f32.partialorder %v1367, 0.0
    %vm2229 = vcmp.gt.f32.partialorder %v1372, 0.0
    %vm2230 = vcmp.gt.f32.partialorder %v1377, 0.0
    %vm2231 = vcmp.gt.f32.partialorder %v1382, 0.0
    %vm2232 = vmor %vm76, %vm2228
    %vm2233 = vmor %vm77, %vm2229
    %vm2234 = vmor %vm78, %vm2230
    %vm2235 = vmor %vm79, %vm2231
    %v2236 = vsel %vm2232, %v2224, -1e+30
    %v2237 = vsel %vm2233, %v2225, -1e+30
    %v2238 = vsel %vm2234, %v2226, -1e+30
    %v2239 = vsel %vm2235, %v2227, -1e+30
    %v2240 = vsel %vm211, %v2236, -inf
    %2241 = vmax.xlane.f32.xlu0 %v2240
    %v2242 = vpop.xlane.xlu0 %2241
    %v2243 = vsel %vm211, %v2237, -inf
    %2244 = vmax.xlane.f32.xlu0 %v2243
    %v2245 = vpop.xlane.xlu0 %2244
    %v2246 = vsel %vm211, %v2238, -inf
    %2247 = vmax.xlane.f32.xlu0 %v2246
    %v2248 = vpop.xlane.xlu0 %2247
    %v2249 = vsel %vm211, %v2239, -inf
    %2250 = vmax.xlane.f32.xlu0 %v2249
    %v2251 = vpop.xlane.xlu0 %2250
    %v2252 = vsub.f32 %v2236, %v2242
    %v2253 = vsub.f32 %v2237, %v2245
    %v2254 = vsub.f32 %v2238, %v2248
    %v2255 = vsub.f32 %v2239, %v2251
    %v2256 = vsel %vm76, 1.0, %v1367
    %v2257 = vsel %vm77, 1.0, %v1372
    %v2258 = vsel %vm78, 1.0, %v1377
    %v2259 = vsel %vm79, 1.0, %v1382
    %v2260 = vmul.f32 %v2252, 1.442695
    %v2261 = vpow.pop %v2260
    %v2262 = vmul.f32 %v2253, 1.442695
    %v2263 = vpow.pop %v2262
    %v2264 = vmul.f32 %v2254, 1.442695
    %v2265 = vpow.pop %v2264
    %v2266 = vmul.f32 %v2255, 1.442695
    %v2267 = vpow.pop %v2266
    %v2268 = vmul.f32 %v2256, %v2261
    %v2269 = vmul.f32 %v2257, %v2263
    %v2270 = vmul.f32 %v2258, %v2265
    %v2271 = vmul.f32 %v2259, %v2267
    %v2272 = vsel %vm211, %v2268, 0.0
    %2273 = vadd.xlane.f32.xlu0 %v2272
    %v2274 = vpop.xlane.xlu0 %2273
    %v2275 = vsel %vm211, %v2269, 0.0
    %2276 = vadd.xlane.f32.xlu0 %v2275
    %v2277 = vpop.xlane.xlu0 %2276
    %v2278 = vsel %vm211, %v2270, 0.0
    %2279 = vadd.xlane.f32.xlu0 %v2278
    %v2280 = vpop.xlane.xlu0 %2279
    %v2281 = vsel %vm211, %v2271, 0.0
    %2282 = vadd.xlane.f32.xlu0 %v2281
    %v2283 = vpop.xlane.xlu0 %2282
    %v2284 = vrcp.pop %v2274
    %v2285 = vrcp.pop %v2277
    %v2286 = vrcp.pop %v2280
    %v2287 = vrcp.pop %v2283
    %v2288 = vmul.f32 %v2268, %v2284
    %v2289 = vmul.f32 %v2269, %v2285
    %v2290 = vmul.f32 %v2270, %v2286
    %v2291 = vmul.f32 %v2271, %v2287
    %s2292 = scalar_lea.vmem %s2, 2
    %v2293 = vld [vmem:[%s2292] sm:$0x3]
    %v2295 = vsel %vm211, %v2288, 0
    %v2298 = vsel %vm211, %v2289, 0
    %v2301 = vsel %vm211, %v2290, 0
    %v2304 = vsel %vm211, %v2291, 0
    %2306 = vmatprep.subr.mxu0 0.0
    %2307 = vmatpush1.msra.mxu0 %v1747
    %2308 = vmatprep.subr.mxu0 0.0
    %2309 = vmatpush1.msra.mxu0 %v1751
    %2310 = vmatprep.subr.mxu0 0.0
    %2311 = vmatpush1.msra.mxu0 %v1757
    %2312 = vmatprep.subr.mxu0 0.0
    %2313 = vmatpush1.msra.mxu0 %v1761
    %2314 = vmatprep.subr.mxu0 0.0
    %2315 = vmatpush1.msra.mxu0 0.0
    %2316 = vmatprep.subr.mxu0 0.0
    %2317 = vmatpush1.msra.mxu0 0.0
    %2318 = vmatprep.subr.mxu0 0.0
    %2319 = vmatpush1.msra.mxu0 0.0
    %2320 = vmatprep.subr.mxu0 0.0
    %2321 = vmatpush1.msra.mxu0 0.0
    %2322 = vmatprep.subr.mxu0 0.0
    %2323 = vmatpush1.msra.mxu0 0.0
    %2324 = vmatprep.subr.mxu0 0.0
    %2325 = vmatpush1.msra.mxu0 0.0
    %2326 = vmatprep.subr.mxu0 0.0
    %2327 = vmatpush1.msra.mxu0 0.0
    %2328 = vmatprep.subr.mxu0 0.0
    %2329 = vmatpush1.msra.mxu0 0.0
    %2330 = vmatprep.subr.mxu0 0.0
    %2331 = vmatpush1.msra.mxu0 0.0
    %2332 = vmatprep.subr.mxu0 0.0
    %2333 = vmatpush1.msra.mxu0 0.0
    %2334 = vmatprep.subr.mxu0 0.0
    %2335 = vmatpush1.msra.mxu0 0.0
    %2336 = vmatprep.subr.mxu0 0.0
    %2337 = vmatpush1.msra.mxu0 0.0
    %2338 = vmatprep.subr.mxu0 0.0
    %2339 = vmatpush1.msra.mxu0 0.0
    %2340 = vmatprep.subr.mxu0 0.0
    %2341 = vmatpush1.msra.mxu0 0.0
    %2342 = vmatprep.subr.mxu0 0.0
    %2343 = vmatpush1.msra.mxu0 0.0
    %2344 = vmatprep.subr.mxu0 0.0
    %2345 = vmatpush1.msra.mxu0 0.0
    %2346 = vmatprep.subr.mxu0 0.0
    %2347 = vmatpush1.msra.mxu0 0.0
    %2348 = vmatprep.subr.mxu0 0.0
    %2349 = vmatpush1.msra.mxu0 0.0
    %2350 = vmatprep.subr.mxu0 0.0
    %2351 = vmatpush1.msra.mxu0 0.0
    %2352 = vmatprep.subr.mxu0 0.0
    %2353 = vmatpush1.msra.mxu0 0.0
    %2354 = vmatprep.subr.mxu0 0.0
    %2355 = vmatpush1.msra.mxu0 0.0
    %2356 = vmatprep.subr.mxu0 0.0
    %2357 = vmatpush1.msra.mxu0 0.0
    %2358 = vmatprep.subr.mxu0 0.0
    %2359 = vmatpush1.msra.mxu0 0.0
    %2360 = vmatprep.subr.mxu0 0.0
    %2361 = vmatpush1.msra.mxu0 0.0
    %2362 = vmatprep.subr.mxu0 0.0
    %2363 = vmatpush1.msra.mxu0 0.0
    %2364 = vmatprep.subr.mxu0 0.0
    %2365 = vmatpush1.msra.mxu0 0.0
    %2366 = vmatprep.subr.mxu0 0.0
    %2367 = vmatpush1.msra.mxu0 0.0
    %2368 = vmatprep.subr.mxu0 0.0
    %2369 = vmatpush1.msra.mxu0 0.0
    %2370 = vmatprep.mubr.f32.mxu0 0.0
    %2371 = vmatmul.mubr.f32.gmra.mrb[0].mxu0 %v2295
    %v2372 = vpop.f32.mrb[0].mxu0
    %v2373 = vadd.f32 0.0, %v2372
    %v2374 = vpop.f32.mrb[0].mxu0
    %2375 = vmatprep.mubr.f32.mxu0 0.0
    %2376 = vmatmul.mubr.f32.gmra.mrb[0].mxu0 %v2298
    %v2377 = vpop.f32.mrb[0].mxu0
    %v2378 = vadd.f32 0.0, %v2377
    %v2379 = vpop.f32.mrb[0].mxu0
    %2380 = vmatprep.mubr.f32.mxu0 0.0
    %2381 = vmatmul.mubr.f32.gmra.mrb[0].mxu0 %v2301
    %v2382 = vpop.f32.mrb[0].mxu0
    %v2383 = vadd.f32 0.0, %v2382
    %v2384 = vpop.f32.mrb[0].mxu0
    %2385 = vmatprep.mubr.f32.mxu0 0.0
    %2386 = vmatmul.mubr.f32.gmra.mrb[0].mxu0 %v2304
    %v2387 = vpop.f32.mrb[0].mxu0
    %v2388 = vadd.f32 0.0, %v2387
    %v2389 = vpop.f32.mrb[0].mxu0
    %2390 = vdwg.mxu0
    %v2391 = vlaneseq
    %v2392 = vshrl.u32 %v2391, 7
    %v2393 = vsub.s32 1, %v2392
    %v2394 = vrot.slane %v2293, %v2393
    %v2395 = vmul.f32 %v2394, %v2373
    %v2396 = vmul.f32 %v2394, %v2378
    %v2397 = vmul.f32 %v2394, %v2383
    %v2398 = vmul.f32 %v2394, %v2388
    %v2399 = vadd.f32 %v2395, %v2065
    %v2400 = vadd.f32 %v2396, %v2066
    %v2401 = vadd.f32 %v2397, %v2067
    %v2402 = vadd.f32 %v2398, %v2068
    %v2403 = vadd.f32 %v2399, %v2069
    %v2404 = vadd.f32 %v2400, %v2070
    %v2405 = vadd.f32 %v2401, %v2071
    %v2406 = vadd.f32 %v2402, %v2072
    %v2407 = vadd.f32 %v2403, %v2077
    %v2408 = vadd.f32 %v2404, %v2078
    %v2409 = vadd.f32 %v2405, %v2079
    %v2410 = vadd.f32 %v2406, %v2080
    %v2411 = vadd.f32 %v2407, %v1855
    %v2412 = vadd.f32 %v2408, %v1859
    %v2413 = vadd.f32 %v2409, %v1865
    %v2414 = vadd.f32 %v2410, %v1869
    %v2415 = vlaneseq
    %v2416 = vshrl.u32 %v2415, 7
    %v2417 = vsub.s32 0, %v2416
    %v2418 = vrot.slane %v2293, %v2417
    %v2419 = vadd.f32 %v2411, %v2418
    %v2420 = vadd.f32 %v2412, %v2418
    %v2421 = vadd.f32 %v2413, %v2418
    %v2422 = vadd.f32 %v2414, %v2418
    %v2423 = vmax.f32 %v2419, 0.0
    %v2424 = vmax.f32 %v2420, 0.0
    %v2425 = vmax.f32 %v2421, 0.0
    %v2426 = vmax.f32 %v2422, 0.0
    %s2427 = scalar_lea.vmem %s6, 2
    %v2428 = vld [vmem:[%s2427] sm:$0x1]
    %v2429 = vsub.f32 0.0, %v2428
    %v2430 = vmul.f32 %v2429, 1.442695
    %v2431 = vpow.pop %v2430
    %v2432 = vadd.f32 %v2431, 1.0
    %v2433 = vrcp.pop %v2432
    %s2434 = scalar_lea.vmem %s5, 2
    %v2435 = vld [vmem:[%s2434] sm:$0x1]
    %v2436 = vlaneseq
    %v2437 = vshrl.u32 %v2436, 7
    %v2438 = vsub.s32 0, %v2437
    %v2439 = vrot.slane %v2435, %v2438
    %vm2440 = vcmp.eq.s32.totalorder %v70, %v2439
    %vm2441 = vcmp.eq.s32.totalorder %v71, %v2439
    %vm2442 = vcmp.eq.s32.totalorder %v72, %v2439
    %vm2443 = vcmp.eq.s32.totalorder %v73, %v2439
    %v2445 = vlaneseq
    %v2446 = vshrl.u32 %v2445, 7
    %v2447 = vsub.s32 0, %v2446
    %v2448 = vrot.slane %v2433, %v2447
    %v2450 = vsel %vm2440, %v2448, 0.0
    %v2451 = vsel %vm2441, %v2448, 0.0
    %v2452 = vsel %vm2442, %v2448, 0.0
    %v2453 = vsel %vm2443, %v2448, 0.0
    %s2454 = scalar_lea.vmem %s4, 2
    %v2455 = vld [vmem:[%s2454] sm:$0x1]
    %v2456 = vlaneseq
    %v2457 = vshrl.u32 %v2456, 7
    %v2458 = vsub.s32 0, %v2457
    %v2459 = vrot.slane %v2455, %v2458
    %vm2460 = vcmp.eq.s32.totalorder %v70, %v2459
    %vm2461 = vcmp.eq.s32.totalorder %v71, %v2459
    %vm2462 = vcmp.eq.s32.totalorder %v72, %v2459
    %vm2463 = vcmp.eq.s32.totalorder %v73, %v2459
    %v2464 = vsel %vm2460, 1, 0
    %v2465 = vsel %vm2461, 1, 0
    %v2466 = vsel %vm2462, 1, 0
    %v2467 = vsel %vm2463, 1, 0
    %v2468 = vcvt.s32.f32 %v2464
    %v2469 = vcvt.s32.f32 %v2465
    %v2470 = vcvt.s32.f32 %v2466
    %v2471 = vcvt.s32.f32 %v2467
    %2472 = vmatprep.subr.mxu0 0.0
    %2473 = vmatpush1.xpose.msra.mxu0 %v2468
    %2474 = vmatprep.subr.mxu0 0.0
    %2475 = vmatpush1.xpose.msra.mxu0 %v2469
    %2476 = vmatprep.subr.mxu0 0.0
    %2477 = vmatpush1.xpose.msra.mxu0 %v2470
    %2478 = vmatprep.subr.mxu0 0.0
    %2479 = vmatpush1.xpose.msra.mxu0 %v2471
    %2480 = vmatprep.subr.mxu0 0.0
    %2481 = vmatpush1.xpose.msra.mxu0 0.0
    %2482 = vmatprep.subr.mxu0 0.0
    %2483 = vmatpush1.xpose.msra.mxu0 0.0
    %2484 = vmatprep.subr.mxu0 0.0
    %2485 = vmatpush1.xpose.msra.mxu0 0.0
    %2486 = vmatprep.subr.mxu0 0.0
    %2487 = vmatpush1.xpose.msra.mxu0 0.0
    %2488 = vmatprep.subr.mxu0 0.0
    %2489 = vmatpush1.xpose.msra.mxu0 0.0
    %2490 = vmatprep.subr.mxu0 0.0
    %2491 = vmatpush1.xpose.msra.mxu0 0.0
    %2492 = vmatprep.subr.mxu0 0.0
    %2493 = vmatpush1.xpose.msra.mxu0 0.0
    %2494 = vmatprep.subr.mxu0 0.0
    %2495 = vmatpush1.xpose.msra.mxu0 0.0
    %2496 = vmatprep.subr.mxu0 0.0
    %2497 = vmatpush1.xpose.msra.mxu0 0.0
    %2498 = vmatprep.subr.mxu0 0.0
    %2499 = vmatpush1.xpose.msra.mxu0 0.0
    %2500 = vmatprep.subr.mxu0 0.0
    %2501 = vmatpush1.xpose.msra.mxu0 0.0
    %2502 = vmatprep.subr.mxu0 0.0
    %2503 = vmatpush1.xpose.msra.mxu0 0.0
    %2504 = vmatprep.subr.mxu0 0.0
    %2505 = vmatpush1.xpose.msra.mxu0 0.0
    %2506 = vmatprep.subr.mxu0 0.0
    %2507 = vmatpush1.xpose.msra.mxu0 0.0
    %2508 = vmatprep.subr.mxu0 0.0
    %2509 = vmatpush1.xpose.msra.mxu0 0.0
    %2510 = vmatprep.subr.mxu0 0.0
    %2511 = vmatpush1.xpose.msra.mxu0 0.0
    %2512 = vmatprep.subr.mxu0 0.0
    %2513 = vmatpush1.xpose.msra.mxu0 0.0
    %2514 = vmatprep.subr.mxu0 0.0
    %2515 = vmatpush1.xpose.msra.mxu0 0.0
    %2516 = vmatprep.subr.mxu0 0.0
    %2517 = vmatpush1.xpose.msra.mxu0 0.0
    %2518 = vmatprep.subr.mxu0 0.0
    %2519 = vmatpush1.xpose.msra.mxu0 0.0
    %2520 = vmatprep.subr.mxu0 0.0
    %2521 = vmatpush1.xpose.msra.mxu0 0.0
    %2522 = vmatprep.subr.mxu0 0.0
    %2523 = vmatpush1.xpose.msra.mxu0 0.0
    %2524 = vmatprep.subr.mxu0 0.0
    %2525 = vmatpush1.xpose.msra.mxu0 0.0
    %2526 = vmatprep.subr.mxu0 0.0
    %2527 = vmatpush1.xpose.msra.mxu0 0.0
    %2528 = vmatprep.subr.mxu0 0.0
    %2529 = vmatpush1.xpose.msra.mxu0 0.0
    %2530 = vmatprep.subr.mxu0 0.0
    %2531 = vmatpush1.xpose.msra.mxu0 0.0
    %2532 = vmatprep.subr.mxu0 0.0
    %2533 = vmatpush1.xpose.msra.mxu0 0.0
    %2534 = vmatprep.subr.mxu0 0.0
    %2535 = vmatpush1.xpose.msra.mxu0 0.0
    %2536 = vmatprep.mubr.f32.mxu0 0.0
    %2537 = vmatmul.mubr.f32.gmra.mrb[0].mxu0 %v2450
    %v2538 = vpop.f32.mrb[0].mxu0
    %v2539 = vadd.f32 0.0, %v2538
    %v2540 = vpop.f32.mrb[0].mxu0
    %2541 = vmatprep.mubr.f32.mxu0 0.0
    %2542 = vmatmul.mubr.f32.gmra.mrb[0].mxu0 %v2451
    %v2543 = vpop.f32.mrb[0].mxu0
    %v2544 = vadd.f32 0.0, %v2543
    %v2545 = vpop.f32.mrb[0].mxu0
    %2546 = vmatprep.mubr.f32.mxu0 0.0
    %2547 = vmatmul.mubr.f32.gmra.mrb[0].mxu0 %v2452
    %v2548 = vpop.f32.mrb[0].mxu0
    %v2549 = vadd.f32 0.0, %v2548
    %v2550 = vpop.f32.mrb[0].mxu0
    %2551 = vmatprep.mubr.f32.mxu0 0.0
    %2552 = vmatmul.mubr.f32.gmra.mrb[0].mxu0 %v2453
    %v2553 = vpop.f32.mrb[0].mxu0
    %v2554 = vadd.f32 0.0, %v2553
    %v2555 = vpop.f32.mrb[0].mxu0
    %2556 = vdwg.mxu0
    %v2557 = vsel %vm211, %v2539, 0.0
    %2558 = vadd.xlane.f32.xlu0 %v2557
    %v2559 = vpop.xlane.xlu0 %2558
    %v2560 = vsel %vm211, %v2544, 0.0
    %2561 = vadd.xlane.f32.xlu0 %v2560
    %v2562 = vpop.xlane.xlu0 %2561
    %v2563 = vsel %vm211, %v2549, 0.0
    %2564 = vadd.xlane.f32.xlu0 %v2563
    %v2565 = vpop.xlane.xlu0 %2564
    %v2566 = vsel %vm211, %v2554, 0.0
    %2567 = vadd.xlane.f32.xlu0 %v2566
    %v2568 = vpop.xlane.xlu0 %2567
    %v2569 = vadd.f32 %v2559, 1.0
    %v2570 = vadd.f32 %v2562, 1.0
    %v2571 = vadd.f32 %v2565, 1.0
    %v2572 = vadd.f32 %v2568, 1.0
    %v2573 = vrsqrt.pop %v2569
    %v2574 = vrsqrt.pop %v2570
    %v2575 = vrsqrt.pop %v2571
    %v2576 = vrsqrt.pop %v2572
    %vm2577 = vcmp.gt.f32.partialorder %v2559, 0.0
    %vm2578 = vcmp.gt.f32.partialorder %v2562, 0.0
    %vm2579 = vcmp.gt.f32.partialorder %v2565, 0.0
    %vm2580 = vcmp.gt.f32.partialorder %v2568, 0.0
    %v2581 = vmax.f32 %v2559, 1e-06
    %v2582 = vmax.f32 %v2562, 1e-06
    %v2583 = vmax.f32 %v2565, 1e-06
    %v2584 = vmax.f32 %v2568, 1e-06
    %v2585 = vrcp.pop %v2581
    %v2586 = vrcp.pop %v2582
    %v2587 = vrcp.pop %v2583
    %v2588 = vrcp.pop %v2584
    %v2589 = vsel %vm2577, %v2585, 0.0
    %v2590 = vsel %vm2578, %v2586, 0.0
    %v2591 = vsel %vm2579, %v2587, 0.0
    %v2592 = vsel %vm2580, %v2588, 0.0
    %v2593 = vpack.c.bf16 %v2424, %v2423
    %v2594 = vpack.c.bf16 %v2426, %v2425
    %s2595 = scalar_lea.vmem [#allocation5], 768
    %v2596 = vld [vmem:[%s2595] sm:$0xff]
    %v2597 = vld [vmem:[%s2595 + $0x8] sm:$0xff]
    %v2598 = vld [vmem:[%s2595 + $0x10] sm:$0xff]
    %v2599 = vld [vmem:[%s2595 + $0x18] sm:$0xff]
    %v2600 = vld [vmem:[%s2595 + $0x20] sm:$0xff]
    %v2601 = vld [vmem:[%s2595 + $0x28] sm:$0xff]
    %v2602 = vld [vmem:[%s2595 + $0x30] sm:$0xff]
    %v2603 = vld [vmem:[%s2595 + $0x38] sm:$0xff]
    %v2604 = vld [vmem:[%s2595 + $0x40] sm:$0xff]
    %v2605 = vld [vmem:[%s2595 + $0x48] sm:$0xff]
    %v2606 = vld [vmem:[%s2595 + $0x50] sm:$0xff]
    %v2607 = vld [vmem:[%s2595 + $0x58] sm:$0xff]
    %v2608 = vld [vmem:[%s2595 + $0x60] sm:$0xff]
    %v2609 = vld [vmem:[%s2595 + $0x68] sm:$0xff]
    %v2610 = vld [vmem:[%s2595 + $0x70] sm:$0xff]
    %v2611 = vld [vmem:[%s2595 + $0x78] sm:$0xff]
    %v2612 = vld [vmem:[%s2595 + $0x80] sm:$0xff]
    %v2613 = vld [vmem:[%s2595 + $0x88] sm:$0xff]
    %v2614 = vld [vmem:[%s2595 + $0x90] sm:$0xff]
    %v2615 = vld [vmem:[%s2595 + $0x98] sm:$0xff]
    %v2616 = vld [vmem:[%s2595 + $0xa0] sm:$0xff]
    %v2617 = vld [vmem:[%s2595 + $0xa8] sm:$0xff]
    %v2618 = vld [vmem:[%s2595 + $0xb0] sm:$0xff]
    %v2619 = vld [vmem:[%s2595 + $0xb8] sm:$0xff]
    %v2620 = vld [vmem:[%s2595 + $0xc0] sm:$0xff]
    %v2621 = vld [vmem:[%s2595 + $0xc8] sm:$0xff]
    %v2622 = vld [vmem:[%s2595 + $0xd0] sm:$0xff]
    %v2623 = vld [vmem:[%s2595 + $0xd8] sm:$0xff]
    %v2624 = vld [vmem:[%s2595 + $0xe0] sm:$0xff]
    %v2625 = vld [vmem:[%s2595 + $0xe8] sm:$0xff]
    %v2626 = vld [vmem:[%s2595 + $0xf0] sm:$0xff]
    %v2627 = vld [vmem:[%s2595 + $0xf8] sm:$0xff]
    %v2628 = vld [vmem:[%s2595 + $0x100] sm:$0xff]
    %v2629 = vld [vmem:[%s2595 + $0x108] sm:$0xff]
    %v2630 = vld [vmem:[%s2595 + $0x110] sm:$0xff]
    %v2631 = vld [vmem:[%s2595 + $0x118] sm:$0xff]
    %v2632 = vld [vmem:[%s2595 + $0x120] sm:$0xff]
    %v2633 = vld [vmem:[%s2595 + $0x128] sm:$0xff]
    %v2634 = vld [vmem:[%s2595 + $0x130] sm:$0xff]
    %v2635 = vld [vmem:[%s2595 + $0x138] sm:$0xff]
    %v2636 = vld [vmem:[%s2595 + $0x140] sm:$0xff]
    %v2637 = vld [vmem:[%s2595 + $0x148] sm:$0xff]
    %v2638 = vld [vmem:[%s2595 + $0x150] sm:$0xff]
    %v2639 = vld [vmem:[%s2595 + $0x158] sm:$0xff]
    %v2640 = vld [vmem:[%s2595 + $0x160] sm:$0xff]
    %v2641 = vld [vmem:[%s2595 + $0x168] sm:$0xff]
    %v2642 = vld [vmem:[%s2595 + $0x170] sm:$0xff]
    %v2643 = vld [vmem:[%s2595 + $0x178] sm:$0xff]
    %v2692 = vunpack.c.l.b16 %v2596
    %v2693 = vunpack.c.h.b16 %v2596
    %v2694 = vunpack.c.l.b16 %v2597
    %v2695 = vunpack.c.h.b16 %v2597
    %v2696 = vunpack.c.l.b16 %v2598
    %v2697 = vunpack.c.h.b16 %v2598
    %v2698 = vunpack.c.l.b16 %v2599
    %v2699 = vunpack.c.h.b16 %v2599
    %v2700 = vunpack.c.l.b16 %v2600
    %v2701 = vunpack.c.h.b16 %v2600
    %v2702 = vunpack.c.l.b16 %v2601
    %v2703 = vunpack.c.h.b16 %v2601
    %v2704 = vunpack.c.l.b16 %v2602
    %v2705 = vunpack.c.h.b16 %v2602
    %v2706 = vunpack.c.l.b16 %v2603
    %v2707 = vunpack.c.h.b16 %v2603
    %v2708 = vunpack.c.l.b16 %v2604
    %v2709 = vunpack.c.h.b16 %v2604
    %v2710 = vunpack.c.l.b16 %v2605
    %v2711 = vunpack.c.h.b16 %v2605
    %v2712 = vunpack.c.l.b16 %v2606
    %v2713 = vunpack.c.h.b16 %v2606
    %v2714 = vunpack.c.l.b16 %v2607
    %v2715 = vunpack.c.h.b16 %v2607
    %v2716 = vunpack.c.l.b16 %v2608
    %v2717 = vunpack.c.h.b16 %v2608
    %v2718 = vunpack.c.l.b16 %v2609
    %v2719 = vunpack.c.h.b16 %v2609
    %v2720 = vunpack.c.l.b16 %v2610
    %v2721 = vunpack.c.h.b16 %v2610
    %v2722 = vunpack.c.l.b16 %v2611
    %v2723 = vunpack.c.h.b16 %v2611
    %v2724 = vunpack.c.l.b16 %v2612
    %v2725 = vunpack.c.h.b16 %v2612
    %v2726 = vunpack.c.l.b16 %v2613
    %v2727 = vunpack.c.h.b16 %v2613
    %v2728 = vunpack.c.l.b16 %v2614
    %v2729 = vunpack.c.h.b16 %v2614
    %v2730 = vunpack.c.l.b16 %v2615
    %v2731 = vunpack.c.h.b16 %v2615
    %v2732 = vunpack.c.l.b16 %v2616
    %v2733 = vunpack.c.h.b16 %v2616
    %v2734 = vunpack.c.l.b16 %v2617
    %v2735 = vunpack.c.h.b16 %v2617
    %v2736 = vunpack.c.l.b16 %v2618
    %v2737 = vunpack.c.h.b16 %v2618
    %v2738 = vunpack.c.l.b16 %v2619
    %v2739 = vunpack.c.h.b16 %v2619
    %v2740 = vunpack.c.l.b16 %v2620
    %v2741 = vunpack.c.h.b16 %v2620
    %v2742 = vunpack.c.l.b16 %v2621
    %v2743 = vunpack.c.h.b16 %v2621
    %v2744 = vunpack.c.l.b16 %v2622
    %v2745 = vunpack.c.h.b16 %v2622
    %v2746 = vunpack.c.l.b16 %v2623
    %v2747 = vunpack.c.h.b16 %v2623
    %v2748 = vunpack.c.l.b16 %v2624
    %v2749 = vunpack.c.h.b16 %v2624
    %v2750 = vunpack.c.l.b16 %v2625
    %v2751 = vunpack.c.h.b16 %v2625
    %v2752 = vunpack.c.l.b16 %v2626
    %v2753 = vunpack.c.h.b16 %v2626
    %v2754 = vunpack.c.l.b16 %v2627
    %v2755 = vunpack.c.h.b16 %v2627
    %v2756 = vunpack.c.l.b16 %v2628
    %v2757 = vunpack.c.h.b16 %v2628
    %v2758 = vunpack.c.l.b16 %v2629
    %v2759 = vunpack.c.h.b16 %v2629
    %v2760 = vunpack.c.l.b16 %v2630
    %v2761 = vunpack.c.h.b16 %v2630
    %v2762 = vunpack.c.l.b16 %v2631
    %v2763 = vunpack.c.h.b16 %v2631
    %v2764 = vunpack.c.l.b16 %v2632
    %v2765 = vunpack.c.h.b16 %v2632
    %v2766 = vunpack.c.l.b16 %v2633
    %v2767 = vunpack.c.h.b16 %v2633
    %v2768 = vunpack.c.l.b16 %v2634
    %v2769 = vunpack.c.h.b16 %v2634
    %v2770 = vunpack.c.l.b16 %v2635
    %v2771 = vunpack.c.h.b16 %v2635
    %v2772 = vunpack.c.l.b16 %v2636
    %v2773 = vunpack.c.h.b16 %v2636
    %v2774 = vunpack.c.l.b16 %v2637
    %v2775 = vunpack.c.h.b16 %v2637
    %v2776 = vunpack.c.l.b16 %v2638
    %v2777 = vunpack.c.h.b16 %v2638
    %v2778 = vunpack.c.l.b16 %v2639
    %v2779 = vunpack.c.h.b16 %v2639
    %v2780 = vunpack.c.l.b16 %v2640
    %v2781 = vunpack.c.h.b16 %v2640
    %v2782 = vunpack.c.l.b16 %v2641
    %v2783 = vunpack.c.h.b16 %v2641
    %v2784 = vunpack.c.l.b16 %v2642
    %v2785 = vunpack.c.h.b16 %v2642
    %v2786 = vunpack.c.l.b16 %v2643
    %v2787 = vunpack.c.h.b16 %v2643
    %v2788 = vpack.c.b16 %v2698, %v2692
    %v2789 = vpack.c.b16 %v2699, %v2693
    %v2790 = vpack.c.b16 %v2700, %v2694
    %v2791 = vpack.c.b16 %v2701, %v2695
    %v2792 = vpack.c.b16 %v2702, %v2696
    %v2793 = vpack.c.b16 %v2703, %v2697
    %v2794 = vpack.c.b16 %v2710, %v2704
    %v2795 = vpack.c.b16 %v2711, %v2705
    %v2796 = vpack.c.b16 %v2712, %v2706
    %v2797 = vpack.c.b16 %v2713, %v2707
    %v2798 = vpack.c.b16 %v2714, %v2708
    %v2799 = vpack.c.b16 %v2715, %v2709
    %v2800 = vpack.c.b16 %v2722, %v2716
    %v2801 = vpack.c.b16 %v2723, %v2717
    %v2802 = vpack.c.b16 %v2724, %v2718
    %v2803 = vpack.c.b16 %v2725, %v2719
    %v2804 = vpack.c.b16 %v2726, %v2720
    %v2805 = vpack.c.b16 %v2727, %v2721
    %v2806 = vpack.c.b16 %v2734, %v2728
    %v2807 = vpack.c.b16 %v2735, %v2729
    %v2808 = vpack.c.b16 %v2736, %v2730
    %v2809 = vpack.c.b16 %v2737, %v2731
    %v2810 = vpack.c.b16 %v2738, %v2732
    %v2811 = vpack.c.b16 %v2739, %v2733
    %v2812 = vpack.c.b16 %v2746, %v2740
    %v2813 = vpack.c.b16 %v2747, %v2741
    %v2814 = vpack.c.b16 %v2748, %v2742
    %v2815 = vpack.c.b16 %v2749, %v2743
    %v2816 = vpack.c.b16 %v2750, %v2744
    %v2817 = vpack.c.b16 %v2751, %v2745
    %v2818 = vpack.c.b16 %v2758, %v2752
    %v2819 = vpack.c.b16 %v2759, %v2753
    %v2820 = vpack.c.b16 %v2760, %v2754
    %v2821 = vpack.c.b16 %v2761, %v2755
    %v2822 = vpack.c.b16 %v2762, %v2756
    %v2823 = vpack.c.b16 %v2763, %v2757
    %v2824 = vpack.c.b16 %v2770, %v2764
    %v2825 = vpack.c.b16 %v2771, %v2765
    %v2826 = vpack.c.b16 %v2772, %v2766
    %v2827 = vpack.c.b16 %v2773, %v2767
    %v2828 = vpack.c.b16 %v2774, %v2768
    %v2829 = vpack.c.b16 %v2775, %v2769
    %v2830 = vpack.c.b16 %v2782, %v2776
    %v2831 = vpack.c.b16 %v2783, %v2777
    %v2832 = vpack.c.b16 %v2784, %v2778
    %v2833 = vpack.c.b16 %v2785, %v2779
    %v2834 = vpack.c.b16 %v2786, %v2780
    %v2835 = vpack.c.b16 %v2787, %v2781
    %2884 = vmatprep.subr.bf16.mxu0 %v2789
    %2885 = vmatpush1.bf16.msra.mxu0 %v2788
    %2886 = vmatprep.subr.bf16.mxu0 %v2795
    %2887 = vmatpush1.bf16.msra.mxu0 %v2794
    %2888 = vmatprep.subr.bf16.mxu0 %v2801
    %2889 = vmatpush1.bf16.msra.mxu0 %v2800
    %2890 = vmatprep.subr.bf16.mxu0 %v2807
    %2891 = vmatpush1.bf16.msra.mxu0 %v2806
    %2892 = vmatprep.subr.bf16.mxu0 %v2813
    %2893 = vmatpush1.bf16.msra.mxu0 %v2812
    %2894 = vmatprep.subr.bf16.mxu0 %v2819
    %2895 = vmatpush1.bf16.msra.mxu0 %v2818
    %2896 = vmatprep.subr.bf16.mxu0 %v2825
    %2897 = vmatpush1.bf16.msra.mxu0 %v2824
    %2898 = vmatprep.subr.bf16.mxu0 %v2831
    %2899 = vmatpush1.bf16.msra.mxu0 %v2830
    %2900 = vmatprep.subr.bf16.mxu0 0
    %2901 = vmatpush1.bf16.msra.mxu0 0
    %2902 = vmatprep.subr.bf16.mxu0 0
    %2903 = vmatpush1.bf16.msra.mxu0 0
    %2904 = vmatprep.subr.bf16.mxu0 0
    %2905 = vmatpush1.bf16.msra.mxu0 0
    %2906 = vmatprep.subr.bf16.mxu0 0
    %2907 = vmatpush1.bf16.msra.mxu0 0
    %2908 = vmatprep.subr.bf16.mxu0 0
    %2909 = vmatpush1.bf16.msra.mxu0 0
    %2910 = vmatprep.subr.bf16.mxu0 0
    %2911 = vmatpush1.bf16.msra.mxu0 0
    %2912 = vmatprep.subr.bf16.mxu0 0
    %2913 = vmatpush1.bf16.msra.mxu0 0
    %2914 = vmatprep.subr.bf16.mxu0 0
    %2915 = vmatpush1.bf16.msra.mxu0 0
    %2916 = vmatprep.mubr.bf16.mxu0 0
    %2917 = vmatmul.mubr.bf16.gmra.mrb[0].mxu0 %v2593
    %v2918 = vpop.f32.mrb[0].mxu0
    %v2919 = vadd.f32 0.0, %v2918
    %v2920 = vpop.f32.mrb[0].mxu0
    %v2921 = vadd.f32 0.0, %v2920
    %v2922 = vpop.f32.mrb[0].mxu0
    %v2923 = vadd.f32 0.0, %v2922
    %v2924 = vpop.f32.mrb[0].mxu0
    %v2925 = vadd.f32 0.0, %v2924
    %2926 = vmatprep.mubr.bf16.mxu0 0
    %2927 = vmatmul.mubr.bf16.gmra.mrb[0].mxu0 %v2594
    %v2928 = vpop.f32.mrb[0].mxu0
    %v2929 = vadd.f32 0.0, %v2928
    %v2930 = vpop.f32.mrb[0].mxu0
    %v2931 = vadd.f32 0.0, %v2930
    %v2932 = vpop.f32.mrb[0].mxu0
    %v2933 = vadd.f32 0.0, %v2932
    %v2934 = vpop.f32.mrb[0].mxu0
    %v2935 = vadd.f32 0.0, %v2934
    %2936 = vdwg.mxu0
    %2937 = vmatprep.subr.bf16.mxu0 %v2791
    %2938 = vmatpush1.bf16.msra.mxu0 %v2790
    %2939 = vmatprep.subr.bf16.mxu0 %v2797
    %2940 = vmatpush1.bf16.msra.mxu0 %v2796
    %2941 = vmatprep.subr.bf16.mxu0 %v2803
    %2942 = vmatpush1.bf16.msra.mxu0 %v2802
    %2943 = vmatprep.subr.bf16.mxu0 %v2809
    %2944 = vmatpush1.bf16.msra.mxu0 %v2808
    %2945 = vmatprep.subr.bf16.mxu0 %v2815
    %2946 = vmatpush1.bf16.msra.mxu0 %v2814
    %2947 = vmatprep.subr.bf16.mxu0 %v2821
    %2948 = vmatpush1.bf16.msra.mxu0 %v2820
    %2949 = vmatprep.subr.bf16.mxu0 %v2827
    %2950 = vmatpush1.bf16.msra.mxu0 %v2826
    %2951 = vmatprep.subr.bf16.mxu0 %v2833
    %2952 = vmatpush1.bf16.msra.mxu0 %v2832
    %2953 = vmatprep.subr.bf16.mxu0 0
    %2954 = vmatpush1.bf16.msra.mxu0 0
    %2955 = vmatprep.subr.bf16.mxu0 0
    %2956 = vmatpush1.bf16.msra.mxu0 0
    %2957 = vmatprep.subr.bf16.mxu0 0
    %2958 = vmatpush1.bf16.msra.mxu0 0
    %2959 = vmatprep.subr.bf16.mxu0 0
    %2960 = vmatpush1.bf16.msra.mxu0 0
    %2961 = vmatprep.subr.bf16.mxu0 0
    %2962 = vmatpush1.bf16.msra.mxu0 0
    %2963 = vmatprep.subr.bf16.mxu0 0
    %2964 = vmatpush1.bf16.msra.mxu0 0
    %2965 = vmatprep.subr.bf16.mxu0 0
    %2966 = vmatpush1.bf16.msra.mxu0 0
    %2967 = vmatprep.subr.bf16.mxu0 0
    %2968 = vmatpush1.bf16.msra.mxu0 0
    %2969 = vmatprep.mubr.bf16.mxu0 0
    %2970 = vmatmul.mubr.bf16.gmra.mrb[0].mxu0 %v2593
    %v2971 = vpop.f32.mrb[0].mxu0
    %v2972 = vadd.f32 0.0, %v2971
    %v2973 = vpop.f32.mrb[0].mxu0
    %v2974 = vadd.f32 0.0, %v2973
    %v2975 = vpop.f32.mrb[0].mxu0
    %v2976 = vadd.f32 0.0, %v2975
    %v2977 = vpop.f32.mrb[0].mxu0
    %v2978 = vadd.f32 0.0, %v2977
    %2979 = vmatprep.mubr.bf16.mxu0 0
    %2980 = vmatmul.mubr.bf16.gmra.mrb[0].mxu0 %v2594
    %v2981 = vpop.f32.mrb[0].mxu0
    %v2982 = vadd.f32 0.0, %v2981
    %v2983 = vpop.f32.mrb[0].mxu0
    %v2984 = vadd.f32 0.0, %v2983
    %v2985 = vpop.f32.mrb[0].mxu0
    %v2986 = vadd.f32 0.0, %v2985
    %v2987 = vpop.f32.mrb[0].mxu0
    %v2988 = vadd.f32 0.0, %v2987
    %2989 = vdwg.mxu0
    %2990 = vmatprep.subr.bf16.mxu0 %v2793
    %2991 = vmatpush1.bf16.msra.mxu0 %v2792
    %2992 = vmatprep.subr.bf16.mxu0 %v2799
    %2993 = vmatpush1.bf16.msra.mxu0 %v2798
    %2994 = vmatprep.subr.bf16.mxu0 %v2805
    %2995 = vmatpush1.bf16.msra.mxu0 %v2804
    %2996 = vmatprep.subr.bf16.mxu0 %v2811
    %2997 = vmatpush1.bf16.msra.mxu0 %v2810
    %2998 = vmatprep.subr.bf16.mxu0 %v2817
    %2999 = vmatpush1.bf16.msra.mxu0 %v2816
    %3000 = vmatprep.subr.bf16.mxu0 %v2823
    %3001 = vmatpush1.bf16.msra.mxu0 %v2822
    %3002 = vmatprep.subr.bf16.mxu0 %v2829
    %3003 = vmatpush1.bf16.msra.mxu0 %v2828
    %3004 = vmatprep.subr.bf16.mxu0 %v2835
    %3005 = vmatpush1.bf16.msra.mxu0 %v2834
    %3006 = vmatprep.subr.bf16.mxu0 0
    %3007 = vmatpush1.bf16.msra.mxu0 0
    %3008 = vmatprep.subr.bf16.mxu0 0
    %3009 = vmatpush1.bf16.msra.mxu0 0
    %3010 = vmatprep.subr.bf16.mxu0 0
    %3011 = vmatpush1.bf16.msra.mxu0 0
    %3012 = vmatprep.subr.bf16.mxu0 0
    %3013 = vmatpush1.bf16.msra.mxu0 0
    %3014 = vmatprep.subr.bf16.mxu0 0
    %3015 = vmatpush1.bf16.msra.mxu0 0
    %3016 = vmatprep.subr.bf16.mxu0 0
    %3017 = vmatpush1.bf16.msra.mxu0 0
    %3018 = vmatprep.subr.bf16.mxu0 0
    %3019 = vmatpush1.bf16.msra.mxu0 0
    %3020 = vmatprep.subr.bf16.mxu0 0
    %3021 = vmatpush1.bf16.msra.mxu0 0
    %3022 = vmatprep.mubr.bf16.mxu0 0
    %3023 = vmatmul.mubr.bf16.gmra.mrb[0].mxu0 %v2593
    %v3024 = vpop.f32.mrb[0].mxu0
    %v3025 = vadd.f32 0.0, %v3024
    %v3026 = vpop.f32.mrb[0].mxu0
    %v3027 = vadd.f32 0.0, %v3026
    %v3028 = vpop.f32.mrb[0].mxu0
    %v3029 = vadd.f32 0.0, %v3028
    %v3030 = vpop.f32.mrb[0].mxu0
    %v3031 = vadd.f32 0.0, %v3030
    %3032 = vmatprep.mubr.bf16.mxu0 0
    %3033 = vmatmul.mubr.bf16.gmra.mrb[0].mxu0 %v2594
    %v3034 = vpop.f32.mrb[0].mxu0
    %v3035 = vadd.f32 0.0, %v3034
    %v3036 = vpop.f32.mrb[0].mxu0
    %v3037 = vadd.f32 0.0, %v3036
    %v3038 = vpop.f32.mrb[0].mxu0
    %v3039 = vadd.f32 0.0, %v3038
    %v3040 = vpop.f32.mrb[0].mxu0
    %v3041 = vadd.f32 0.0, %v3040
    %3042 = vdwg.mxu0
    %v3043 = vmul.f32 %v2573, %v2921
    %v3044 = vmul.f32 %v2574, %v2925
    %v3045 = vmul.f32 %v2575, %v2931
    %v3046 = vmul.f32 %v2576, %v2935
    %v3048 = vsel %vm211, %v2539, 0
    %v3051 = vsel %vm211, %v2544, 0
    %v3054 = vsel %vm211, %v2549, 0
    %v3057 = vsel %vm211, %v2554, 0
    %3059 = vmatprep.subr.mxu0 %v2972
    %3060 = vmatpush1.msra.mxu0 %v3043
    %3061 = vmatprep.subr.mxu0 %v2976
    %3062 = vmatpush1.msra.mxu0 %v3044
    %3063 = vmatprep.subr.mxu0 %v2982
    %3064 = vmatpush1.msra.mxu0 %v3045
    %3065 = vmatprep.subr.mxu0 %v2986
    %3066 = vmatpush1.msra.mxu0 %v3046
    %3067 = vmatprep.subr.mxu0 0.0
    %3068 = vmatpush1.msra.mxu0 0.0
    %3069 = vmatprep.subr.mxu0 0.0
    %3070 = vmatpush1.msra.mxu0 0.0
    %3071 = vmatprep.subr.mxu0 0.0
    %3072 = vmatpush1.msra.mxu0 0.0
    %3073 = vmatprep.subr.mxu0 0.0
    %3074 = vmatpush1.msra.mxu0 0.0
    %3075 = vmatprep.subr.mxu0 0.0
    %3076 = vmatpush1.msra.mxu0 0.0
    %3077 = vmatprep.subr.mxu0 0.0
    %3078 = vmatpush1.msra.mxu0 0.0
    %3079 = vmatprep.subr.mxu0 0.0
    %3080 = vmatpush1.msra.mxu0 0.0
    %3081 = vmatprep.subr.mxu0 0.0
    %3082 = vmatpush1.msra.mxu0 0.0
    %3083 = vmatprep.subr.mxu0 0.0
    %3084 = vmatpush1.msra.mxu0 0.0
    %3085 = vmatprep.subr.mxu0 0.0
    %3086 = vmatpush1.msra.mxu0 0.0
    %3087 = vmatprep.subr.mxu0 0.0
    %3088 = vmatpush1.msra.mxu0 0.0
    %3089 = vmatprep.subr.mxu0 0.0
    %3090 = vmatpush1.msra.mxu0 0.0
    %3091 = vmatprep.subr.mxu0 0.0
    %3092 = vmatpush1.msra.mxu0 0.0
    %3093 = vmatprep.subr.mxu0 0.0
    %3094 = vmatpush1.msra.mxu0 0.0
    %3095 = vmatprep.subr.mxu0 0.0
    %3096 = vmatpush1.msra.mxu0 0.0
    %3097 = vmatprep.subr.mxu0 0.0
    %3098 = vmatpush1.msra.mxu0 0.0
    %3099 = vmatprep.subr.mxu0 0.0
    %3100 = vmatpush1.msra.mxu0 0.0
    %3101 = vmatprep.subr.mxu0 0.0
    %3102 = vmatpush1.msra.mxu0 0.0
    %3103 = vmatprep.subr.mxu0 0.0
    %3104 = vmatpush1.msra.mxu0 0.0
    %3105 = vmatprep.subr.mxu0 0.0
    %3106 = vmatpush1.msra.mxu0 0.0
    %3107 = vmatprep.subr.mxu0 0.0
    %3108 = vmatpush1.msra.mxu0 0.0
    %3109 = vmatprep.subr.mxu0 0.0
    %3110 = vmatpush1.msra.mxu0 0.0
    %3111 = vmatprep.subr.mxu0 0.0
    %3112 = vmatpush1.msra.mxu0 0.0
    %3113 = vmatprep.subr.mxu0 0.0
    %3114 = vmatpush1.msra.mxu0 0.0
    %3115 = vmatprep.subr.mxu0 0.0
    %3116 = vmatpush1.msra.mxu0 0.0
    %3117 = vmatprep.subr.mxu0 0.0
    %3118 = vmatpush1.msra.mxu0 0.0
    %3119 = vmatprep.subr.mxu0 0.0
    %3120 = vmatpush1.msra.mxu0 0.0
    %3121 = vmatprep.subr.mxu0 0.0
    %3122 = vmatpush1.msra.mxu0 0.0
    %3123 = vmatprep.mubr.f32.mxu0 0.0
    %3124 = vmatmul.mubr.f32.gmra.mrb[0].mxu0 %v3048
    %v3125 = vpop.f32.mrb[0].mxu0
    %v3126 = vadd.f32 0.0, %v3125
    %v3127 = vpop.f32.mrb[0].mxu0
    %v3128 = vadd.f32 0.0, %v3127
    %3129 = vmatprep.mubr.f32.mxu0 0.0
    %3130 = vmatmul.mubr.f32.gmra.mrb[0].mxu0 %v3051
    %v3131 = vpop.f32.mrb[0].mxu0
    %v3132 = vadd.f32 0.0, %v3131
    %v3133 = vpop.f32.mrb[0].mxu0
    %v3134 = vadd.f32 0.0, %v3133
    %3135 = vmatprep.mubr.f32.mxu0 0.0
    %3136 = vmatmul.mubr.f32.gmra.mrb[0].mxu0 %v3054
    %v3137 = vpop.f32.mrb[0].mxu0
    %v3138 = vadd.f32 0.0, %v3137
    %v3139 = vpop.f32.mrb[0].mxu0
    %v3140 = vadd.f32 0.0, %v3139
    %3141 = vmatprep.mubr.f32.mxu0 0.0
    %3142 = vmatmul.mubr.f32.gmra.mrb[0].mxu0 %v3057
    %v3143 = vpop.f32.mrb[0].mxu0
    %v3144 = vadd.f32 0.0, %v3143
    %v3145 = vpop.f32.mrb[0].mxu0
    %v3146 = vadd.f32 0.0, %v3145
    %3147 = vdwg.mxu0
    %3148 = vmatprep.subr.mxu0 0.0
    %3149 = vmatpush1.msra.mxu0 %v2974
    %3150 = vmatprep.subr.mxu0 0.0
    %3151 = vmatpush1.msra.mxu0 %v2978
    %3152 = vmatprep.subr.mxu0 0.0
    %3153 = vmatpush1.msra.mxu0 %v2984
    %3154 = vmatprep.subr.mxu0 0.0
    %3155 = vmatpush1.msra.mxu0 %v2988
    %3156 = vmatprep.subr.mxu0 0.0
    %3157 = vmatpush1.msra.mxu0 0.0
    %3158 = vmatprep.subr.mxu0 0.0
    %3159 = vmatpush1.msra.mxu0 0.0
    %3160 = vmatprep.subr.mxu0 0.0
    %3161 = vmatpush1.msra.mxu0 0.0
    %3162 = vmatprep.subr.mxu0 0.0
    %3163 = vmatpush1.msra.mxu0 0.0
    %3164 = vmatprep.subr.mxu0 0.0
    %3165 = vmatpush1.msra.mxu0 0.0
    %3166 = vmatprep.subr.mxu0 0.0
    %3167 = vmatpush1.msra.mxu0 0.0
    %3168 = vmatprep.subr.mxu0 0.0
    %3169 = vmatpush1.msra.mxu0 0.0
    %3170 = vmatprep.subr.mxu0 0.0
    %3171 = vmatpush1.msra.mxu0 0.0
    %3172 = vmatprep.subr.mxu0 0.0
    %3173 = vmatpush1.msra.mxu0 0.0
    %3174 = vmatprep.subr.mxu0 0.0
    %3175 = vmatpush1.msra.mxu0 0.0
    %3176 = vmatprep.subr.mxu0 0.0
    %3177 = vmatpush1.msra.mxu0 0.0
    %3178 = vmatprep.subr.mxu0 0.0
    %3179 = vmatpush1.msra.mxu0 0.0
    %3180 = vmatprep.subr.mxu0 0.0
    %3181 = vmatpush1.msra.mxu0 0.0
    %3182 = vmatprep.subr.mxu0 0.0
    %3183 = vmatpush1.msra.mxu0 0.0
    %3184 = vmatprep.subr.mxu0 0.0
    %3185 = vmatpush1.msra.mxu0 0.0
    %3186 = vmatprep.subr.mxu0 0.0
    %3187 = vmatpush1.msra.mxu0 0.0
    %3188 = vmatprep.subr.mxu0 0.0
    %3189 = vmatpush1.msra.mxu0 0.0
    %3190 = vmatprep.subr.mxu0 0.0
    %3191 = vmatpush1.msra.mxu0 0.0
    %3192 = vmatprep.subr.mxu0 0.0
    %3193 = vmatpush1.msra.mxu0 0.0
    %3194 = vmatprep.subr.mxu0 0.0
    %3195 = vmatpush1.msra.mxu0 0.0
    %3196 = vmatprep.subr.mxu0 0.0
    %3197 = vmatpush1.msra.mxu0 0.0
    %3198 = vmatprep.subr.mxu0 0.0
    %3199 = vmatpush1.msra.mxu0 0.0
    %3200 = vmatprep.subr.mxu0 0.0
    %3201 = vmatpush1.msra.mxu0 0.0
    %3202 = vmatprep.subr.mxu0 0.0
    %3203 = vmatpush1.msra.mxu0 0.0
    %3204 = vmatprep.subr.mxu0 0.0
    %3205 = vmatpush1.msra.mxu0 0.0
    %3206 = vmatprep.subr.mxu0 0.0
    %3207 = vmatpush1.msra.mxu0 0.0
    %3208 = vmatprep.subr.mxu0 0.0
    %3209 = vmatpush1.msra.mxu0 0.0
    %3210 = vmatprep.subr.mxu0 0.0
    %3211 = vmatpush1.msra.mxu0 0.0
    %3212 = vmatprep.mubr.f32.mxu0 0.0
    %3213 = vmatmul.mubr.f32.gmra.mrb[0].mxu0 %v3048
    %v3214 = vpop.f32.mrb[0].mxu0
    %v3215 = vadd.f32 0.0, %v3214
    %v3216 = vpop.f32.mrb[0].mxu0
    %3217 = vmatprep.mubr.f32.mxu0 0.0
    %3218 = vmatmul.mubr.f32.gmra.mrb[0].mxu0 %v3051
    %v3219 = vpop.f32.mrb[0].mxu0
    %v3220 = vadd.f32 0.0, %v3219
    %v3221 = vpop.f32.mrb[0].mxu0
    %3222 = vmatprep.mubr.f32.mxu0 0.0
    %3223 = vmatmul.mubr.f32.gmra.mrb[0].mxu0 %v3054
    %v3224 = vpop.f32.mrb[0].mxu0
    %v3225 = vadd.f32 0.0, %v3224
    %v3226 = vpop.f32.mrb[0].mxu0
    %3227 = vmatprep.mubr.f32.mxu0 0.0
    %3228 = vmatmul.mubr.f32.gmra.mrb[0].mxu0 %v3057
    %v3229 = vpop.f32.mrb[0].mxu0
    %v3230 = vadd.f32 0.0, %v3229
    %v3231 = vpop.f32.mrb[0].mxu0
    %3232 = vdwg.mxu0
    %v3233 = vadd.f32 %v3126, %v3043
    %v3234 = vadd.f32 %v3132, %v3044
    %v3235 = vadd.f32 %v3138, %v3045
    %v3236 = vadd.f32 %v3144, %v3046
    %v3237 = vmul.f32 %v2573, %v3233
    %v3238 = vmul.f32 %v2574, %v3234
    %v3239 = vmul.f32 %v2575, %v3235
    %v3240 = vmul.f32 %v2576, %v3236
    %v3241 = vadd.f32 %v2972, %v3128
    %v3242 = vadd.f32 %v2976, %v3134
    %v3243 = vadd.f32 %v2982, %v3140
    %v3244 = vadd.f32 %v2986, %v3146
    %v3245 = vmul.f32 %v2589, %v3215
    %v3246 = vmul.f32 %v2590, %v3220
    %v3247 = vmul.f32 %v2591, %v3225
    %v3248 = vmul.f32 %v2592, %v3230
    %v3249 = vadd.f32 %v3245, %v3025
    %v3250 = vadd.f32 %v3246, %v3029
    %v3251 = vadd.f32 %v3247, %v3035
    %v3252 = vadd.f32 %v3248, %v3039
    %s3253 = scalar_lea.vmem [#allocation7], 4
    %v3254 = vld [vmem:[%s3253] sm:$0x3]
    %v3255 = vlaneseq
    %v3256 = vshrl.u32 %v3255, 7
    %v3257 = vsub.s32 0, %v3256
    %v3258 = vrot.slane %v3254, %v3257
    %v3259 = vmul.f32 %v2919, %v3258
    %v3260 = vmul.f32 %v2923, %v3258
    %v3261 = vmul.f32 %v2929, %v3258
    %v3262 = vmul.f32 %v2933, %v3258
    %3263 = vadd.xlane.f32.xlu0 %v3259
    %v3264 = vpop.xlane.xlu0 %3263
    %3265 = vadd.xlane.f32.xlu0 %v3260
    %v3266 = vpop.xlane.xlu0 %3265
    %3267 = vadd.xlane.f32.xlu0 %v3261
    %v3268 = vpop.xlane.xlu0 %3267
    %3269 = vadd.xlane.f32.xlu0 %v3262
    %v3270 = vpop.xlane.xlu0 %3269
    %v3271 = vlaneseq
    %v3272 = vshrl.u32 %v3271, 7
    %v3273 = vsub.s32 1, %v3272
    %v3274 = vrot.slane %v3254, %v3273
    %v3275 = vmul.f32 %v2919, %v3274
    %v3276 = vmul.f32 %v2923, %v3274
    %v3277 = vmul.f32 %v2929, %v3274
    %v3278 = vmul.f32 %v2933, %v3274
    %3279 = vadd.xlane.f32.xlu0 %v3275
    %v3280 = vpop.xlane.xlu0 %3279
    %3281 = vadd.xlane.f32.xlu0 %v3276
    %v3282 = vpop.xlane.xlu0 %3281
    %3283 = vadd.xlane.f32.xlu0 %v3277
    %v3284 = vpop.xlane.xlu0 %3283
    %3285 = vadd.xlane.f32.xlu0 %v3278
    %v3286 = vpop.xlane.xlu0 %3285
    %v3288 = vsel %vm940, %v3264, 0
    %v3291 = vsel %vm940, %v3266, 0
    %v3294 = vsel %vm940, %v3268, 0
    %v3297 = vsel %vm940, %v3270, 0
    %3299 = vmatprep.subr.mxu0 0.0
    %3300 = vmatpush1.xpose.msra.mxu0 %v3288
    %3301 = vmatprep.subr.mxu0 0.0
    %3302 = vmatpush1.xpose.msra.mxu0 %v3291
    %3303 = vmatprep.subr.mxu0 0.0
    %3304 = vmatpush1.xpose.msra.mxu0 %v3294
    %3305 = vmatprep.subr.mxu0 0.0
    %3306 = vmatpush1.xpose.msra.mxu0 %v3297
    %3307 = vmatprep.subr.mxu0 0.0
    %3308 = vmatpush1.xpose.msra.mxu0 0.0
    %3309 = vmatprep.subr.mxu0 0.0
    %3310 = vmatpush1.xpose.msra.mxu0 0.0
    %3311 = vmatprep.subr.mxu0 0.0
    %3312 = vmatpush1.xpose.msra.mxu0 0.0
    %3313 = vmatprep.subr.mxu0 0.0
    %3314 = vmatpush1.xpose.msra.mxu0 0.0
    %3315 = vmatprep.subr.mxu0 0.0
    %3316 = vmatpush1.xpose.msra.mxu0 0.0
    %3317 = vmatprep.subr.mxu0 0.0
    %3318 = vmatpush1.xpose.msra.mxu0 0.0
    %3319 = vmatprep.subr.mxu0 0.0
    %3320 = vmatpush1.xpose.msra.mxu0 0.0
    %3321 = vmatprep.subr.mxu0 0.0
    %3322 = vmatpush1.xpose.msra.mxu0 0.0
    %3323 = vmatprep.subr.mxu0 0.0
    %3324 = vmatpush1.xpose.msra.mxu0 0.0
    %3325 = vmatprep.subr.mxu0 0.0
    %3326 = vmatpush1.xpose.msra.mxu0 0.0
    %3327 = vmatprep.subr.mxu0 0.0
    %3328 = vmatpush1.xpose.msra.mxu0 0.0
    %3329 = vmatprep.subr.mxu0 0.0
    %3330 = vmatpush1.xpose.msra.mxu0 0.0
    %3331 = vmatprep.subr.mxu0 0.0
    %3332 = vmatpush1.xpose.msra.mxu0 0.0
    %3333 = vmatprep.subr.mxu0 0.0
    %3334 = vmatpush1.xpose.msra.mxu0 0.0
    %3335 = vmatprep.subr.mxu0 0.0
    %3336 = vmatpush1.xpose.msra.mxu0 0.0
    %3337 = vmatprep.subr.mxu0 0.0
    %3338 = vmatpush1.xpose.msra.mxu0 0.0
    %3339 = vmatprep.subr.mxu0 0.0
    %3340 = vmatpush1.xpose.msra.mxu0 0.0
    %3341 = vmatprep.subr.mxu0 0.0
    %3342 = vmatpush1.xpose.msra.mxu0 0.0
    %3343 = vmatprep.subr.mxu0 0.0
    %3344 = vmatpush1.xpose.msra.mxu0 0.0
    %3345 = vmatprep.subr.mxu0 0.0
    %3346 = vmatpush1.xpose.msra.mxu0 0.0
    %3347 = vmatprep.subr.mxu0 0.0
    %3348 = vmatpush1.xpose.msra.mxu0 0.0
    %3349 = vmatprep.subr.mxu0 0.0
    %3350 = vmatpush1.xpose.msra.mxu0 0.0
    %3351 = vmatprep.subr.mxu0 0.0
    %3352 = vmatpush1.xpose.msra.mxu0 0.0
    %3353 = vmatprep.subr.mxu0 0.0
    %3354 = vmatpush1.xpose.msra.mxu0 0.0
    %3355 = vmatprep.subr.mxu0 0.0
    %3356 = vmatpush1.xpose.msra.mxu0 0.0
    %3357 = vmatprep.subr.mxu0 0.0
    %3358 = vmatpush1.xpose.msra.mxu0 0.0
    %3359 = vmatprep.subr.mxu0 0.0
    %3360 = vmatpush1.xpose.msra.mxu0 0.0
    %3361 = vmatprep.subr.mxu0 0.0
    %3362 = vmatpush1.xpose.msra.mxu0 0.0
    %3363 = vmatprep.mubr.f32.mxu0 0.0
    %3364 = vmatmul.mubr.f32.gmra.mrb[0].mxu0 %v942
    %v3365 = vpop.f32.mrb[0].mxu0
    %v3366 = vadd.f32 0.0, %v3365
    %v3367 = vpop.f32.mrb[0].mxu0
    %3368 = vmatprep.mubr.f32.mxu0 0.0
    %3369 = vmatmul.mubr.f32.gmra.mrb[0].mxu0 %v942
    %v3370 = vpop.f32.mrb[0].mxu0
    %v3371 = vadd.f32 0.0, %v3370
    %v3372 = vpop.f32.mrb[0].mxu0
    %3373 = vmatprep.mubr.f32.mxu0 0.0
    %3374 = vmatmul.mubr.f32.gmra.mrb[0].mxu0 %v942
    %v3375 = vpop.f32.mrb[0].mxu0
    %v3376 = vadd.f32 0.0, %v3375
    %v3377 = vpop.f32.mrb[0].mxu0
    %3378 = vmatprep.mubr.f32.mxu0 0.0
    %3379 = vmatmul.mubr.f32.gmra.mrb[0].mxu0 %v942
    %v3380 = vpop.f32.mrb[0].mxu0
    %v3381 = vadd.f32 0.0, %v3380
    %v3382 = vpop.f32.mrb[0].mxu0
    %3383 = vdwg.mxu0
    %v3384 = vadd.f32 %v3280, %v3366
    %v3385 = vadd.f32 %v3282, %v3371
    %v3386 = vadd.f32 %v3284, %v3376
    %v3387 = vadd.f32 %v3286, %v3381
    %vm3388 = vcmp.gt.f32.partialorder %v3384, 0.0
    %vm3389 = vcmp.gt.f32.partialorder %v3385, 0.0
    %vm3390 = vcmp.gt.f32.partialorder %v3386, 0.0
    %vm3391 = vcmp.gt.f32.partialorder %v3387, 0.0
    %v3392 = vmul.f32 %v3384, 0.2
    %v3393 = vmul.f32 %v3385, 0.2
    %v3394 = vmul.f32 %v3386, 0.2
    %v3395 = vmul.f32 %v3387, 0.2
    %v3396 = vsel %vm3388, %v3384, %v3392
    %v3397 = vsel %vm3389, %v3385, %v3393
    %v3398 = vsel %vm3390, %v3386, %v3394
    %v3399 = vsel %vm3391, %v3387, %v3395
    %vm3400 = vcmp.gt.f32.partialorder %v2539, 0.0
    %vm3401 = vcmp.gt.f32.partialorder %v2544, 0.0
    %vm3402 = vcmp.gt.f32.partialorder %v2549, 0.0
    %vm3403 = vcmp.gt.f32.partialorder %v2554, 0.0
    %vm3404 = vmor %vm76, %vm3400
    %vm3405 = vmor %vm77, %vm3401
    %vm3406 = vmor %vm78, %vm3402
    %vm3407 = vmor %vm79, %vm3403
    %v3408 = vsel %vm3404, %v3396, -1e+30
    %v3409 = vsel %vm3405, %v3397, -1e+30
    %v3410 = vsel %vm3406, %v3398, -1e+30
    %v3411 = vsel %vm3407, %v3399, -1e+30
    %v3412 = vsel %vm211, %v3408, -inf
    %3413 = vmax.xlane.f32.xlu0 %v3412
    %v3414 = vpop.xlane.xlu0 %3413
    %v3415 = vsel %vm211, %v3409, -inf
    %3416 = vmax.xlane.f32.xlu0 %v3415
    %v3417 = vpop.xlane.xlu0 %3416
    %v3418 = vsel %vm211, %v3410, -inf
    %3419 = vmax.xlane.f32.xlu0 %v3418
    %v3420 = vpop.xlane.xlu0 %3419
    %v3421 = vsel %vm211, %v3411, -inf
    %3422 = vmax.xlane.f32.xlu0 %v3421
    %v3423 = vpop.xlane.xlu0 %3422
    %v3424 = vsub.f32 %v3408, %v3414
    %v3425 = vsub.f32 %v3409, %v3417
    %v3426 = vsub.f32 %v3410, %v3420
    %v3427 = vsub.f32 %v3411, %v3423
    %v3428 = vsel %vm76, 1.0, %v2539
    %v3429 = vsel %vm77, 1.0, %v2544
    %v3430 = vsel %vm78, 1.0, %v2549
    %v3431 = vsel %vm79, 1.0, %v2554
    %v3432 = vmul.f32 %v3424, 1.442695
    %v3433 = vpow.pop %v3432
    %v3434 = vmul.f32 %v3425, 1.442695
    %v3435 = vpow.pop %v3434
    %v3436 = vmul.f32 %v3426, 1.442695
    %v3437 = vpow.pop %v3436
    %v3438 = vmul.f32 %v3427, 1.442695
    %v3439 = vpow.pop %v3438
    %v3440 = vmul.f32 %v3428, %v3433
    %v3441 = vmul.f32 %v3429, %v3435
    %v3442 = vmul.f32 %v3430, %v3437
    %v3443 = vmul.f32 %v3431, %v3439
    %v3444 = vsel %vm211, %v3440, 0.0
    %3445 = vadd.xlane.f32.xlu0 %v3444
    %v3446 = vpop.xlane.xlu0 %3445
    %v3447 = vsel %vm211, %v3441, 0.0
    %3448 = vadd.xlane.f32.xlu0 %v3447
    %v3449 = vpop.xlane.xlu0 %3448
    %v3450 = vsel %vm211, %v3442, 0.0
    %3451 = vadd.xlane.f32.xlu0 %v3450
    %v3452 = vpop.xlane.xlu0 %3451
    %v3453 = vsel %vm211, %v3443, 0.0
    %3454 = vadd.xlane.f32.xlu0 %v3453
    %v3455 = vpop.xlane.xlu0 %3454
    %v3456 = vrcp.pop %v3446
    %v3457 = vrcp.pop %v3449
    %v3458 = vrcp.pop %v3452
    %v3459 = vrcp.pop %v3455
    %v3460 = vmul.f32 %v3440, %v3456
    %v3461 = vmul.f32 %v3441, %v3457
    %v3462 = vmul.f32 %v3442, %v3458
    %v3463 = vmul.f32 %v3443, %v3459
    %s3464 = scalar_lea.vmem %s2, 4
    %v3465 = vld [vmem:[%s3464] sm:$0x3]
    %v3467 = vsel %vm211, %v3460, 0
    %v3470 = vsel %vm211, %v3461, 0
    %v3473 = vsel %vm211, %v3462, 0
    %v3476 = vsel %vm211, %v3463, 0
    %3478 = vmatprep.subr.mxu0 0.0
    %3479 = vmatpush1.msra.mxu0 %v2919
    %3480 = vmatprep.subr.mxu0 0.0
    %3481 = vmatpush1.msra.mxu0 %v2923
    %3482 = vmatprep.subr.mxu0 0.0
    %3483 = vmatpush1.msra.mxu0 %v2929
    %3484 = vmatprep.subr.mxu0 0.0
    %3485 = vmatpush1.msra.mxu0 %v2933
    %3486 = vmatprep.subr.mxu0 0.0
    %3487 = vmatpush1.msra.mxu0 0.0
    %3488 = vmatprep.subr.mxu0 0.0
    %3489 = vmatpush1.msra.mxu0 0.0
    %3490 = vmatprep.subr.mxu0 0.0
    %3491 = vmatpush1.msra.mxu0 0.0
    %3492 = vmatprep.subr.mxu0 0.0
    %3493 = vmatpush1.msra.mxu0 0.0
    %3494 = vmatprep.subr.mxu0 0.0
    %3495 = vmatpush1.msra.mxu0 0.0
    %3496 = vmatprep.subr.mxu0 0.0
    %3497 = vmatpush1.msra.mxu0 0.0
    %3498 = vmatprep.subr.mxu0 0.0
    %3499 = vmatpush1.msra.mxu0 0.0
    %3500 = vmatprep.subr.mxu0 0.0
    %3501 = vmatpush1.msra.mxu0 0.0
    %3502 = vmatprep.subr.mxu0 0.0
    %3503 = vmatpush1.msra.mxu0 0.0
    %3504 = vmatprep.subr.mxu0 0.0
    %3505 = vmatpush1.msra.mxu0 0.0
    %3506 = vmatprep.subr.mxu0 0.0
    %3507 = vmatpush1.msra.mxu0 0.0
    %3508 = vmatprep.subr.mxu0 0.0
    %3509 = vmatpush1.msra.mxu0 0.0
    %3510 = vmatprep.subr.mxu0 0.0
    %3511 = vmatpush1.msra.mxu0 0.0
    %3512 = vmatprep.subr.mxu0 0.0
    %3513 = vmatpush1.msra.mxu0 0.0
    %3514 = vmatprep.subr.mxu0 0.0
    %3515 = vmatpush1.msra.mxu0 0.0
    %3516 = vmatprep.subr.mxu0 0.0
    %3517 = vmatpush1.msra.mxu0 0.0
    %3518 = vmatprep.subr.mxu0 0.0
    %3519 = vmatpush1.msra.mxu0 0.0
    %3520 = vmatprep.subr.mxu0 0.0
    %3521 = vmatpush1.msra.mxu0 0.0
    %3522 = vmatprep.subr.mxu0 0.0
    %3523 = vmatpush1.msra.mxu0 0.0
    %3524 = vmatprep.subr.mxu0 0.0
    %3525 = vmatpush1.msra.mxu0 0.0
    %3526 = vmatprep.subr.mxu0 0.0
    %3527 = vmatpush1.msra.mxu0 0.0
    %3528 = vmatprep.subr.mxu0 0.0
    %3529 = vmatpush1.msra.mxu0 0.0
    %3530 = vmatprep.subr.mxu0 0.0
    %3531 = vmatpush1.msra.mxu0 0.0
    %3532 = vmatprep.subr.mxu0 0.0
    %3533 = vmatpush1.msra.mxu0 0.0
    %3534 = vmatprep.subr.mxu0 0.0
    %3535 = vmatpush1.msra.mxu0 0.0
    %3536 = vmatprep.subr.mxu0 0.0
    %3537 = vmatpush1.msra.mxu0 0.0
    %3538 = vmatprep.subr.mxu0 0.0
    %3539 = vmatpush1.msra.mxu0 0.0
    %3540 = vmatprep.subr.mxu0 0.0
    %3541 = vmatpush1.msra.mxu0 0.0
    %3542 = vmatprep.mubr.f32.mxu0 0.0
    %3543 = vmatmul.mubr.f32.gmra.mrb[0].mxu0 %v3467
    %v3544 = vpop.f32.mrb[0].mxu0
    %v3545 = vadd.f32 0.0, %v3544
    %v3546 = vpop.f32.mrb[0].mxu0
    %3547 = vmatprep.mubr.f32.mxu0 0.0
    %3548 = vmatmul.mubr.f32.gmra.mrb[0].mxu0 %v3470
    %v3549 = vpop.f32.mrb[0].mxu0
    %v3550 = vadd.f32 0.0, %v3549
    %v3551 = vpop.f32.mrb[0].mxu0
    %3552 = vmatprep.mubr.f32.mxu0 0.0
    %3553 = vmatmul.mubr.f32.gmra.mrb[0].mxu0 %v3473
    %v3554 = vpop.f32.mrb[0].mxu0
    %v3555 = vadd.f32 0.0, %v3554
    %v3556 = vpop.f32.mrb[0].mxu0
    %3557 = vmatprep.mubr.f32.mxu0 0.0
    %3558 = vmatmul.mubr.f32.gmra.mrb[0].mxu0 %v3476
    %v3559 = vpop.f32.mrb[0].mxu0
    %v3560 = vadd.f32 0.0, %v3559
    %v3561 = vpop.f32.mrb[0].mxu0
    %3562 = vdwg.mxu0
    %v3563 = vlaneseq
    %v3564 = vshrl.u32 %v3563, 7
    %v3565 = vsub.s32 1, %v3564
    %v3566 = vrot.slane %v3465, %v3565
    %v3567 = vmul.f32 %v3566, %v3545
    %v3568 = vmul.f32 %v3566, %v3550
    %v3569 = vmul.f32 %v3566, %v3555
    %v3570 = vmul.f32 %v3566, %v3560
    %v3571 = vadd.f32 %v3567, %v3237
    %v3572 = vadd.f32 %v3568, %v3238
    %v3573 = vadd.f32 %v3569, %v3239
    %v3574 = vadd.f32 %v3570, %v3240
    %v3575 = vadd.f32 %v3571, %v3241
    %v3576 = vadd.f32 %v3572, %v3242
    %v3577 = vadd.f32 %v3573, %v3243
    %v3578 = vadd.f32 %v3574, %v3244
    %v3579 = vadd.f32 %v3575, %v3249
    %v3580 = vadd.f32 %v3576, %v3250
    %v3581 = vadd.f32 %v3577, %v3251
    %v3582 = vadd.f32 %v3578, %v3252
    %v3583 = vadd.f32 %v3579, %v3027
    %v3584 = vadd.f32 %v3580, %v3031
    %v3585 = vadd.f32 %v3581, %v3037
    %v3586 = vadd.f32 %v3582, %v3041
    %v3587 = vlaneseq
    %v3588 = vshrl.u32 %v3587, 7
    %v3589 = vsub.s32 0, %v3588
    %v3590 = vrot.slane %v3465, %v3589
    %v3591 = vadd.f32 %v3583, %v3590
    %v3592 = vadd.f32 %v3584, %v3590
    %v3593 = vadd.f32 %v3585, %v3590
    %v3594 = vadd.f32 %v3586, %v3590
    %3595 = vst [vmem:[#allocation8] sm:$0xff] %v3591
    %3596 = vst [vmem:[#allocation8 + $0x8] sm:$0xff] %v3592
    %3597 = vst [vmem:[#allocation8 + $0x10] sm:$0xff] %v3593
    %3598 = vst [vmem:[#allocation8 + $0x18] sm:$0xff] %v3594
    // Predicated region
    $region42: #{tpu_custom_call.1} parent=1 // pred_check
      _
    $region43: #{tpu_custom_call.1} parent=1 // pred_check_branch
      %3600 = sbr.rel (0) target = $region45
    $region44: #{tpu_custom_call.1} parent=1 // pred_region
      %s3602 = ssub.s32 512, 512
      %3603 = vsyncadd [#allocation4], %s3602
      %s3604 = sshll.u32 [#allocation8], 4
      %s3605 = int_to_ptr.vmem [resolvable:$true] %s3604
      %3610 = dma.vmem_to_hbm [thread:$0]  %s3605, 512, %s7, [#allocation4], 128, 128, 8
    $region45: #{tpu_custom_call.1} parent=1 // pred_fallthru
      _
    // Predicated region
    $region46: #{tpu_custom_call.1} parent=1 // pred_check
      _
    $region47: #{tpu_custom_call.1} parent=1 // pred_check_branch
      %3612 = sbr.rel (0) target = $region49
    $region48: #{tpu_custom_call.1} parent=1 // pred_region
      %3613 = dma.done [#allocation4], 512
    $region49: #{tpu_custom_call.1} parent=1 // pred_fallthru
      _
    %3614 = vsyncpa [#allocation3], 1
    %3615 = vsyncpa [#allocation6], 1
    %3616 = vsyncpa [#allocation4], 1

</llo_original>
